<compile_context>
chip_gen: v6e
topology: v6e:2x2x1
jax: 0.10.0
libtpu: 0.0.40
codegen_flags: <defaults>
</compile_context>

<pallas_src>
import numpy as np
import jax
import jax.numpy as jnp
from jax.experimental import pallas as pl
from jax.experimental.pallas import tpu as pltpu


def _split_hi_lo(m):
    """f32 array -> (hi, lo) bf16 pair with hi + lo ~ m (≈16-bit mantissa)."""
    m = jnp.asarray(m, jnp.float32)
    hi = m.astype(jnp.bfloat16)
    lo = (m - hi.astype(jnp.float32)).astype(jnp.bfloat16)
    return hi, lo


def _split_stack(m):
    """f32 (M, K) -> (2, M, K) bf16 [hi, lo]  (for LHS constants)."""
    hi, lo = _split_hi_lo(m)
    return jnp.stack([hi, lo], axis=0)


def _split_rows(m):
    """f32 (K, N) -> (2K, N) bf16 [hi; lo]  (for RHS constants; enables 2K-collapsed cross term)."""
    hi, lo = _split_hi_lo(m)
    return jnp.concatenate([hi, lo], axis=0)


def _vmem_capacity_bytes():
    try:
        info = pltpu.get_tpu_info()
        cap = getattr(info, "vmem_capacity_bytes", None)
        if cap:
            return int(cap)
    except Exception:
        pass
    return 64 * 1024 * 1024   # conservative: v7x per-TC VMEM


class ForwardModelPallas:
    def __init__(self, h, eraser):
        h = np.asarray(h, np.float32)              # (D0, D1)
        eraser = np.asarray(eraser, np.float32)    # (D0, D1, C)  (HWC, like the torch module)
        self.D0, self.D1 = h.shape
        self.P0, self.P1 = self.D0 // 2, self.D1 // 2
        self.R, self.Cw = 2 * self.D0, 2 * self.D1
        self.C = eraser.shape[2]
        self.D1p = -(-self.D1 // 128) * 128        # lane-dense output width
        D0, D1, P0, P1, R, Cw, D1p = self.D0, self.D1, self.P0, self.P1, self.R, self.Cw, self.D1p

        # H = FFT2( ifftshift( zero-padded h ) )  -- constant parameter setup (host-side glue).
        h_pad = np.zeros((R, Cw), np.float32)
        h_pad[P0:P0 + D0, P1:P1 + D1] = h
        Hc = np.fft.fft2(np.fft.ifftshift(h_pad))
        self.Hc = Hc                                # kept for the numpy reference
        self.H_re = jnp.asarray(np.real(Hc), jnp.float32)
        self.H_im = jnp.asarray(np.imag(Hc), jnp.float32)

        # DFT bases (symmetric): forward F = C - iS, inverse uses conj(F) = C + iS.
        u = np.arange(R)
        v = np.arange(Cw)
        CR = np.cos(2 * np.pi * np.outer(u, u) / R)
        SR = np.sin(2 * np.pi * np.outer(u, u) / R)
        CC = np.cos(2 * np.pi * np.outer(v, v) / Cw)
        SC = np.sin(2 * np.pi * np.outer(v, v) / Cw)
        inv_rc = 1.0 / (R * Cw)

        # Fused / sign- and scale-folded constants:
        CRSRn = np.concatenate([CR, -SR], axis=0)                       # (2R, R)   fwd row stage
        CRSRc = np.concatenate([CR[P0:P0 + D0], SR[P0:P0 + D0]], axis=0)  # (2D0, R) inv row, cropped
        CCSC = np.concatenate([CC, SC], axis=1)                         # (Cw, 2Cw) fwd col stage
        CCc = CC[:, P1:P1 + D1] * inv_rc
        SCc = SC[:, P1:P1 + D1] * inv_rc
        CCSCc = np.concatenate([CCc, -SCc], axis=0)                     # (2Cw, D1) inv col, cropped
        CCSCc_p = np.zeros((2 * Cw, D1p), np.float32)
        CCSCc_p[:, :D1] = CCSCc                                         # lane-dense (zero pad)

        # bf16 hi/lo storage: (2,M,K) stacks for LHS constants, [hi;lo] row stacks for RHS ones.
        self.CRSRn2 = _split_stack(CRSRn)       # (2, 2R, R)
        self.CRSRc2 = _split_stack(CRSRc)       # (2, 2*D0, R)
        self.CCSC_stk = _split_rows(CCSC)       # (2Cw, 2Cw)
        self.CCSCc_stk = _split_rows(CCSCc_p)   # (4Cw, D1p)

        # eraser: (D0, D1, C) -> (C, D0, D1) (matches torch's eraser.transpose(2, 0, 1)),
        # zero-padded to D1p for the kernel; unpadded copy kept for the numpy reference.
        er = np.ascontiguousarray(eraser.transpose(2, 0, 1)).astype(np.float32)
        er_p = np.zeros((self.C, D0, D1p), np.float32)
        er_p[:, :, :D1] = er
        self.eraser_np = er
        self.eraser_dev = jnp.asarray(er_p)

        self._single_buffer_ok = None   # decided on first call (pl.Buffered(1) lowering probe)

    # ------------------------------------------------------------------ kernel
    def _build_kernel(self, G):
        R, Cw, D0, nchan = self.R, self.Cw, self.D0, self.C

        def kernel(x_ref, crsrn_ref, ccsc_ref, crsrc_ref, ccscc_ref,
                   hre_ref, him_ref, er_ref, o_ref):
            f32 = jnp.float32

            def split(v):
                hi = v.astype(jnp.bfloat16)
                lo = (v - hi.astype(f32)).astype(jnp.bfloat16)
                return hi, lo

            def mm(a, b):
                return jnp.dot(a, b, preferred_element_type=f32)

            # Resident constants (hoisted loads, f32 elementwise stays on the VPU - v5e safe).
            crsrn_hi, crsrn_lo = crsrn_ref[0], crsrn_ref[1]
            crsrc_hi, crsrc_lo = crsrc_ref[0], crsrc_ref[1]
            H_re, H_im = hre_ref[...], him_ref[...]

            # ---- forward row stage per slab: A_g = [CR; -SR] @ x_g  (bf16_3x, const on LHS)
            A_hi, A_lo = [], []
            for g in range(G):
                x_hi, x_lo = split(x_ref[g])                              # (R, Cw)
                A_g = mm(crsrn_hi, x_hi) + mm(crsrn_lo, x_hi) + mm(crsrn_hi, x_lo)  # (2R, Cw)
                ahi, alo = split(A_g)
                A_hi.append(ahi)
                A_lo.append(alo)
            A_hi = jnp.concatenate(A_hi, axis=0)                          # (G*2R, Cw)
            A_lo = jnp.concatenate(A_lo, axis=0)

            # ---- forward column stage, batched over slabs, fused [CC | SC], collapsed cross
            #      PQ = A_hi@W_hi + [A_lo | A_hi] @ [W_hi; W_lo]
            PQ = (mm(A_hi, ccsc_ref[:Cw, :])
                  + mm(jnp.concatenate([A_lo, A_hi], axis=-1), ccsc_ref[...]))   # (G*2R, 2Cw)

            # ---- per slab: X, H ⊙ X, inverse row stage (cropped rows, fused [CRc; SRc])
            bcat_hi, bcat_lo = [], []
            for g in range(G):
                PQg = PQ[g * 2 * R:(g + 1) * 2 * R]                       # (2R, 2Cw)
                X_re = PQg[:R, :Cw] + PQg[R:, Cw:]                        # a_re@CC + a_im@SC
                X_im = PQg[R:, :Cw] - PQg[:R, Cw:]                        # a_im@CC - a_re@SC
                HX_re = H_re * X_re - H_im * X_im
                HX_im = H_re * X_im + H_im * X_re
                hx_hi, hx_lo = split(jnp.concatenate([HX_re, HX_im], axis=-1))    # (R, 2Cw)
                B = mm(crsrc_hi, hx_hi) + mm(crsrc_lo, hx_hi) + mm(crsrc_hi, hx_lo)  # (2D0, 2Cw)
                b_re = B[:D0, :Cw] - B[D0:, Cw:]
                b_im = B[:D0, Cw:] + B[D0:, :Cw]
                bh, bl = split(jnp.concatenate([b_re, b_im], axis=-1))    # (D0, 2Cw)
                bcat_hi.append(bh)
                bcat_lo.append(bl)
            bcat_hi = jnp.concatenate(bcat_hi, axis=0)                    # (G*D0, 2Cw)
            bcat_lo = jnp.concatenate(bcat_lo, axis=0)

            # ---- inverse column stage, batched, fused [CCc; -SCc] (1/(R*Cw) folded), lane-dense
            out_all = (mm(bcat_hi, ccscc_ref[:2 * Cw, :])
                       + mm(jnp.concatenate([bcat_lo, bcat_hi], axis=-1), ccscc_ref[...]))  # (G*D0, D1p)

            # ---- eraser multiply + unmasked lane-dense stores
            step = pl.program_id(0)
            for g in range(G):
                ch = (step * G + g) % nchan
                o_ref[g] = out_all[g * D0:(g + 1) * D0, :] * er_ref[ch]

        return kernel

    # ------------------------------------------------------------------ sizing helpers
    def _vmem_need(self, G, const_copies):
        R, Cw, D0, D1p, C = self.R, self.Cw, self.D0, self.D1p, self.C
        const_b = ((2 * (2 * R) * R + (2 * Cw) * (2 * Cw)
                    + 2 * (2 * D0) * R + (4 * Cw) * D1p) * 2        # bf16 constants
                   + (2 * R * Cw + C * D0 * D1p) * 4)               # H_re, H_im, eraser (f32)
        io_b = 2 * G * (R * Cw + D0 * D1p) * 4                      # double-buffered x / out
        tmp_b = G * 96 * R * Cw + (4 << 20)                         # in-kernel temporaries + slack
        return const_copies * const_b + io_b + tmp_b

    def _pick_group(self, NB, budget):
        divs = [g for g in range(min(NB, 8), 0, -1) if NB % g == 0]
        feasible = [g for g in divs if self._vmem_need(g, 2) <= budget] or [1]
        for g in feasible:                       # prefer an even grid extent >= 2 (v7x dual TC)
            if (NB // g) >= 2 and (NB // g) % 2 == 0:
                return g
        for g in feasible:
            if (NB // g) >= 2:
                return g
        return feasible[0]

    # ------------------------------------------------------------------ pallas_call wrapper
    def _call(self, x, NB, G, vmem_limit, single_buffer_consts):
        R, Cw, D0, D1p, C = self.R, self.Cw, self.D0, self.D1p, self.C
        kernel = self._build_kernel(G)

        def const_spec(shape):
            nblk = len(shape)
            idx = lambda b: (0,) * nblk
            if single_buffer_consts:
                # Constant index_map -> one resident copy is enough; halves constant VMEM.
                return pl.BlockSpec(shape, idx, pipeline_mode=pl.Buffered(1))
            return pl.BlockSpec(shape, idx)

        return pl.pallas_call(
            kernel,
            out_shape=jax.ShapeDtypeStruct((NB, D0, D1p), jnp.float32),
            grid_spec=pltpu.PrefetchScalarGridSpec(
                num_scalar_prefetch=0,
                grid=(NB // G,),
                in_specs=[
                    pl.BlockSpec((G, R, Cw), lambda b: (b, 0, 0)),   # x slabs
                    const_spec((2, 2 * R, R)),                       # [CR; -SR] hi/lo
                    const_spec((2 * Cw, 2 * Cw)),                    # [CC | SC] as [hi; lo]
                    const_spec((2, 2 * D0, R)),                      # [CRc; SRc] hi/lo
                    const_spec((4 * Cw, D1p)),                       # [CCc; -SCc]/(R*Cw) as [hi; lo]
                    const_spec((R, Cw)),                             # H_re
                    const_spec((R, Cw)),                             # H_im
                    const_spec((C, D0, D1p)),                        # eraser (all channels)
                ],
                out_specs=pl.BlockSpec((G, D0, D1p), lambda b: (b, 0, 0)),
            ),
            compiler_params=pltpu.CompilerParams(
                dimension_semantics=("parallel",),
                vmem_limit_bytes=vmem_limit),
        )(x, self.CRSRn2, self.CCSC_stk, self.CRSRc2, self.CCSCc_stk,
          self.H_re, self.H_im, self.eraser_dev)

    def forward(self, in_image):
        # in_image: (N, C, 2*D0, 2*D1) float32 (NCHW, already at the padded FFT size)
        N, C, R, Cw = in_image.shape
        assert (C, R, Cw) == (self.C, self.R, self.Cw)
        NB = N * C
        x = jnp.asarray(in_image, jnp.float32).reshape(NB, R, Cw)

        budget = int(0.85 * _vmem_capacity_bytes())
        G = self._pick_group(NB, budget)
        vmem_limit = min(budget, max(32 << 20, int(1.3 * self._vmem_need(G, const_copies=2))))

        use_sb = (self._single_buffer_ok is not False) and hasattr(pl, "Buffered")
        if use_sb:
            try:
                out = jax.block_until_ready(self._call(x, NB, G, vmem_limit, True))
                self._single_buffer_ok = True
            except Exception:
                # pl.Buffered(1) not supported by this JAX/Mosaic build -> default buffering.
                self._single_buffer_ok = False
                out = self._call(x, NB, G, vmem_limit, False)
        else:
            out = self._call(x, NB, G, vmem_limit, False)

        out = out[:, :, :self.D1]                          # drop lane padding
        return out.reshape(N, C, self.D0, self.D1)

    def forward_zero_pad(self, in_image):
        # in_image: (N, C, D0, D1); zero-pad (host-side glue) then same kernel path.
        pad = ((0, 0), (0, 0), (self.P0, self.P0), (self.P1, self.P1))
        return self.forward(jnp.pad(in_image, pad))


def reference_forward(model, x):
    # Pure numpy reference (matches torch.fft / torch.ifft semantics of the original module).
    x = np.asarray(x, np.float64)
    X = np.fft.fft2(x, axes=(-2, -1))
    out = np.fft.ifft2(model.Hc[None, None] * X, axes=(-2, -1))
    out_r = np.real(out)
    crop = out_r[:, :, model.P0:model.P0 + model.D0, model.P1:model.P1 + model.D1]
    return crop * model.eraser_np[None]


if __name__ == "__main__":
    key = jax.random.PRNGKey(0)
    k1, k2, k3 = jax.random.split(key, 3)

    D0 = D1 = 8        # PSF size -> padded FFT size 16x16
    N, C = 2, 4        # batch, channels

    h = jax.random.uniform(k1, (D0, D1), jnp.float32)
    h = h / jnp.sum(h)                                      # PSF-like normalization
    eraser = jax.random.uniform(k2, (D0, D1, C), jnp.float32)
    x = jax.random.normal(k3, (N, C, 2 * D0, 2 * D1), jnp.float32)

    model = ForwardModelPallas(np.asarray(h), np.asarray(eraser))

    out = model.forward(x)
    out = jax.block_until_ready(out)

    ref = reference_forward(model, np.asarray(x))
    err = float(np.max(np.abs(np.asarray(out, np.float64) - ref)))
    assert out.shape == (N, C, D0, D1), out.shape
    assert err < 1e-3, f"max abs error too large: {err}"

    print("KERNEL_OK")
</pallas_src>

<mosaic_0001>
module attributes {stable_mosaic.version = 11 : i64} {
  func.func @kernel(%arg0: i32, %arg1: memref<4x16x16xf32, #tpu.memory_space<vmem>>, %arg2: memref<2x32x16xbf16, #tpu.memory_space<vmem>>, %arg3: memref<32x32xbf16, #tpu.memory_space<vmem>>, %arg4: memref<2x16x16xbf16, #tpu.memory_space<vmem>>, %arg5: memref<64x128xbf16, #tpu.memory_space<vmem>>, %arg6: memref<16x16xf32, #tpu.memory_space<vmem>>, %arg7: memref<16x16xf32, #tpu.memory_space<vmem>>, %arg8: memref<4x8x128xf32, #tpu.memory_space<vmem>>, %arg9: memref<4x8x128xf32, #tpu.memory_space<vmem>>) attributes {dimension_semantics = [#tpu.dimension_semantics<parallel>], iteration_bounds = array<i64: 2>, scalar_prefetch = 0 : i64, scratch_operands = 0 : i64, tpu.core_type = #tpu.core_type<tc>, window_params = [{transform_indices = @transform_0, window_bounds = array<i64: 4, 16, 16>}, {pipeline_mode = #tpu.pipeline_mode<synchronous>, transform_indices = @transform_1, window_bounds = array<i64: 2, 32, 16>}, {pipeline_mode = #tpu.pipeline_mode<synchronous>, transform_indices = @transform_2, window_bounds = array<i64: 32, 32>}, {pipeline_mode = #tpu.pipeline_mode<synchronous>, transform_indices = @transform_3, window_bounds = array<i64: 2, 16, 16>}, {pipeline_mode = #tpu.pipeline_mode<synchronous>, transform_indices = @transform_4, window_bounds = array<i64: 64, 128>}, {pipeline_mode = #tpu.pipeline_mode<synchronous>, transform_indices = @transform_5, window_bounds = array<i64: 16, 16>}, {pipeline_mode = #tpu.pipeline_mode<synchronous>, transform_indices = @transform_6, window_bounds = array<i64: 16, 16>}, {pipeline_mode = #tpu.pipeline_mode<synchronous>, transform_indices = @transform_7, window_bounds = array<i64: 4, 8, 128>}, {transform_indices = @transform_8, window_bounds = array<i64: 4, 8, 128>}]} {
    %c0 = arith.constant 0 : index
    %c0_0 = arith.constant 0 : index
    %c0_1 = arith.constant 0 : index
    %0 = vector.load %arg2[%c0, %c0_0, %c0_1] : memref<2x32x16xbf16, #tpu.memory_space<vmem>>, vector<1x32x16xbf16>
    %1 = vector.shape_cast %0 : vector<1x32x16xbf16> to vector<32x16xbf16>
    %c1 = arith.constant 1 : index
    %c0_2 = arith.constant 0 : index
    %c0_3 = arith.constant 0 : index
    %2 = vector.load %arg2[%c1, %c0_2, %c0_3] : memref<2x32x16xbf16, #tpu.memory_space<vmem>>, vector<1x32x16xbf16>
    %3 = vector.shape_cast %2 : vector<1x32x16xbf16> to vector<32x16xbf16>
    %c0_4 = arith.constant 0 : index
    %c0_5 = arith.constant 0 : index
    %c0_6 = arith.constant 0 : index
    %4 = vector.load %arg4[%c0_4, %c0_5, %c0_6] : memref<2x16x16xbf16, #tpu.memory_space<vmem>>, vector<1x16x16xbf16>
    %5 = vector.shape_cast %4 : vector<1x16x16xbf16> to vector<16x16xbf16>
    %c1_7 = arith.constant 1 : index
    %c0_8 = arith.constant 0 : index
    %c0_9 = arith.constant 0 : index
    %6 = vector.load %arg4[%c1_7, %c0_8, %c0_9] : memref<2x16x16xbf16, #tpu.memory_space<vmem>>, vector<1x16x16xbf16>
    %7 = vector.shape_cast %6 : vector<1x16x16xbf16> to vector<16x16xbf16>
    %c0_10 = arith.constant 0 : index
    %c0_11 = arith.constant 0 : index
    %8 = vector.load %arg6[%c0_10, %c0_11] : memref<16x16xf32, #tpu.memory_space<vmem>>, vector<16x16xf32>
    %c0_12 = arith.constant 0 : index
    %c0_13 = arith.constant 0 : index
    %9 = vector.load %arg7[%c0_12, %c0_13] : memref<16x16xf32, #tpu.memory_space<vmem>>, vector<16x16xf32>
    %c0_14 = arith.constant 0 : index
    %c0_15 = arith.constant 0 : index
    %c0_16 = arith.constant 0 : index
    %10 = vector.load %arg1[%c0_14, %c0_15, %c0_16] : memref<4x16x16xf32, #tpu.memory_space<vmem>>, vector<1x16x16xf32>
    %11 = vector.shape_cast %10 : vector<1x16x16xf32> to vector<16x16xf32>
    %12 = arith.truncf %11 : vector<16x16xf32> to vector<16x16xbf16>
    %13 = arith.extf %12 : vector<16x16xbf16> to vector<16x16xf32>
    %14 = arith.subf %11, %13 : vector<16x16xf32>
    %15 = arith.truncf %14 : vector<16x16xf32> to vector<16x16xbf16>
    %cst = arith.constant dense<0.000000e+00> : vector<32x16xf32>
    %16 = tpu.matmul %1, %12, %cst {dimension_numbers = #tpu.dot_dimension_numbers<[1], [0], [0], [1], [0, 0, 1, 1], [], []>} : vector<32x16xbf16>, vector<16x16xbf16>, vector<32x16xf32> -> vector<32x16xf32>
    %cst_17 = arith.constant dense<0.000000e+00> : vector<32x16xf32>
    %17 = tpu.matmul %3, %12, %cst_17 {dimension_numbers = #tpu.dot_dimension_numbers<[1], [0], [0], [1], [0, 0, 1, 1], [], []>} : vector<32x16xbf16>, vector<16x16xbf16>, vector<32x16xf32> -> vector<32x16xf32>
    %18 = arith.addf %16, %17 : vector<32x16xf32>
    %cst_18 = arith.constant dense<0.000000e+00> : vector<32x16xf32>
    %19 = tpu.matmul %1, %15, %cst_18 {dimension_numbers = #tpu.dot_dimension_numbers<[1], [0], [0], [1], [0, 0, 1, 1], [], []>} : vector<32x16xbf16>, vector<16x16xbf16>, vector<32x16xf32> -> vector<32x16xf32>
    %20 = arith.addf %18, %19 : vector<32x16xf32>
    %21 = arith.truncf %20 : vector<32x16xf32> to vector<32x16xbf16>
    %22 = arith.extf %21 : vector<32x16xbf16> to vector<32x16xf32>
    %23 = arith.subf %20, %22 : vector<32x16xf32>
    %24 = arith.truncf %23 : vector<32x16xf32> to vector<32x16xbf16>
    %c1_19 = arith.constant 1 : index
    %c0_20 = arith.constant 0 : index
    %c0_21 = arith.constant 0 : index
    %25 = vector.load %arg1[%c1_19, %c0_20, %c0_21] : memref<4x16x16xf32, #tpu.memory_space<vmem>>, vector<1x16x16xf32>
    %26 = vector.shape_cast %25 : vector<1x16x16xf32> to vector<16x16xf32>
    %27 = arith.truncf %26 : vector<16x16xf32> to vector<16x16xbf16>
    %28 = arith.extf %27 : vector<16x16xbf16> to vector<16x16xf32>
    %29 = arith.subf %26, %28 : vector<16x16xf32>
    %30 = arith.truncf %29 : vector<16x16xf32> to vector<16x16xbf16>
    %cst_22 = arith.constant dense<0.000000e+00> : vector<32x16xf32>
    %31 = tpu.matmul %1, %27, %cst_22 {dimension_numbers = #tpu.dot_dimension_numbers<[1], [0], [0], [1], [0, 0, 1, 1], [], []>} : vector<32x16xbf16>, vector<16x16xbf16>, vector<32x16xf32> -> vector<32x16xf32>
    %cst_23 = arith.constant dense<0.000000e+00> : vector<32x16xf32>
    %32 = tpu.matmul %3, %27, %cst_23 {dimension_numbers = #tpu.dot_dimension_numbers<[1], [0], [0], [1], [0, 0, 1, 1], [], []>} : vector<32x16xbf16>, vector<16x16xbf16>, vector<32x16xf32> -> vector<32x16xf32>
    %33 = arith.addf %31, %32 : vector<32x16xf32>
    %cst_24 = arith.constant dense<0.000000e+00> : vector<32x16xf32>
    %34 = tpu.matmul %1, %30, %cst_24 {dimension_numbers = #tpu.dot_dimension_numbers<[1], [0], [0], [1], [0, 0, 1, 1], [], []>} : vector<32x16xbf16>, vector<16x16xbf16>, vector<32x16xf32> -> vector<32x16xf32>
    %35 = arith.addf %33, %34 : vector<32x16xf32>
    %36 = arith.truncf %35 : vector<32x16xf32> to vector<32x16xbf16>
    %37 = arith.extf %36 : vector<32x16xbf16> to vector<32x16xf32>
    %38 = arith.subf %35, %37 : vector<32x16xf32>
    %39 = arith.truncf %38 : vector<32x16xf32> to vector<32x16xbf16>
    %c2 = arith.constant 2 : index
    %c0_25 = arith.constant 0 : index
    %c0_26 = arith.constant 0 : index
    %40 = vector.load %arg1[%c2, %c0_25, %c0_26] : memref<4x16x16xf32, #tpu.memory_space<vmem>>, vector<1x16x16xf32>
    %41 = vector.shape_cast %40 : vector<1x16x16xf32> to vector<16x16xf32>
    %42 = arith.truncf %41 : vector<16x16xf32> to vector<16x16xbf16>
    %43 = arith.extf %42 : vector<16x16xbf16> to vector<16x16xf32>
    %44 = arith.subf %41, %43 : vector<16x16xf32>
    %45 = arith.truncf %44 : vector<16x16xf32> to vector<16x16xbf16>
    %cst_27 = arith.constant dense<0.000000e+00> : vector<32x16xf32>
    %46 = tpu.matmul %1, %42, %cst_27 {dimension_numbers = #tpu.dot_dimension_numbers<[1], [0], [0], [1], [0, 0, 1, 1], [], []>} : vector<32x16xbf16>, vector<16x16xbf16>, vector<32x16xf32> -> vector<32x16xf32>
    %cst_28 = arith.constant dense<0.000000e+00> : vector<32x16xf32>
    %47 = tpu.matmul %3, %42, %cst_28 {dimension_numbers = #tpu.dot_dimension_numbers<[1], [0], [0], [1], [0, 0, 1, 1], [], []>} : vector<32x16xbf16>, vector<16x16xbf16>, vector<32x16xf32> -> vector<32x16xf32>
    %48 = arith.addf %46, %47 : vector<32x16xf32>
    %cst_29 = arith.constant dense<0.000000e+00> : vector<32x16xf32>
    %49 = tpu.matmul %1, %45, %cst_29 {dimension_numbers = #tpu.dot_dimension_numbers<[1], [0], [0], [1], [0, 0, 1, 1], [], []>} : vector<32x16xbf16>, vector<16x16xbf16>, vector<32x16xf32> -> vector<32x16xf32>
    %50 = arith.addf %48, %49 : vector<32x16xf32>
    %51 = arith.truncf %50 : vector<32x16xf32> to vector<32x16xbf16>
    %52 = arith.extf %51 : vector<32x16xbf16> to vector<32x16xf32>
    %53 = arith.subf %50, %52 : vector<32x16xf32>
    %54 = arith.truncf %53 : vector<32x16xf32> to vector<32x16xbf16>
    %c3 = arith.constant 3 : index
    %c0_30 = arith.constant 0 : index
    %c0_31 = arith.constant 0 : index
    %55 = vector.load %arg1[%c3, %c0_30, %c0_31] : memref<4x16x16xf32, #tpu.memory_space<vmem>>, vector<1x16x16xf32>
    %56 = vector.shape_cast %55 : vector<1x16x16xf32> to vector<16x16xf32>
    %57 = arith.truncf %56 : vector<16x16xf32> to vector<16x16xbf16>
    %58 = arith.extf %57 : vector<16x16xbf16> to vector<16x16xf32>
    %59 = arith.subf %56, %58 : vector<16x16xf32>
    %60 = arith.truncf %59 : vector<16x16xf32> to vector<16x16xbf16>
    %cst_32 = arith.constant dense<0.000000e+00> : vector<32x16xf32>
    %61 = tpu.matmul %1, %57, %cst_32 {dimension_numbers = #tpu.dot_dimension_numbers<[1], [0], [0], [1], [0, 0, 1, 1], [], []>} : vector<32x16xbf16>, vector<16x16xbf16>, vector<32x16xf32> -> vector<32x16xf32>
    %cst_33 = arith.constant dense<0.000000e+00> : vector<32x16xf32>
    %62 = tpu.matmul %3, %57, %cst_33 {dimension_numbers = #tpu.dot_dimension_numbers<[1], [0], [0], [1], [0, 0, 1, 1], [], []>} : vector<32x16xbf16>, vector<16x16xbf16>, vector<32x16xf32> -> vector<32x16xf32>
    %63 = arith.addf %61, %62 : vector<32x16xf32>
    %cst_34 = arith.constant dense<0.000000e+00> : vector<32x16xf32>
    %64 = tpu.matmul %1, %60, %cst_34 {dimension_numbers = #tpu.dot_dimension_numbers<[1], [0], [0], [1], [0, 0, 1, 1], [], []>} : vector<32x16xbf16>, vector<16x16xbf16>, vector<32x16xf32> -> vector<32x16xf32>
    %65 = arith.addf %63, %64 : vector<32x16xf32>
    %66 = arith.truncf %65 : vector<32x16xf32> to vector<32x16xbf16>
    %67 = arith.extf %66 : vector<32x16xbf16> to vector<32x16xf32>
    %68 = arith.subf %65, %67 : vector<32x16xf32>
    %69 = arith.truncf %68 : vector<32x16xf32> to vector<32x16xbf16>
    %70 = tpu.concatenate %21, %36, %51, %66 in 0 : vector<32x16xbf16>, vector<32x16xbf16>, vector<32x16xbf16>, vector<32x16xbf16> -> vector<128x16xbf16>
    %71 = tpu.concatenate %24, %39, %54, %69 in 0 : vector<32x16xbf16>, vector<32x16xbf16>, vector<32x16xbf16>, vector<32x16xbf16> -> vector<128x16xbf16>
    %c0_35 = arith.constant 0 : index
    %c0_36 = arith.constant 0 : index
    %72 = vector.load %arg3[%c0_35, %c0_36] : memref<32x32xbf16, #tpu.memory_space<vmem>>, vector<16x32xbf16>
    %cst_37 = arith.constant dense<0.000000e+00> : vector<128x32xf32>
    %73 = tpu.matmul %70, %72, %cst_37 {dimension_numbers = #tpu.dot_dimension_numbers<[1], [0], [0], [1], [0, 0, 1, 1], [], []>} : vector<128x16xbf16>, vector<16x32xbf16>, vector<128x32xf32> -> vector<128x32xf32>
    %74 = tpu.concatenate %71, %70 in 1 : vector<128x16xbf16>, vector<128x16xbf16> -> vector<128x32xbf16>
    %c0_38 = arith.constant 0 : index
    %c0_39 = arith.constant 0 : index
    %75 = vector.load %arg3[%c0_38, %c0_39] : memref<32x32xbf16, #tpu.memory_space<vmem>>, vector<32x32xbf16>
    %cst_40 = arith.constant dense<0.000000e+00> : vector<128x32xf32>
    %76 = tpu.matmul %74, %75, %cst_40 {dimension_numbers = #tpu.dot_dimension_numbers<[1], [0], [0], [1], [0, 0, 1, 1], [], []>} : vector<128x32xbf16>, vector<32x32xbf16>, vector<128x32xf32> -> vector<128x32xf32>
    %77 = arith.addf %73, %76 : vector<128x32xf32>
    %78 = vector.extract_strided_slice %77 {offsets = [0, 0], sizes = [32, 32], strides = [1, 1]} : vector<128x32xf32> to vector<32x32xf32>
    %79 = vector.extract_strided_slice %78 {offsets = [0, 0], sizes = [16, 16], strides = [1, 1]} : vector<32x32xf32> to vector<16x16xf32>
    %80 = vector.extract_strided_slice %78 {offsets = [16, 16], sizes = [16, 16], strides = [1, 1]} : vector<32x32xf32> to vector<16x16xf32>
    %81 = arith.addf %79, %80 : vector<16x16xf32>
    %82 = vector.extract_strided_slice %78 {offsets = [16, 0], sizes = [16, 16], strides = [1, 1]} : vector<32x32xf32> to vector<16x16xf32>
    %83 = vector.extract_strided_slice %78 {offsets = [0, 16], sizes = [16, 16], strides = [1, 1]} : vector<32x32xf32> to vector<16x16xf32>
    %84 = arith.subf %82, %83 : vector<16x16xf32>
    %85 = arith.mulf %8, %81 : vector<16x16xf32>
    %86 = arith.mulf %9, %84 : vector<16x16xf32>
    %87 = arith.subf %85, %86 : vector<16x16xf32>
    %88 = arith.mulf %8, %84 : vector<16x16xf32>
    %89 = arith.mulf %9, %81 : vector<16x16xf32>
    %90 = arith.addf %88, %89 : vector<16x16xf32>
    %91 = tpu.concatenate %87, %90 in 1 : vector<16x16xf32>, vector<16x16xf32> -> vector<16x32xf32>
    %92 = arith.truncf %91 : vector<16x32xf32> to vector<16x32xbf16>
    %93 = arith.extf %92 : vector<16x32xbf16> to vector<16x32xf32>
    %94 = arith.subf %91, %93 : vector<16x32xf32>
    %95 = arith.truncf %94 : vector<16x32xf32> to vector<16x32xbf16>
    %cst_41 = arith.constant dense<0.000000e+00> : vector<16x32xf32>
    %96 = tpu.matmul %5, %92, %cst_41 {dimension_numbers = #tpu.dot_dimension_numbers<[1], [0], [0], [1], [0, 0, 1, 1], [], []>} : vector<16x16xbf16>, vector<16x32xbf16>, vector<16x32xf32> -> vector<16x32xf32>
    %cst_42 = arith.constant dense<0.000000e+00> : vector<16x32xf32>
    %97 = tpu.matmul %7, %92, %cst_42 {dimension_numbers = #tpu.dot_dimension_numbers<[1], [0], [0], [1], [0, 0, 1, 1], [], []>} : vector<16x16xbf16>, vector<16x32xbf16>, vector<16x32xf32> -> vector<16x32xf32>
    %98 = arith.addf %96, %97 : vector<16x32xf32>
    %cst_43 = arith.constant dense<0.000000e+00> : vector<16x32xf32>
    %99 = tpu.matmul %5, %95, %cst_43 {dimension_numbers = #tpu.dot_dimension_numbers<[1], [0], [0], [1], [0, 0, 1, 1], [], []>} : vector<16x16xbf16>, vector<16x32xbf16>, vector<16x32xf32> -> vector<16x32xf32>
    %100 = arith.addf %98, %99 : vector<16x32xf32>
    %101 = vector.extract_strided_slice %100 {offsets = [0, 0], sizes = [8, 16], strides = [1, 1]} : vector<16x32xf32> to vector<8x16xf32>
    %102 = vector.extract_strided_slice %100 {offsets = [8, 16], sizes = [8, 16], strides = [1, 1]} : vector<16x32xf32> to vector<8x16xf32>
    %103 = arith.subf %101, %102 : vector<8x16xf32>
    %104 = vector.extract_strided_slice %100 {offsets = [0, 16], sizes = [8, 16], strides = [1, 1]} : vector<16x32xf32> to vector<8x16xf32>
    %105 = vector.extract_strided_slice %100 {offsets = [8, 0], sizes = [8, 16], strides = [1, 1]} : vector<16x32xf32> to vector<8x16xf32>
    %106 = arith.addf %104, %105 : vector<8x16xf32>
    %107 = tpu.concatenate %103, %106 in 1 : vector<8x16xf32>, vector<8x16xf32> -> vector<8x32xf32>
    %108 = arith.truncf %107 : vector<8x32xf32> to vector<8x32xbf16>
    %109 = arith.extf %108 : vector<8x32xbf16> to vector<8x32xf32>
    %110 = arith.subf %107, %109 : vector<8x32xf32>
    %111 = arith.truncf %110 : vector<8x32xf32> to vector<8x32xbf16>
    %112 = vector.extract_strided_slice %77 {offsets = [32, 0], sizes = [32, 32], strides = [1, 1]} : vector<128x32xf32> to vector<32x32xf32>
    %113 = vector.extract_strided_slice %112 {offsets = [0, 0], sizes = [16, 16], strides = [1, 1]} : vector<32x32xf32> to vector<16x16xf32>
    %114 = vector.extract_strided_slice %112 {offsets = [16, 16], sizes = [16, 16], strides = [1, 1]} : vector<32x32xf32> to vector<16x16xf32>
    %115 = arith.addf %113, %114 : vector<16x16xf32>
    %116 = vector.extract_strided_slice %112 {offsets = [16, 0], sizes = [16, 16], strides = [1, 1]} : vector<32x32xf32> to vector<16x16xf32>
    %117 = vector.extract_strided_slice %112 {offsets = [0, 16], sizes = [16, 16], strides = [1, 1]} : vector<32x32xf32> to vector<16x16xf32>
    %118 = arith.subf %116, %117 : vector<16x16xf32>
    %119 = arith.mulf %8, %115 : vector<16x16xf32>
    %120 = arith.mulf %9, %118 : vector<16x16xf32>
    %121 = arith.subf %119, %120 : vector<16x16xf32>
    %122 = arith.mulf %8, %118 : vector<16x16xf32>
    %123 = arith.mulf %9, %115 : vector<16x16xf32>
    %124 = arith.addf %122, %123 : vector<16x16xf32>
    %125 = tpu.concatenate %121, %124 in 1 : vector<16x16xf32>, vector<16x16xf32> -> vector<16x32xf32>
    %126 = arith.truncf %125 : vector<16x32xf32> to vector<16x32xbf16>
    %127 = arith.extf %126 : vector<16x32xbf16> to vector<16x32xf32>
    %128 = arith.subf %125, %127 : vector<16x32xf32>
    %129 = arith.truncf %128 : vector<16x32xf32> to vector<16x32xbf16>
    %cst_44 = arith.constant dense<0.000000e+00> : vector<16x32xf32>
    %130 = tpu.matmul %5, %126, %cst_44 {dimension_numbers = #tpu.dot_dimension_numbers<[1], [0], [0], [1], [0, 0, 1, 1], [], []>} : vector<16x16xbf16>, vector<16x32xbf16>, vector<16x32xf32> -> vector<16x32xf32>
    %cst_45 = arith.constant dense<0.000000e+00> : vector<16x32xf32>
    %131 = tpu.matmul %7, %126, %cst_45 {dimension_numbers = #tpu.dot_dimension_numbers<[1], [0], [0], [1], [0, 0, 1, 1], [], []>} : vector<16x16xbf16>, vector<16x32xbf16>, vector<16x32xf32> -> vector<16x32xf32>
    %132 = arith.addf %130, %131 : vector<16x32xf32>
    %cst_46 = arith.constant dense<0.000000e+00> : vector<16x32xf32>
    %133 = tpu.matmul %5, %129, %cst_46 {dimension_numbers = #tpu.dot_dimension_numbers<[1], [0], [0], [1], [0, 0, 1, 1], [], []>} : vector<16x16xbf16>, vector<16x32xbf16>, vector<16x32xf32> -> vector<16x32xf32>
    %134 = arith.addf %132, %133 : vector<16x32xf32>
    %135 = vector.extract_strided_slice %134 {offsets = [0, 0], sizes = [8, 16], strides = [1, 1]} : vector<16x32xf32> to vector<8x16xf32>
    %136 = vector.extract_strided_slice %134 {offsets = [8, 16], sizes = [8, 16], strides = [1, 1]} : vector<16x32xf32> to vector<8x16xf32>
    %137 = arith.subf %135, %136 : vector<8x16xf32>
    %138 = vector.extract_strided_slice %134 {offsets = [0, 16], sizes = [8, 16], strides = [1, 1]} : vector<16x32xf32> to vector<8x16xf32>
    %139 = vector.extract_strided_slice %134 {offsets = [8, 0], sizes = [8, 16], strides = [1, 1]} : vector<16x32xf32> to vector<8x16xf32>
    %140 = arith.addf %138, %139 : vector<8x16xf32>
    %141 = tpu.concatenate %137, %140 in 1 : vector<8x16xf32>, vector<8x16xf32> -> vector<8x32xf32>
    %142 = arith.truncf %141 : vector<8x32xf32> to vector<8x32xbf16>
    %143 = arith.extf %142 : vector<8x32xbf16> to vector<8x32xf32>
    %144 = arith.subf %141, %143 : vector<8x32xf32>
    %145 = arith.truncf %144 : vector<8x32xf32> to vector<8x32xbf16>
    %146 = vector.extract_strided_slice %77 {offsets = [64, 0], sizes = [32, 32], strides = [1, 1]} : vector<128x32xf32> to vector<32x32xf32>
    %147 = vector.extract_strided_slice %146 {offsets = [0, 0], sizes = [16, 16], strides = [1, 1]} : vector<32x32xf32> to vector<16x16xf32>
    %148 = vector.extract_strided_slice %146 {offsets = [16, 16], sizes = [16, 16], strides = [1, 1]} : vector<32x32xf32> to vector<16x16xf32>
    %149 = arith.addf %147, %148 : vector<16x16xf32>
    %150 = vector.extract_strided_slice %146 {offsets = [16, 0], sizes = [16, 16], strides = [1, 1]} : vector<32x32xf32> to vector<16x16xf32>
    %151 = vector.extract_strided_slice %146 {offsets = [0, 16], sizes = [16, 16], strides = [1, 1]} : vector<32x32xf32> to vector<16x16xf32>
    %152 = arith.subf %150, %151 : vector<16x16xf32>
    %153 = arith.mulf %8, %149 : vector<16x16xf32>
    %154 = arith.mulf %9, %152 : vector<16x16xf32>
    %155 = arith.subf %153, %154 : vector<16x16xf32>
    %156 = arith.mulf %8, %152 : vector<16x16xf32>
    %157 = arith.mulf %9, %149 : vector<16x16xf32>
    %158 = arith.addf %156, %157 : vector<16x16xf32>
    %159 = tpu.concatenate %155, %158 in 1 : vector<16x16xf32>, vector<16x16xf32> -> vector<16x32xf32>
    %160 = arith.truncf %159 : vector<16x32xf32> to vector<16x32xbf16>
    %161 = arith.extf %160 : vector<16x32xbf16> to vector<16x32xf32>
    %162 = arith.subf %159, %161 : vector<16x32xf32>
    %163 = arith.truncf %162 : vector<16x32xf32> to vector<16x32xbf16>
    %cst_47 = arith.constant dense<0.000000e+00> : vector<16x32xf32>
    %164 = tpu.matmul %5, %160, %cst_47 {dimension_numbers = #tpu.dot_dimension_numbers<[1], [0], [0], [1], [0, 0, 1, 1], [], []>} : vector<16x16xbf16>, vector<16x32xbf16>, vector<16x32xf32> -> vector<16x32xf32>
    %cst_48 = arith.constant dense<0.000000e+00> : vector<16x32xf32>
    %165 = tpu.matmul %7, %160, %cst_48 {dimension_numbers = #tpu.dot_dimension_numbers<[1], [0], [0], [1], [0, 0, 1, 1], [], []>} : vector<16x16xbf16>, vector<16x32xbf16>, vector<16x32xf32> -> vector<16x32xf32>
    %166 = arith.addf %164, %165 : vector<16x32xf32>
    %cst_49 = arith.constant dense<0.000000e+00> : vector<16x32xf32>
    %167 = tpu.matmul %5, %163, %cst_49 {dimension_numbers = #tpu.dot_dimension_numbers<[1], [0], [0], [1], [0, 0, 1, 1], [], []>} : vector<16x16xbf16>, vector<16x32xbf16>, vector<16x32xf32> -> vector<16x32xf32>
    %168 = arith.addf %166, %167 : vector<16x32xf32>
    %169 = vector.extract_strided_slice %168 {offsets = [0, 0], sizes = [8, 16], strides = [1, 1]} : vector<16x32xf32> to vector<8x16xf32>
    %170 = vector.extract_strided_slice %168 {offsets = [8, 16], sizes = [8, 16], strides = [1, 1]} : vector<16x32xf32> to vector<8x16xf32>
    %171 = arith.subf %169, %170 : vector<8x16xf32>
    %172 = vector.extract_strided_slice %168 {offsets = [0, 16], sizes = [8, 16], strides = [1, 1]} : vector<16x32xf32> to vector<8x16xf32>
    %173 = vector.extract_strided_slice %168 {offsets = [8, 0], sizes = [8, 16], strides = [1, 1]} : vector<16x32xf32> to vector<8x16xf32>
    %174 = arith.addf %172, %173 : vector<8x16xf32>
    %175 = tpu.concatenate %171, %174 in 1 : vector<8x16xf32>, vector<8x16xf32> -> vector<8x32xf32>
    %176 = arith.truncf %175 : vector<8x32xf32> to vector<8x32xbf16>
    %177 = arith.extf %176 : vector<8x32xbf16> to vector<8x32xf32>
    %178 = arith.subf %175, %177 : vector<8x32xf32>
    %179 = arith.truncf %178 : vector<8x32xf32> to vector<8x32xbf16>
    %180 = vector.extract_strided_slice %77 {offsets = [96, 0], sizes = [32, 32], strides = [1, 1]} : vector<128x32xf32> to vector<32x32xf32>
    %181 = vector.extract_strided_slice %180 {offsets = [0, 0], sizes = [16, 16], strides = [1, 1]} : vector<32x32xf32> to vector<16x16xf32>
    %182 = vector.extract_strided_slice %180 {offsets = [16, 16], sizes = [16, 16], strides = [1, 1]} : vector<32x32xf32> to vector<16x16xf32>
    %183 = arith.addf %181, %182 : vector<16x16xf32>
    %184 = vector.extract_strided_slice %180 {offsets = [16, 0], sizes = [16, 16], strides = [1, 1]} : vector<32x32xf32> to vector<16x16xf32>
    %185 = vector.extract_strided_slice %180 {offsets = [0, 16], sizes = [16, 16], strides = [1, 1]} : vector<32x32xf32> to vector<16x16xf32>
    %186 = arith.subf %184, %185 : vector<16x16xf32>
    %187 = arith.mulf %8, %183 : vector<16x16xf32>
    %188 = arith.mulf %9, %186 : vector<16x16xf32>
    %189 = arith.subf %187, %188 : vector<16x16xf32>
    %190 = arith.mulf %8, %186 : vector<16x16xf32>
    %191 = arith.mulf %9, %183 : vector<16x16xf32>
    %192 = arith.addf %190, %191 : vector<16x16xf32>
    %193 = tpu.concatenate %189, %192 in 1 : vector<16x16xf32>, vector<16x16xf32> -> vector<16x32xf32>
    %194 = arith.truncf %193 : vector<16x32xf32> to vector<16x32xbf16>
    %195 = arith.extf %194 : vector<16x32xbf16> to vector<16x32xf32>
    %196 = arith.subf %193, %195 : vector<16x32xf32>
    %197 = arith.truncf %196 : vector<16x32xf32> to vector<16x32xbf16>
    %cst_50 = arith.constant dense<0.000000e+00> : vector<16x32xf32>
    %198 = tpu.matmul %5, %194, %cst_50 {dimension_numbers = #tpu.dot_dimension_numbers<[1], [0], [0], [1], [0, 0, 1, 1], [], []>} : vector<16x16xbf16>, vector<16x32xbf16>, vector<16x32xf32> -> vector<16x32xf32>
    %cst_51 = arith.constant dense<0.000000e+00> : vector<16x32xf32>
    %199 = tpu.matmul %7, %194, %cst_51 {dimension_numbers = #tpu.dot_dimension_numbers<[1], [0], [0], [1], [0, 0, 1, 1], [], []>} : vector<16x16xbf16>, vector<16x32xbf16>, vector<16x32xf32> -> vector<16x32xf32>
    %200 = arith.addf %198, %199 : vector<16x32xf32>
    %cst_52 = arith.constant dense<0.000000e+00> : vector<16x32xf32>
    %201 = tpu.matmul %5, %197, %cst_52 {dimension_numbers = #tpu.dot_dimension_numbers<[1], [0], [0], [1], [0, 0, 1, 1], [], []>} : vector<16x16xbf16>, vector<16x32xbf16>, vector<16x32xf32> -> vector<16x32xf32>
    %202 = arith.addf %200, %201 : vector<16x32xf32>
    %203 = vector.extract_strided_slice %202 {offsets = [0, 0], sizes = [8, 16], strides = [1, 1]} : vector<16x32xf32> to vector<8x16xf32>
    %204 = vector.extract_strided_slice %202 {offsets = [8, 16], sizes = [8, 16], strides = [1, 1]} : vector<16x32xf32> to vector<8x16xf32>
    %205 = arith.subf %203, %204 : vector<8x16xf32>
    %206 = vector.extract_strided_slice %202 {offsets = [0, 16], sizes = [8, 16], strides = [1, 1]} : vector<16x32xf32> to vector<8x16xf32>
    %207 = vector.extract_strided_slice %202 {offsets = [8, 0], sizes = [8, 16], strides = [1, 1]} : vector<16x32xf32> to vector<8x16xf32>
    %208 = arith.addf %206, %207 : vector<8x16xf32>
    %209 = tpu.concatenate %205, %208 in 1 : vector<8x16xf32>, vector<8x16xf32> -> vector<8x32xf32>
    %210 = arith.truncf %209 : vector<8x32xf32> to vector<8x32xbf16>
    %211 = arith.extf %210 : vector<8x32xbf16> to vector<8x32xf32>
    %212 = arith.subf %209, %211 : vector<8x32xf32>
    %213 = arith.truncf %212 : vector<8x32xf32> to vector<8x32xbf16>
    %214 = tpu.concatenate %108, %142, %176, %210 in 0 : vector<8x32xbf16>, vector<8x32xbf16>, vector<8x32xbf16>, vector<8x32xbf16> -> vector<32x32xbf16>
    %215 = tpu.concatenate %111, %145, %179, %213 in 0 : vector<8x32xbf16>, vector<8x32xbf16>, vector<8x32xbf16>, vector<8x32xbf16> -> vector<32x32xbf16>
    %c0_53 = arith.constant 0 : index
    %c0_54 = arith.constant 0 : index
    %216 = vector.load %arg5[%c0_53, %c0_54] : memref<64x128xbf16, #tpu.memory_space<vmem>>, vector<32x128xbf16>
    %cst_55 = arith.constant dense<0.000000e+00> : vector<32x128xf32>
    %217 = tpu.matmul %214, %216, %cst_55 {dimension_numbers = #tpu.dot_dimension_numbers<[1], [0], [0], [1], [0, 0, 1, 1], [], []>} : vector<32x32xbf16>, vector<32x128xbf16>, vector<32x128xf32> -> vector<32x128xf32>
    %218 = tpu.concatenate %215, %214 in 1 : vector<32x32xbf16>, vector<32x32xbf16> -> vector<32x64xbf16>
    %c0_56 = arith.constant 0 : index
    %c0_57 = arith.constant 0 : index
    %219 = vector.load %arg5[%c0_56, %c0_57] : memref<64x128xbf16, #tpu.memory_space<vmem>>, vector<64x128xbf16>
    %cst_58 = arith.constant dense<0.000000e+00> : vector<32x128xf32>
    %220 = tpu.matmul %218, %219, %cst_58 {dimension_numbers = #tpu.dot_dimension_numbers<[1], [0], [0], [1], [0, 0, 1, 1], [], []>} : vector<32x64xbf16>, vector<64x128xbf16>, vector<32x128xf32> -> vector<32x128xf32>
    %221 = arith.addf %217, %220 : vector<32x128xf32>
    %c4_i32 = arith.constant 4 : i32
    %222 = arith.muli %arg0, %c4_i32 : i32
    %c0_i32 = arith.constant 0 : i32
    %223 = arith.addi %222, %c0_i32 : i32
    %c4_i32_59 = arith.constant 4 : i32
    %c0_i32_60 = arith.constant 0 : i32
    %224 = arith.cmpi eq, %c4_i32_59, %c0_i32_60 : i32
    %c1_i32 = arith.constant 1 : i32
    %225 = arith.select %224, %c1_i32, %c4_i32_59 : i32
    %226 = arith.remsi %223, %225 : i32
    %c0_i32_61 = arith.constant 0 : i32
    %227 = arith.cmpi ne, %226, %c0_i32_61 : i32
    %c0_i32_62 = arith.constant 0 : i32
    %228 = arith.cmpi slt, %226, %c0_i32_62 : i32
    %c0_i32_63 = arith.constant 0 : i32
    %229 = arith.cmpi slt, %225, %c0_i32_63 : i32
    %230 = arith.xori %228, %229 : i1
    %231 = arith.andi %230, %227 : i1
    %232 = arith.addi %226, %225 : i32
    %233 = arith.select %231, %232, %226 : i32
    %234 = vector.extract_strided_slice %221 {offsets = [0, 0], sizes = [8, 128], strides = [1, 1]} : vector<32x128xf32> to vector<8x128xf32>
    %235 = arith.index_cast %233 : i32 to index
    %c0_64 = arith.constant 0 : index
    %c0_65 = arith.constant 0 : index
    %236 = vector.load %arg8[%235, %c0_64, %c0_65] : memref<4x8x128xf32, #tpu.memory_space<vmem>>, vector<1x8x128xf32>
    %237 = vector.shape_cast %236 : vector<1x8x128xf32> to vector<8x128xf32>
    %238 = arith.mulf %234, %237 : vector<8x128xf32>
    %c0_66 = arith.constant 0 : index
    %c0_67 = arith.constant 0 : index
    %c0_68 = arith.constant 0 : index
    %239 = vector.load %arg9[%c0_66, %c0_67, %c0_68] : memref<4x8x128xf32, #tpu.memory_space<vmem>>, vector<1x8x128xf32>
    %240 = vector.shape_cast %239 : vector<1x8x128xf32> to vector<8x128xf32>
    %241 = vector.shape_cast %238 : vector<8x128xf32> to vector<1x8x128xf32>
    tpu.vector_store %arg9[%c0_66, %c0_67, %c0_68], %241 {strides = array<i32>} : memref<4x8x128xf32, #tpu.memory_space<vmem>>, vector<1x8x128xf32>,
    %c4_i32_69 = arith.constant 4 : i32
    %242 = arith.muli %arg0, %c4_i32_69 : i32
    %c1_i32_70 = arith.constant 1 : i32
    %243 = arith.addi %242, %c1_i32_70 : i32
    %c4_i32_71 = arith.constant 4 : i32
    %c0_i32_72 = arith.constant 0 : i32
    %244 = arith.cmpi eq, %c4_i32_71, %c0_i32_72 : i32
    %c1_i32_73 = arith.constant 1 : i32
    %245 = arith.select %244, %c1_i32_73, %c4_i32_71 : i32
    %246 = arith.remsi %243, %245 : i32
    %c0_i32_74 = arith.constant 0 : i32
    %247 = arith.cmpi ne, %246, %c0_i32_74 : i32
    %c0_i32_75 = arith.constant 0 : i32
    %248 = arith.cmpi slt, %246, %c0_i32_75 : i32
    %c0_i32_76 = arith.constant 0 : i32
    %249 = arith.cmpi slt, %245, %c0_i32_76 : i32
    %250 = arith.xori %248, %249 : i1
    %251 = arith.andi %250, %247 : i1
    %252 = arith.addi %246, %245 : i32
    %253 = arith.select %251, %252, %246 : i32
    %254 = vector.extract_strided_slice %221 {offsets = [8, 0], sizes = [8, 128], strides = [1, 1]} : vector<32x128xf32> to vector<8x128xf32>
    %255 = arith.index_cast %253 : i32 to index
    %c0_77 = arith.constant 0 : index
    %c0_78 = arith.constant 0 : index
    %256 = vector.load %arg8[%255, %c0_77, %c0_78] : memref<4x8x128xf32, #tpu.memory_space<vmem>>, vector<1x8x128xf32>
    %257 = vector.shape_cast %256 : vector<1x8x128xf32> to vector<8x128xf32>
    %258 = arith.mulf %254, %257 : vector<8x128xf32>
    %c1_79 = arith.constant 1 : index
    %c0_80 = arith.constant 0 : index
    %c0_81 = arith.constant 0 : index
    %259 = vector.load %arg9[%c1_79, %c0_80, %c0_81] : memref<4x8x128xf32, #tpu.memory_space<vmem>>, vector<1x8x128xf32>
    %260 = vector.shape_cast %259 : vector<1x8x128xf32> to vector<8x128xf32>
    %261 = vector.shape_cast %258 : vector<8x128xf32> to vector<1x8x128xf32>
    tpu.vector_store %arg9[%c1_79, %c0_80, %c0_81], %261 {strides = array<i32>} : memref<4x8x128xf32, #tpu.memory_space<vmem>>, vector<1x8x128xf32>,
    %c4_i32_82 = arith.constant 4 : i32
    %262 = arith.muli %arg0, %c4_i32_82 : i32
    %c2_i32 = arith.constant 2 : i32
    %263 = arith.addi %262, %c2_i32 : i32
    %c4_i32_83 = arith.constant 4 : i32
    %c0_i32_84 = arith.constant 0 : i32
    %264 = arith.cmpi eq, %c4_i32_83, %c0_i32_84 : i32
    %c1_i32_85 = arith.constant 1 : i32
    %265 = arith.select %264, %c1_i32_85, %c4_i32_83 : i32
    %266 = arith.remsi %263, %265 : i32
    %c0_i32_86 = arith.constant 0 : i32
    %267 = arith.cmpi ne, %266, %c0_i32_86 : i32
    %c0_i32_87 = arith.constant 0 : i32
    %268 = arith.cmpi slt, %266, %c0_i32_87 : i32
    %c0_i32_88 = arith.constant 0 : i32
    %269 = arith.cmpi slt, %265, %c0_i32_88 : i32
    %270 = arith.xori %268, %269 : i1
    %271 = arith.andi %270, %267 : i1
    %272 = arith.addi %266, %265 : i32
    %273 = arith.select %271, %272, %266 : i32
    %274 = vector.extract_strided_slice %221 {offsets = [16, 0], sizes = [8, 128], strides = [1, 1]} : vector<32x128xf32> to vector<8x128xf32>
    %275 = arith.index_cast %273 : i32 to index
    %c0_89 = arith.constant 0 : index
    %c0_90 = arith.constant 0 : index
    %276 = vector.load %arg8[%275, %c0_89, %c0_90] : memref<4x8x128xf32, #tpu.memory_space<vmem>>, vector<1x8x128xf32>
    %277 = vector.shape_cast %276 : vector<1x8x128xf32> to vector<8x128xf32>
    %278 = arith.mulf %274, %277 : vector<8x128xf32>
    %c2_91 = arith.constant 2 : index
    %c0_92 = arith.constant 0 : index
    %c0_93 = arith.constant 0 : index
    %279 = vector.load %arg9[%c2_91, %c0_92, %c0_93] : memref<4x8x128xf32, #tpu.memory_space<vmem>>, vector<1x8x128xf32>
    %280 = vector.shape_cast %279 : vector<1x8x128xf32> to vector<8x128xf32>
    %281 = vector.shape_cast %278 : vector<8x128xf32> to vector<1x8x128xf32>
    tpu.vector_store %arg9[%c2_91, %c0_92, %c0_93], %281 {strides = array<i32>} : memref<4x8x128xf32, #tpu.memory_space<vmem>>, vector<1x8x128xf32>,
    %c4_i32_94 = arith.constant 4 : i32
    %282 = arith.muli %arg0, %c4_i32_94 : i32
    %c3_i32 = arith.constant 3 : i32
    %283 = arith.addi %282, %c3_i32 : i32
    %c4_i32_95 = arith.constant 4 : i32
    %c0_i32_96 = arith.constant 0 : i32
    %284 = arith.cmpi eq, %c4_i32_95, %c0_i32_96 : i32
    %c1_i32_97 = arith.constant 1 : i32
    %285 = arith.select %284, %c1_i32_97, %c4_i32_95 : i32
    %286 = arith.remsi %283, %285 : i32
    %c0_i32_98 = arith.constant 0 : i32
    %287 = arith.cmpi ne, %286, %c0_i32_98 : i32
    %c0_i32_99 = arith.constant 0 : i32
    %288 = arith.cmpi slt, %286, %c0_i32_99 : i32
    %c0_i32_100 = arith.constant 0 : i32
    %289 = arith.cmpi slt, %285, %c0_i32_100 : i32
    %290 = arith.xori %288, %289 : i1
    %291 = arith.andi %290, %287 : i1
    %292 = arith.addi %286, %285 : i32
    %293 = arith.select %291, %292, %286 : i32
    %294 = vector.extract_strided_slice %221 {offsets = [24, 0], sizes = [8, 128], strides = [1, 1]} : vector<32x128xf32> to vector<8x128xf32>
    %295 = arith.index_cast %293 : i32 to index
    %c0_101 = arith.constant 0 : index
    %c0_102 = arith.constant 0 : index
    %296 = vector.load %arg8[%295, %c0_101, %c0_102] : memref<4x8x128xf32, #tpu.memory_space<vmem>>, vector<1x8x128xf32>
    %297 = vector.shape_cast %296 : vector<1x8x128xf32> to vector<8x128xf32>
    %298 = arith.mulf %294, %297 : vector<8x128xf32>
    %c3_103 = arith.constant 3 : index
    %c0_104 = arith.constant 0 : index
    %c0_105 = arith.constant 0 : index
    %299 = vector.load %arg9[%c3_103, %c0_104, %c0_105] : memref<4x8x128xf32, #tpu.memory_space<vmem>>, vector<1x8x128xf32>
    %300 = vector.shape_cast %299 : vector<1x8x128xf32> to vector<8x128xf32>
    %301 = vector.shape_cast %298 : vector<8x128xf32> to vector<1x8x128xf32>
    tpu.vector_store %arg9[%c3_103, %c0_104, %c0_105], %301 {strides = array<i32>} : memref<4x8x128xf32, #tpu.memory_space<vmem>>, vector<1x8x128xf32>,
    return
  }
  func.func @transform_0(%arg0: i32) -> (i32, i32, i32) {
    %c0_i32 = arith.constant 0 : i32
    %c0_i32_0 = arith.constant 0 : i32
    %c0_i32_1 = arith.constant 0 : i32
    return %arg0, %c0_i32, %c0_i32_0 : i32, i32, i32
  }
  func.func @transform_1(%arg0: i32) -> (i32, i32, i32) {
    %c0_i32 = arith.constant 0 : i32
    %c0_i32_0 = arith.constant 0 : i32
    %c0_i32_1 = arith.constant 0 : i32
    %c0_i32_2 = arith.constant 0 : i32
    return %c0_i32, %c0_i32_0, %c0_i32_1 : i32, i32, i32
  }
  func.func @transform_2(%arg0: i32) -> (i32, i32) {
    %c0_i32 = arith.constant 0 : i32
    %c0_i32_0 = arith.constant 0 : i32
    %c0_i32_1 = arith.constant 0 : i32
    return %c0_i32, %c0_i32_0 : i32, i32
  }
  func.func @transform_3(%arg0: i32) -> (i32, i32, i32) {
    %c0_i32 = arith.constant 0 : i32
    %c0_i32_0 = arith.constant 0 : i32
    %c0_i32_1 = arith.constant 0 : i32
    %c0_i32_2 = arith.constant 0 : i32
    return %c0_i32, %c0_i32_0, %c0_i32_1 : i32, i32, i32
  }
  func.func @transform_4(%arg0: i32) -> (i32, i32) {
    %c0_i32 = arith.constant 0 : i32
    %c0_i32_0 = arith.constant 0 : i32
    %c0_i32_1 = arith.constant 0 : i32
    return %c0_i32, %c0_i32_0 : i32, i32
  }
  func.func @transform_5(%arg0: i32) -> (i32, i32) {
    %c0_i32 = arith.constant 0 : i32
    %c0_i32_0 = arith.constant 0 : i32
    %c0_i32_1 = arith.constant 0 : i32
    return %c0_i32, %c0_i32_0 : i32, i32
  }
  func.func @transform_6(%arg0: i32) -> (i32, i32) {
    %c0_i32 = arith.constant 0 : i32
    %c0_i32_0 = arith.constant 0 : i32
    %c0_i32_1 = arith.constant 0 : i32
    return %c0_i32, %c0_i32_0 : i32, i32
  }
  func.func @transform_7(%arg0: i32) -> (i32, i32, i32) {
    %c0_i32 = arith.constant 0 : i32
    %c0_i32_0 = arith.constant 0 : i32
    %c0_i32_1 = arith.constant 0 : i32
    %c0_i32_2 = arith.constant 0 : i32
    return %c0_i32, %c0_i32_0, %c0_i32_1 : i32, i32, i32
  }
  func.func @transform_8(%arg0: i32) -> (i32, i32, i32) {
    %c0_i32 = arith.constant 0 : i32
    %c0_i32_0 = arith.constant 0 : i32
    %c0_i32_1 = arith.constant 0 : i32
    return %arg0, %c0_i32, %c0_i32_0 : i32, i32, i32
  }
}

module attributes {stable_mosaic.version = 11 : i64} {
  func.func @kernel(%arg0: i32, %arg1: memref<4x16x16xf32, #tpu.memory_space<vmem>>, %arg2: memref<2x32x16xbf16, #tpu.memory_space<vmem>>, %arg3: memref<32x32xbf16, #tpu.memory_space<vmem>>, %arg4: memref<2x16x16xbf16, #tpu.memory_space<vmem>>, %arg5: memref<64x128xbf16, #tpu.memory_space<vmem>>, %arg6: memref<16x16xf32, #tpu.memory_space<vmem>>, %arg7: memref<16x16xf32, #tpu.memory_space<vmem>>, %arg8: memref<4x8x128xf32, #tpu.memory_space<vmem>>, %arg9: memref<4x8x128xf32, #tpu.memory_space<vmem>>) attributes {dimension_semantics = [#tpu.dimension_semantics<parallel>], iteration_bounds = array<i64: 2>, scalar_prefetch = 0 : i64, scratch_operands = 0 : i64, tpu.core_type = #tpu.core_type<tc>, window_params = [{transform_indices = @transform_0, window_bounds = array<i64: 4, 16, 16>}, {pipeline_mode = #tpu.pipeline_mode<synchronous>, transform_indices = @transform_1, window_bounds = array<i64: 2, 32, 16>}, {pipeline_mode = #tpu.pipeline_mode<synchronous>, transform_indices = @transform_2, window_bounds = array<i64: 32, 32>}, {pipeline_mode = #tpu.pipeline_mode<synchronous>, transform_indices = @transform_3, window_bounds = array<i64: 2, 16, 16>}, {pipeline_mode = #tpu.pipeline_mode<synchronous>, transform_indices = @transform_4, window_bounds = array<i64: 64, 128>}, {pipeline_mode = #tpu.pipeline_mode<synchronous>, transform_indices = @transform_5, window_bounds = array<i64: 16, 16>}, {pipeline_mode = #tpu.pipeline_mode<synchronous>, transform_indices = @transform_6, window_bounds = array<i64: 16, 16>}, {pipeline_mode = #tpu.pipeline_mode<synchronous>, transform_indices = @transform_7, window_bounds = array<i64: 4, 8, 128>}, {transform_indices = @transform_8, window_bounds = array<i64: 4, 8, 128>}]} {
    %c0 = arith.constant 0 : index
    %c0_0 = arith.constant 0 : index
    %c0_1 = arith.constant 0 : index
    %0 = vector.load %arg2[%c0, %c0_0, %c0_1] : memref<2x32x16xbf16, #tpu.memory_space<vmem>>, vector<1x32x16xbf16>
    %1 = vector.shape_cast %0 : vector<1x32x16xbf16> to vector<32x16xbf16>
    %c1 = arith.constant 1 : index
    %c0_2 = arith.constant 0 : index
    %c0_3 = arith.constant 0 : index
    %2 = vector.load %arg2[%c1, %c0_2, %c0_3] : memref<2x32x16xbf16, #tpu.memory_space<vmem>>, vector<1x32x16xbf16>
    %3 = vector.shape_cast %2 : vector<1x32x16xbf16> to vector<32x16xbf16>
    %c0_4 = arith.constant 0 : index
    %c0_5 = arith.constant 0 : index
    %c0_6 = arith.constant 0 : index
    %4 = vector.load %arg4[%c0_4, %c0_5, %c0_6] : memref<2x16x16xbf16, #tpu.memory_space<vmem>>, vector<1x16x16xbf16>
    %5 = vector.shape_cast %4 : vector<1x16x16xbf16> to vector<16x16xbf16>
    %c1_7 = arith.constant 1 : index
    %c0_8 = arith.constant 0 : index
    %c0_9 = arith.constant 0 : index
    %6 = vector.load %arg4[%c1_7, %c0_8, %c0_9] : memref<2x16x16xbf16, #tpu.memory_space<vmem>>, vector<1x16x16xbf16>
    %7 = vector.shape_cast %6 : vector<1x16x16xbf16> to vector<16x16xbf16>
    %c0_10 = arith.constant 0 : index
    %c0_11 = arith.constant 0 : index
    %8 = vector.load %arg6[%c0_10, %c0_11] : memref<16x16xf32, #tpu.memory_space<vmem>>, vector<16x16xf32>
    %c0_12 = arith.constant 0 : index
    %c0_13 = arith.constant 0 : index
    %9 = vector.load %arg7[%c0_12, %c0_13] : memref<16x16xf32, #tpu.memory_space<vmem>>, vector<16x16xf32>
    %c0_14 = arith.constant 0 : index
    %c0_15 = arith.constant 0 : index
    %c0_16 = arith.constant 0 : index
    %10 = vector.load %arg1[%c0_14, %c0_15, %c0_16] : memref<4x16x16xf32, #tpu.memory_space<vmem>>, vector<1x16x16xf32>
    %11 = vector.shape_cast %10 : vector<1x16x16xf32> to vector<16x16xf32>
    %12 = arith.truncf %11 : vector<16x16xf32> to vector<16x16xbf16>
    %13 = arith.extf %12 : vector<16x16xbf16> to vector<16x16xf32>
    %14 = arith.subf %11, %13 : vector<16x16xf32>
    %15 = arith.truncf %14 : vector<16x16xf32> to vector<16x16xbf16>
    %cst = arith.constant dense<0.000000e+00> : vector<32x16xf32>
    %16 = tpu.matmul %1, %12, %cst {dimension_numbers = #tpu.dot_dimension_numbers<[1], [0], [0], [1], [0, 0, 1, 1], [], []>} : vector<32x16xbf16>, vector<16x16xbf16>, vector<32x16xf32> -> vector<32x16xf32>
    %cst_17 = arith.constant dense<0.000000e+00> : vector<32x16xf32>
    %17 = tpu.matmul %3, %12, %cst_17 {dimension_numbers = #tpu.dot_dimension_numbers<[1], [0], [0], [1], [0, 0, 1, 1], [], []>} : vector<32x16xbf16>, vector<16x16xbf16>, vector<32x16xf32> -> vector<32x16xf32>
    %18 = arith.addf %16, %17 : vector<32x16xf32>
    %cst_18 = arith.constant dense<0.000000e+00> : vector<32x16xf32>
    %19 = tpu.matmul %1, %15, %cst_18 {dimension_numbers = #tpu.dot_dimension_numbers<[1], [0], [0], [1], [0, 0, 1, 1], [], []>} : vector<32x16xbf16>, vector<16x16xbf16>, vector<32x16xf32> -> vector<32x16xf32>
    %20 = arith.addf %18, %19 : vector<32x16xf32>
    %21 = arith.truncf %20 : vector<32x16xf32> to vector<32x16xbf16>
    %22 = arith.extf %21 : vector<32x16xbf16> to vector<32x16xf32>
    %23 = arith.subf %20, %22 : vector<32x16xf32>
    %24 = arith.truncf %23 : vector<32x16xf32> to vector<32x16xbf16>
    %c1_19 = arith.constant 1 : index
    %c0_20 = arith.constant 0 : index
    %c0_21 = arith.constant 0 : index
    %25 = vector.load %arg1[%c1_19, %c0_20, %c0_21] : memref<4x16x16xf32, #tpu.memory_space<vmem>>, vector<1x16x16xf32>
    %26 = vector.shape_cast %25 : vector<1x16x16xf32> to vector<16x16xf32>
    %27 = arith.truncf %26 : vector<16x16xf32> to vector<16x16xbf16>
    %28 = arith.extf %27 : vector<16x16xbf16> to vector<16x16xf32>
    %29 = arith.subf %26, %28 : vector<16x16xf32>
    %30 = arith.truncf %29 : vector<16x16xf32> to vector<16x16xbf16>
    %cst_22 = arith.constant dense<0.000000e+00> : vector<32x16xf32>
    %31 = tpu.matmul %1, %27, %cst_22 {dimension_numbers = #tpu.dot_dimension_numbers<[1], [0], [0], [1], [0, 0, 1, 1], [], []>} : vector<32x16xbf16>, vector<16x16xbf16>, vector<32x16xf32> -> vector<32x16xf32>
    %cst_23 = arith.constant dense<0.000000e+00> : vector<32x16xf32>
    %32 = tpu.matmul %3, %27, %cst_23 {dimension_numbers = #tpu.dot_dimension_numbers<[1], [0], [0], [1], [0, 0, 1, 1], [], []>} : vector<32x16xbf16>, vector<16x16xbf16>, vector<32x16xf32> -> vector<32x16xf32>
    %33 = arith.addf %31, %32 : vector<32x16xf32>
    %cst_24 = arith.constant dense<0.000000e+00> : vector<32x16xf32>
    %34 = tpu.matmul %1, %30, %cst_24 {dimension_numbers = #tpu.dot_dimension_numbers<[1], [0], [0], [1], [0, 0, 1, 1], [], []>} : vector<32x16xbf16>, vector<16x16xbf16>, vector<32x16xf32> -> vector<32x16xf32>
    %35 = arith.addf %33, %34 : vector<32x16xf32>
    %36 = arith.truncf %35 : vector<32x16xf32> to vector<32x16xbf16>
    %37 = arith.extf %36 : vector<32x16xbf16> to vector<32x16xf32>
    %38 = arith.subf %35, %37 : vector<32x16xf32>
    %39 = arith.truncf %38 : vector<32x16xf32> to vector<32x16xbf16>
    %c2 = arith.constant 2 : index
    %c0_25 = arith.constant 0 : index
    %c0_26 = arith.constant 0 : index
    %40 = vector.load %arg1[%c2, %c0_25, %c0_26] : memref<4x16x16xf32, #tpu.memory_space<vmem>>, vector<1x16x16xf32>
    %41 = vector.shape_cast %40 : vector<1x16x16xf32> to vector<16x16xf32>
    %42 = arith.truncf %41 : vector<16x16xf32> to vector<16x16xbf16>
    %43 = arith.extf %42 : vector<16x16xbf16> to vector<16x16xf32>
    %44 = arith.subf %41, %43 : vector<16x16xf32>
    %45 = arith.truncf %44 : vector<16x16xf32> to vector<16x16xbf16>
    %cst_27 = arith.constant dense<0.000000e+00> : vector<32x16xf32>
    %46 = tpu.matmul %1, %42, %cst_27 {dimension_numbers = #tpu.dot_dimension_numbers<[1], [0], [0], [1], [0, 0, 1, 1], [], []>} : vector<32x16xbf16>, vector<16x16xbf16>, vector<32x16xf32> -> vector<32x16xf32>
    %cst_28 = arith.constant dense<0.000000e+00> : vector<32x16xf32>
    %47 = tpu.matmul %3, %42, %cst_28 {dimension_numbers = #tpu.dot_dimension_numbers<[1], [0], [0], [1], [0, 0, 1, 1], [], []>} : vector<32x16xbf16>, vector<16x16xbf16>, vector<32x16xf32> -> vector<32x16xf32>
    %48 = arith.addf %46, %47 : vector<32x16xf32>
    %cst_29 = arith.constant dense<0.000000e+00> : vector<32x16xf32>
    %49 = tpu.matmul %1, %45, %cst_29 {dimension_numbers = #tpu.dot_dimension_numbers<[1], [0], [0], [1], [0, 0, 1, 1], [], []>} : vector<32x16xbf16>, vector<16x16xbf16>, vector<32x16xf32> -> vector<32x16xf32>
    %50 = arith.addf %48, %49 : vector<32x16xf32>
    %51 = arith.truncf %50 : vector<32x16xf32> to vector<32x16xbf16>
    %52 = arith.extf %51 : vector<32x16xbf16> to vector<32x16xf32>
    %53 = arith.subf %50, %52 : vector<32x16xf32>
    %54 = arith.truncf %53 : vector<32x16xf32> to vector<32x16xbf16>
    %c3 = arith.constant 3 : index
    %c0_30 = arith.constant 0 : index
    %c0_31 = arith.constant 0 : index
    %55 = vector.load %arg1[%c3, %c0_30, %c0_31] : memref<4x16x16xf32, #tpu.memory_space<vmem>>, vector<1x16x16xf32>
    %56 = vector.shape_cast %55 : vector<1x16x16xf32> to vector<16x16xf32>
    %57 = arith.truncf %56 : vector<16x16xf32> to vector<16x16xbf16>
    %58 = arith.extf %57 : vector<16x16xbf16> to vector<16x16xf32>
    %59 = arith.subf %56, %58 : vector<16x16xf32>
    %60 = arith.truncf %59 : vector<16x16xf32> to vector<16x16xbf16>
    %cst_32 = arith.constant dense<0.000000e+00> : vector<32x16xf32>
    %61 = tpu.matmul %1, %57, %cst_32 {dimension_numbers = #tpu.dot_dimension_numbers<[1], [0], [0], [1], [0, 0, 1, 1], [], []>} : vector<32x16xbf16>, vector<16x16xbf16>, vector<32x16xf32> -> vector<32x16xf32>
    %cst_33 = arith.constant dense<0.000000e+00> : vector<32x16xf32>
    %62 = tpu.matmul %3, %57, %cst_33 {dimension_numbers = #tpu.dot_dimension_numbers<[1], [0], [0], [1], [0, 0, 1, 1], [], []>} : vector<32x16xbf16>, vector<16x16xbf16>, vector<32x16xf32> -> vector<32x16xf32>
    %63 = arith.addf %61, %62 : vector<32x16xf32>
    %cst_34 = arith.constant dense<0.000000e+00> : vector<32x16xf32>
    %64 = tpu.matmul %1, %60, %cst_34 {dimension_numbers = #tpu.dot_dimension_numbers<[1], [0], [0], [1], [0, 0, 1, 1], [], []>} : vector<32x16xbf16>, vector<16x16xbf16>, vector<32x16xf32> -> vector<32x16xf32>
    %65 = arith.addf %63, %64 : vector<32x16xf32>
    %66 = arith.truncf %65 : vector<32x16xf32> to vector<32x16xbf16>
    %67 = arith.extf %66 : vector<32x16xbf16> to vector<32x16xf32>
    %68 = arith.subf %65, %67 : vector<32x16xf32>
    %69 = arith.truncf %68 : vector<32x16xf32> to vector<32x16xbf16>
    %70 = tpu.concatenate %21, %36, %51, %66 in 0 : vector<32x16xbf16>, vector<32x16xbf16>, vector<32x16xbf16>, vector<32x16xbf16> -> vector<128x16xbf16>
    %71 = tpu.concatenate %24, %39, %54, %69 in 0 : vector<32x16xbf16>, vector<32x16xbf16>, vector<32x16xbf16>, vector<32x16xbf16> -> vector<128x16xbf16>
    %c0_35 = arith.constant 0 : index
    %c0_36 = arith.constant 0 : index
    %72 = vector.load %arg3[%c0_35, %c0_36] : memref<32x32xbf16, #tpu.memory_space<vmem>>, vector<16x32xbf16>
    %cst_37 = arith.constant dense<0.000000e+00> : vector<128x32xf32>
    %73 = tpu.matmul %70, %72, %cst_37 {dimension_numbers = #tpu.dot_dimension_numbers<[1], [0], [0], [1], [0, 0, 1, 1], [], []>} : vector<128x16xbf16>, vector<16x32xbf16>, vector<128x32xf32> -> vector<128x32xf32>
    %74 = tpu.concatenate %71, %70 in 1 : vector<128x16xbf16>, vector<128x16xbf16> -> vector<128x32xbf16>
    %c0_38 = arith.constant 0 : index
    %c0_39 = arith.constant 0 : index
    %75 = vector.load %arg3[%c0_38, %c0_39] : memref<32x32xbf16, #tpu.memory_space<vmem>>, vector<32x32xbf16>
    %cst_40 = arith.constant dense<0.000000e+00> : vector<128x32xf32>
    %76 = tpu.matmul %74, %75, %cst_40 {dimension_numbers = #tpu.dot_dimension_numbers<[1], [0], [0], [1], [0, 0, 1, 1], [], []>} : vector<128x32xbf16>, vector<32x32xbf16>, vector<128x32xf32> -> vector<128x32xf32>
    %77 = arith.addf %73, %76 : vector<128x32xf32>
    %78 = vector.extract_strided_slice %77 {offsets = [0, 0], sizes = [32, 32], strides = [1, 1]} : vector<128x32xf32> to vector<32x32xf32>
    %79 = vector.extract_strided_slice %78 {offsets = [0, 0], sizes = [16, 16], strides = [1, 1]} : vector<32x32xf32> to vector<16x16xf32>
    %80 = vector.extract_strided_slice %78 {offsets = [16, 16], sizes = [16, 16], strides = [1, 1]} : vector<32x32xf32> to vector<16x16xf32>
    %81 = arith.addf %79, %80 : vector<16x16xf32>
    %82 = vector.extract_strided_slice %78 {offsets = [16, 0], sizes = [16, 16], strides = [1, 1]} : vector<32x32xf32> to vector<16x16xf32>
    %83 = vector.extract_strided_slice %78 {offsets = [0, 16], sizes = [16, 16], strides = [1, 1]} : vector<32x32xf32> to vector<16x16xf32>
    %84 = arith.subf %82, %83 : vector<16x16xf32>
    %85 = arith.mulf %8, %81 : vector<16x16xf32>
    %86 = arith.mulf %9, %84 : vector<16x16xf32>
    %87 = arith.subf %85, %86 : vector<16x16xf32>
    %88 = arith.mulf %8, %84 : vector<16x16xf32>
    %89 = arith.mulf %9, %81 : vector<16x16xf32>
    %90 = arith.addf %88, %89 : vector<16x16xf32>
    %91 = tpu.concatenate %87, %90 in 1 : vector<16x16xf32>, vector<16x16xf32> -> vector<16x32xf32>
    %92 = arith.truncf %91 : vector<16x32xf32> to vector<16x32xbf16>
    %93 = arith.extf %92 : vector<16x32xbf16> to vector<16x32xf32>
    %94 = arith.subf %91, %93 : vector<16x32xf32>
    %95 = arith.truncf %94 : vector<16x32xf32> to vector<16x32xbf16>
    %cst_41 = arith.constant dense<0.000000e+00> : vector<16x32xf32>
    %96 = tpu.matmul %5, %92, %cst_41 {dimension_numbers = #tpu.dot_dimension_numbers<[1], [0], [0], [1], [0, 0, 1, 1], [], []>} : vector<16x16xbf16>, vector<16x32xbf16>, vector<16x32xf32> -> vector<16x32xf32>
    %cst_42 = arith.constant dense<0.000000e+00> : vector<16x32xf32>
    %97 = tpu.matmul %7, %92, %cst_42 {dimension_numbers = #tpu.dot_dimension_numbers<[1], [0], [0], [1], [0, 0, 1, 1], [], []>} : vector<16x16xbf16>, vector<16x32xbf16>, vector<16x32xf32> -> vector<16x32xf32>
    %98 = arith.addf %96, %97 : vector<16x32xf32>
    %cst_43 = arith.constant dense<0.000000e+00> : vector<16x32xf32>
    %99 = tpu.matmul %5, %95, %cst_43 {dimension_numbers = #tpu.dot_dimension_numbers<[1], [0], [0], [1], [0, 0, 1, 1], [], []>} : vector<16x16xbf16>, vector<16x32xbf16>, vector<16x32xf32> -> vector<16x32xf32>
    %100 = arith.addf %98, %99 : vector<16x32xf32>
    %101 = vector.extract_strided_slice %100 {offsets = [0, 0], sizes = [8, 16], strides = [1, 1]} : vector<16x32xf32> to vector<8x16xf32>
    %102 = vector.extract_strided_slice %100 {offsets = [8, 16], sizes = [8, 16], strides = [1, 1]} : vector<16x32xf32> to vector<8x16xf32>
    %103 = arith.subf %101, %102 : vector<8x16xf32>
    %104 = vector.extract_strided_slice %100 {offsets = [0, 16], sizes = [8, 16], strides = [1, 1]} : vector<16x32xf32> to vector<8x16xf32>
    %105 = vector.extract_strided_slice %100 {offsets = [8, 0], sizes = [8, 16], strides = [1, 1]} : vector<16x32xf32> to vector<8x16xf32>
    %106 = arith.addf %104, %105 : vector<8x16xf32>
    %107 = tpu.concatenate %103, %106 in 1 : vector<8x16xf32>, vector<8x16xf32> -> vector<8x32xf32>
    %108 = arith.truncf %107 : vector<8x32xf32> to vector<8x32xbf16>
    %109 = arith.extf %108 : vector<8x32xbf16> to vector<8x32xf32>
    %110 = arith.subf %107, %109 : vector<8x32xf32>
    %111 = arith.truncf %110 : vector<8x32xf32> to vector<8x32xbf16>
    %112 = vector.extract_strided_slice %77 {offsets = [32, 0], sizes = [32, 32], strides = [1, 1]} : vector<128x32xf32> to vector<32x32xf32>
    %113 = vector.extract_strided_slice %112 {offsets = [0, 0], sizes = [16, 16], strides = [1, 1]} : vector<32x32xf32> to vector<16x16xf32>
    %114 = vector.extract_strided_slice %112 {offsets = [16, 16], sizes = [16, 16], strides = [1, 1]} : vector<32x32xf32> to vector<16x16xf32>
    %115 = arith.addf %113, %114 : vector<16x16xf32>
    %116 = vector.extract_strided_slice %112 {offsets = [16, 0], sizes = [16, 16], strides = [1, 1]} : vector<32x32xf32> to vector<16x16xf32>
    %117 = vector.extract_strided_slice %112 {offsets = [0, 16], sizes = [16, 16], strides = [1, 1]} : vector<32x32xf32> to vector<16x16xf32>
    %118 = arith.subf %116, %117 : vector<16x16xf32>
    %119 = arith.mulf %8, %115 : vector<16x16xf32>
    %120 = arith.mulf %9, %118 : vector<16x16xf32>
    %121 = arith.subf %119, %120 : vector<16x16xf32>
    %122 = arith.mulf %8, %118 : vector<16x16xf32>
    %123 = arith.mulf %9, %115 : vector<16x16xf32>
    %124 = arith.addf %122, %123 : vector<16x16xf32>
    %125 = tpu.concatenate %121, %124 in 1 : vector<16x16xf32>, vector<16x16xf32> -> vector<16x32xf32>
    %126 = arith.truncf %125 : vector<16x32xf32> to vector<16x32xbf16>
    %127 = arith.extf %126 : vector<16x32xbf16> to vector<16x32xf32>
    %128 = arith.subf %125, %127 : vector<16x32xf32>
    %129 = arith.truncf %128 : vector<16x32xf32> to vector<16x32xbf16>
    %cst_44 = arith.constant dense<0.000000e+00> : vector<16x32xf32>
    %130 = tpu.matmul %5, %126, %cst_44 {dimension_numbers = #tpu.dot_dimension_numbers<[1], [0], [0], [1], [0, 0, 1, 1], [], []>} : vector<16x16xbf16>, vector<16x32xbf16>, vector<16x32xf32> -> vector<16x32xf32>
    %cst_45 = arith.constant dense<0.000000e+00> : vector<16x32xf32>
    %131 = tpu.matmul %7, %126, %cst_45 {dimension_numbers = #tpu.dot_dimension_numbers<[1], [0], [0], [1], [0, 0, 1, 1], [], []>} : vector<16x16xbf16>, vector<16x32xbf16>, vector<16x32xf32> -> vector<16x32xf32>
    %132 = arith.addf %130, %131 : vector<16x32xf32>
    %cst_46 = arith.constant dense<0.000000e+00> : vector<16x32xf32>
    %133 = tpu.matmul %5, %129, %cst_46 {dimension_numbers = #tpu.dot_dimension_numbers<[1], [0], [0], [1], [0, 0, 1, 1], [], []>} : vector<16x16xbf16>, vector<16x32xbf16>, vector<16x32xf32> -> vector<16x32xf32>
    %134 = arith.addf %132, %133 : vector<16x32xf32>
    %135 = vector.extract_strided_slice %134 {offsets = [0, 0], sizes = [8, 16], strides = [1, 1]} : vector<16x32xf32> to vector<8x16xf32>
    %136 = vector.extract_strided_slice %134 {offsets = [8, 16], sizes = [8, 16], strides = [1, 1]} : vector<16x32xf32> to vector<8x16xf32>
    %137 = arith.subf %135, %136 : vector<8x16xf32>
    %138 = vector.extract_strided_slice %134 {offsets = [0, 16], sizes = [8, 16], strides = [1, 1]} : vector<16x32xf32> to vector<8x16xf32>
    %139 = vector.extract_strided_slice %134 {offsets = [8, 0], sizes = [8, 16], strides = [1, 1]} : vector<16x32xf32> to vector<8x16xf32>
    %140 = arith.addf %138, %139 : vector<8x16xf32>
    %141 = tpu.concatenate %137, %140 in 1 : vector<8x16xf32>, vector<8x16xf32> -> vector<8x32xf32>
    %142 = arith.truncf %141 : vector<8x32xf32> to vector<8x32xbf16>
    %143 = arith.extf %142 : vector<8x32xbf16> to vector<8x32xf32>
    %144 = arith.subf %141, %143 : vector<8x32xf32>
    %145 = arith.truncf %144 : vector<8x32xf32> to vector<8x32xbf16>
    %146 = vector.extract_strided_slice %77 {offsets = [64, 0], sizes = [32, 32], strides = [1, 1]} : vector<128x32xf32> to vector<32x32xf32>
    %147 = vector.extract_strided_slice %146 {offsets = [0, 0], sizes = [16, 16], strides = [1, 1]} : vector<32x32xf32> to vector<16x16xf32>
    %148 = vector.extract_strided_slice %146 {offsets = [16, 16], sizes = [16, 16], strides = [1, 1]} : vector<32x32xf32> to vector<16x16xf32>
    %149 = arith.addf %147, %148 : vector<16x16xf32>
    %150 = vector.extract_strided_slice %146 {offsets = [16, 0], sizes = [16, 16], strides = [1, 1]} : vector<32x32xf32> to vector<16x16xf32>
    %151 = vector.extract_strided_slice %146 {offsets = [0, 16], sizes = [16, 16], strides = [1, 1]} : vector<32x32xf32> to vector<16x16xf32>
    %152 = arith.subf %150, %151 : vector<16x16xf32>
    %153 = arith.mulf %8, %149 : vector<16x16xf32>
    %154 = arith.mulf %9, %152 : vector<16x16xf32>
    %155 = arith.subf %153, %154 : vector<16x16xf32>
    %156 = arith.mulf %8, %152 : vector<16x16xf32>
    %157 = arith.mulf %9, %149 : vector<16x16xf32>
    %158 = arith.addf %156, %157 : vector<16x16xf32>
    %159 = tpu.concatenate %155, %158 in 1 : vector<16x16xf32>, vector<16x16xf32> -> vector<16x32xf32>
    %160 = arith.truncf %159 : vector<16x32xf32> to vector<16x32xbf16>
    %161 = arith.extf %160 : vector<16x32xbf16> to vector<16x32xf32>
    %162 = arith.subf %159, %161 : vector<16x32xf32>
    %163 = arith.truncf %162 : vector<16x32xf32> to vector<16x32xbf16>
    %cst_47 = arith.constant dense<0.000000e+00> : vector<16x32xf32>
    %164 = tpu.matmul %5, %160, %cst_47 {dimension_numbers = #tpu.dot_dimension_numbers<[1], [0], [0], [1], [0, 0, 1, 1], [], []>} : vector<16x16xbf16>, vector<16x32xbf16>, vector<16x32xf32> -> vector<16x32xf32>
    %cst_48 = arith.constant dense<0.000000e+00> : vector<16x32xf32>
    %165 = tpu.matmul %7, %160, %cst_48 {dimension_numbers = #tpu.dot_dimension_numbers<[1], [0], [0], [1], [0, 0, 1, 1], [], []>} : vector<16x16xbf16>, vector<16x32xbf16>, vector<16x32xf32> -> vector<16x32xf32>
    %166 = arith.addf %164, %165 : vector<16x32xf32>
    %cst_49 = arith.constant dense<0.000000e+00> : vector<16x32xf32>
    %167 = tpu.matmul %5, %163, %cst_49 {dimension_numbers = #tpu.dot_dimension_numbers<[1], [0], [0], [1], [0, 0, 1, 1], [], []>} : vector<16x16xbf16>, vector<16x32xbf16>, vector<16x32xf32> -> vector<16x32xf32>
    %168 = arith.addf %166, %167 : vector<16x32xf32>
    %169 = vector.extract_strided_slice %168 {offsets = [0, 0], sizes = [8, 16], strides = [1, 1]} : vector<16x32xf32> to vector<8x16xf32>
    %170 = vector.extract_strided_slice %168 {offsets = [8, 16], sizes = [8, 16], strides = [1, 1]} : vector<16x32xf32> to vector<8x16xf32>
    %171 = arith.subf %169, %170 : vector<8x16xf32>
    %172 = vector.extract_strided_slice %168 {offsets = [0, 16], sizes = [8, 16], strides = [1, 1]} : vector<16x32xf32> to vector<8x16xf32>
    %173 = vector.extract_strided_slice %168 {offsets = [8, 0], sizes = [8, 16], strides = [1, 1]} : vector<16x32xf32> to vector<8x16xf32>
    %174 = arith.addf %172, %173 : vector<8x16xf32>
    %175 = tpu.concatenate %171, %174 in 1 : vector<8x16xf32>, vector<8x16xf32> -> vector<8x32xf32>
    %176 = arith.truncf %175 : vector<8x32xf32> to vector<8x32xbf16>
    %177 = arith.extf %176 : vector<8x32xbf16> to vector<8x32xf32>
    %178 = arith.subf %175, %177 : vector<8x32xf32>
    %179 = arith.truncf %178 : vector<8x32xf32> to vector<8x32xbf16>
    %180 = vector.extract_strided_slice %77 {offsets = [96, 0], sizes = [32, 32], strides = [1, 1]} : vector<128x32xf32> to vector<32x32xf32>
    %181 = vector.extract_strided_slice %180 {offsets = [0, 0], sizes = [16, 16], strides = [1, 1]} : vector<32x32xf32> to vector<16x16xf32>
    %182 = vector.extract_strided_slice %180 {offsets = [16, 16], sizes = [16, 16], strides = [1, 1]} : vector<32x32xf32> to vector<16x16xf32>
    %183 = arith.addf %181, %182 : vector<16x16xf32>
    %184 = vector.extract_strided_slice %180 {offsets = [16, 0], sizes = [16, 16], strides = [1, 1]} : vector<32x32xf32> to vector<16x16xf32>
    %185 = vector.extract_strided_slice %180 {offsets = [0, 16], sizes = [16, 16], strides = [1, 1]} : vector<32x32xf32> to vector<16x16xf32>
    %186 = arith.subf %184, %185 : vector<16x16xf32>
    %187 = arith.mulf %8, %183 : vector<16x16xf32>
    %188 = arith.mulf %9, %186 : vector<16x16xf32>
    %189 = arith.subf %187, %188 : vector<16x16xf32>
    %190 = arith.mulf %8, %186 : vector<16x16xf32>
    %191 = arith.mulf %9, %183 : vector<16x16xf32>
    %192 = arith.addf %190, %191 : vector<16x16xf32>
    %193 = tpu.concatenate %189, %192 in 1 : vector<16x16xf32>, vector<16x16xf32> -> vector<16x32xf32>
    %194 = arith.truncf %193 : vector<16x32xf32> to vector<16x32xbf16>
    %195 = arith.extf %194 : vector<16x32xbf16> to vector<16x32xf32>
    %196 = arith.subf %193, %195 : vector<16x32xf32>
    %197 = arith.truncf %196 : vector<16x32xf32> to vector<16x32xbf16>
    %cst_50 = arith.constant dense<0.000000e+00> : vector<16x32xf32>
    %198 = tpu.matmul %5, %194, %cst_50 {dimension_numbers = #tpu.dot_dimension_numbers<[1], [0], [0], [1], [0, 0, 1, 1], [], []>} : vector<16x16xbf16>, vector<16x32xbf16>, vector<16x32xf32> -> vector<16x32xf32>
    %cst_51 = arith.constant dense<0.000000e+00> : vector<16x32xf32>
    %199 = tpu.matmul %7, %194, %cst_51 {dimension_numbers = #tpu.dot_dimension_numbers<[1], [0], [0], [1], [0, 0, 1, 1], [], []>} : vector<16x16xbf16>, vector<16x32xbf16>, vector<16x32xf32> -> vector<16x32xf32>
    %200 = arith.addf %198, %199 : vector<16x32xf32>
    %cst_52 = arith.constant dense<0.000000e+00> : vector<16x32xf32>
    %201 = tpu.matmul %5, %197, %cst_52 {dimension_numbers = #tpu.dot_dimension_numbers<[1], [0], [0], [1], [0, 0, 1, 1], [], []>} : vector<16x16xbf16>, vector<16x32xbf16>, vector<16x32xf32> -> vector<16x32xf32>
    %202 = arith.addf %200, %201 : vector<16x32xf32>
    %203 = vector.extract_strided_slice %202 {offsets = [0, 0], sizes = [8, 16], strides = [1, 1]} : vector<16x32xf32> to vector<8x16xf32>
    %204 = vector.extract_strided_slice %202 {offsets = [8, 16], sizes = [8, 16], strides = [1, 1]} : vector<16x32xf32> to vector<8x16xf32>
    %205 = arith.subf %203, %204 : vector<8x16xf32>
    %206 = vector.extract_strided_slice %202 {offsets = [0, 16], sizes = [8, 16], strides = [1, 1]} : vector<16x32xf32> to vector<8x16xf32>
    %207 = vector.extract_strided_slice %202 {offsets = [8, 0], sizes = [8, 16], strides = [1, 1]} : vector<16x32xf32> to vector<8x16xf32>
    %208 = arith.addf %206, %207 : vector<8x16xf32>
    %209 = tpu.concatenate %205, %208 in 1 : vector<8x16xf32>, vector<8x16xf32> -> vector<8x32xf32>
    %210 = arith.truncf %209 : vector<8x32xf32> to vector<8x32xbf16>
    %211 = arith.extf %210 : vector<8x32xbf16> to vector<8x32xf32>
    %212 = arith.subf %209, %211 : vector<8x32xf32>
    %213 = arith.truncf %212 : vector<8x32xf32> to vector<8x32xbf16>
    %214 = tpu.concatenate %108, %142, %176, %210 in 0 : vector<8x32xbf16>, vector<8x32xbf16>, vector<8x32xbf16>, vector<8x32xbf16> -> vector<32x32xbf16>
    %215 = tpu.concatenate %111, %145, %179, %213 in 0 : vector<8x32xbf16>, vector<8x32xbf16>, vector<8x32xbf16>, vector<8x32xbf16> -> vector<32x32xbf16>
    %c0_53 = arith.constant 0 : index
    %c0_54 = arith.constant 0 : index
    %216 = vector.load %arg5[%c0_53, %c0_54] : memref<64x128xbf16, #tpu.memory_space<vmem>>, vector<32x128xbf16>
    %cst_55 = arith.constant dense<0.000000e+00> : vector<32x128xf32>
    %217 = tpu.matmul %214, %216, %cst_55 {dimension_numbers = #tpu.dot_dimension_numbers<[1], [0], [0], [1], [0, 0, 1, 1], [], []>} : vector<32x32xbf16>, vector<32x128xbf16>, vector<32x128xf32> -> vector<32x128xf32>
    %218 = tpu.concatenate %215, %214 in 1 : vector<32x32xbf16>, vector<32x32xbf16> -> vector<32x64xbf16>
    %c0_56 = arith.constant 0 : index
    %c0_57 = arith.constant 0 : index
    %219 = vector.load %arg5[%c0_56, %c0_57] : memref<64x128xbf16, #tpu.memory_space<vmem>>, vector<64x128xbf16>
    %cst_58 = arith.constant dense<0.000000e+00> : vector<32x128xf32>
    %220 = tpu.matmul %218, %219, %cst_58 {dimension_numbers = #tpu.dot_dimension_numbers<[1], [0], [0], [1], [0, 0, 1, 1], [], []>} : vector<32x64xbf16>, vector<64x128xbf16>, vector<32x128xf32> -> vector<32x128xf32>
    %221 = arith.addf %217, %220 : vector<32x128xf32>
    %c4_i32 = arith.constant 4 : i32
    %222 = arith.muli %arg0, %c4_i32 : i32
    %c0_i32 = arith.constant 0 : i32
    %223 = arith.addi %222, %c0_i32 : i32
    %c4_i32_59 = arith.constant 4 : i32
    %c0_i32_60 = arith.constant 0 : i32
    %224 = arith.cmpi eq, %c4_i32_59, %c0_i32_60 : i32
    %c1_i32 = arith.constant 1 : i32
    %225 = arith.select %224, %c1_i32, %c4_i32_59 : i32
    %226 = arith.remsi %223, %225 : i32
    %c0_i32_61 = arith.constant 0 : i32
    %227 = arith.cmpi ne, %226, %c0_i32_61 : i32
    %c0_i32_62 = arith.constant 0 : i32
    %228 = arith.cmpi slt, %226, %c0_i32_62 : i32
    %c0_i32_63 = arith.constant 0 : i32
    %229 = arith.cmpi slt, %225, %c0_i32_63 : i32
    %230 = arith.xori %228, %229 : i1
    %231 = arith.andi %230, %227 : i1
    %232 = arith.addi %226, %225 : i32
    %233 = arith.select %231, %232, %226 : i32
    %234 = vector.extract_strided_slice %221 {offsets = [0, 0], sizes = [8, 128], strides = [1, 1]} : vector<32x128xf32> to vector<8x128xf32>
    %235 = arith.index_cast %233 : i32 to index
    %c0_64 = arith.constant 0 : index
    %c0_65 = arith.constant 0 : index
    %236 = vector.load %arg8[%235, %c0_64, %c0_65] : memref<4x8x128xf32, #tpu.memory_space<vmem>>, vector<1x8x128xf32>
    %237 = vector.shape_cast %236 : vector<1x8x128xf32> to vector<8x128xf32>
    %238 = arith.mulf %234, %237 : vector<8x128xf32>
    %c0_66 = arith.constant 0 : index
    %c0_67 = arith.constant 0 : index
    %c0_68 = arith.constant 0 : index
    %239 = vector.load %arg9[%c0_66, %c0_67, %c0_68] : memref<4x8x128xf32, #tpu.memory_space<vmem>>, vector<1x8x128xf32>
    %240 = vector.shape_cast %239 : vector<1x8x128xf32> to vector<8x128xf32>
    %241 = vector.shape_cast %238 : vector<8x128xf32> to vector<1x8x128xf32>
    tpu.vector_store %arg9[%c0_66, %c0_67, %c0_68], %241 {strides = array<i32>} : memref<4x8x128xf32, #tpu.memory_space<vmem>>, vector<1x8x128xf32>,
    %c4_i32_69 = arith.constant 4 : i32
    %242 = arith.muli %arg0, %c4_i32_69 : i32
    %c1_i32_70 = arith.constant 1 : i32
    %243 = arith.addi %242, %c1_i32_70 : i32
    %c4_i32_71 = arith.constant 4 : i32
    %c0_i32_72 = arith.constant 0 : i32
    %244 = arith.cmpi eq, %c4_i32_71, %c0_i32_72 : i32
    %c1_i32_73 = arith.constant 1 : i32
    %245 = arith.select %244, %c1_i32_73, %c4_i32_71 : i32
    %246 = arith.remsi %243, %245 : i32
    %c0_i32_74 = arith.constant 0 : i32
    %247 = arith.cmpi ne, %246, %c0_i32_74 : i32
    %c0_i32_75 = arith.constant 0 : i32
    %248 = arith.cmpi slt, %246, %c0_i32_75 : i32
    %c0_i32_76 = arith.constant 0 : i32
    %249 = arith.cmpi slt, %245, %c0_i32_76 : i32
    %250 = arith.xori %248, %249 : i1
    %251 = arith.andi %250, %247 : i1
    %252 = arith.addi %246, %245 : i32
    %253 = arith.select %251, %252, %246 : i32
    %254 = vector.extract_strided_slice %221 {offsets = [8, 0], sizes = [8, 128], strides = [1, 1]} : vector<32x128xf32> to vector<8x128xf32>
    %255 = arith.index_cast %253 : i32 to index
    %c0_77 = arith.constant 0 : index
    %c0_78 = arith.constant 0 : index
    %256 = vector.load %arg8[%255, %c0_77, %c0_78] : memref<4x8x128xf32, #tpu.memory_space<vmem>>, vector<1x8x128xf32>
    %257 = vector.shape_cast %256 : vector<1x8x128xf32> to vector<8x128xf32>
    %258 = arith.mulf %254, %257 : vector<8x128xf32>
    %c1_79 = arith.constant 1 : index
    %c0_80 = arith.constant 0 : index
    %c0_81 = arith.constant 0 : index
    %259 = vector.load %arg9[%c1_79, %c0_80, %c0_81] : memref<4x8x128xf32, #tpu.memory_space<vmem>>, vector<1x8x128xf32>
    %260 = vector.shape_cast %259 : vector<1x8x128xf32> to vector<8x128xf32>
    %261 = vector.shape_cast %258 : vector<8x128xf32> to vector<1x8x128xf32>
    tpu.vector_store %arg9[%c1_79, %c0_80, %c0_81], %261 {strides = array<i32>} : memref<4x8x128xf32, #tpu.memory_space<vmem>>, vector<1x8x128xf32>,
    %c4_i32_82 = arith.constant 4 : i32
    %262 = arith.muli %arg0, %c4_i32_82 : i32
    %c2_i32 = arith.constant 2 : i32
    %263 = arith.addi %262, %c2_i32 : i32
    %c4_i32_83 = arith.constant 4 : i32
    %c0_i32_84 = arith.constant 0 : i32
    %264 = arith.cmpi eq, %c4_i32_83, %c0_i32_84 : i32
    %c1_i32_85 = arith.constant 1 : i32
    %265 = arith.select %264, %c1_i32_85, %c4_i32_83 : i32
    %266 = arith.remsi %263, %265 : i32
    %c0_i32_86 = arith.constant 0 : i32
    %267 = arith.cmpi ne, %266, %c0_i32_86 : i32
    %c0_i32_87 = arith.constant 0 : i32
    %268 = arith.cmpi slt, %266, %c0_i32_87 : i32
    %c0_i32_88 = arith.constant 0 : i32
    %269 = arith.cmpi slt, %265, %c0_i32_88 : i32
    %270 = arith.xori %268, %269 : i1
    %271 = arith.andi %270, %267 : i1
    %272 = arith.addi %266, %265 : i32
    %273 = arith.select %271, %272, %266 : i32
    %274 = vector.extract_strided_slice %221 {offsets = [16, 0], sizes = [8, 128], strides = [1, 1]} : vector<32x128xf32> to vector<8x128xf32>
    %275 = arith.index_cast %273 : i32 to index
    %c0_89 = arith.constant 0 : index
    %c0_90 = arith.constant 0 : index
    %276 = vector.load %arg8[%275, %c0_89, %c0_90] : memref<4x8x128xf32, #tpu.memory_space<vmem>>, vector<1x8x128xf32>
    %277 = vector.shape_cast %276 : vector<1x8x128xf32> to vector<8x128xf32>
    %278 = arith.mulf %274, %277 : vector<8x128xf32>
    %c2_91 = arith.constant 2 : index
    %c0_92 = arith.constant 0 : index
    %c0_93 = arith.constant 0 : index
    %279 = vector.load %arg9[%c2_91, %c0_92, %c0_93] : memref<4x8x128xf32, #tpu.memory_space<vmem>>, vector<1x8x128xf32>
    %280 = vector.shape_cast %279 : vector<1x8x128xf32> to vector<8x128xf32>
    %281 = vector.shape_cast %278 : vector<8x128xf32> to vector<1x8x128xf32>
    tpu.vector_store %arg9[%c2_91, %c0_92, %c0_93], %281 {strides = array<i32>} : memref<4x8x128xf32, #tpu.memory_space<vmem>>, vector<1x8x128xf32>,
    %c4_i32_94 = arith.constant 4 : i32
    %282 = arith.muli %arg0, %c4_i32_94 : i32
    %c3_i32 = arith.constant 3 : i32
    %283 = arith.addi %282, %c3_i32 : i32
    %c4_i32_95 = arith.constant 4 : i32
    %c0_i32_96 = arith.constant 0 : i32
    %284 = arith.cmpi eq, %c4_i32_95, %c0_i32_96 : i32
    %c1_i32_97 = arith.constant 1 : i32
    %285 = arith.select %284, %c1_i32_97, %c4_i32_95 : i32
    %286 = arith.remsi %283, %285 : i32
    %c0_i32_98 = arith.constant 0 : i32
    %287 = arith.cmpi ne, %286, %c0_i32_98 : i32
    %c0_i32_99 = arith.constant 0 : i32
    %288 = arith.cmpi slt, %286, %c0_i32_99 : i32
    %c0_i32_100 = arith.constant 0 : i32
    %289 = arith.cmpi slt, %285, %c0_i32_100 : i32
    %290 = arith.xori %288, %289 : i1
    %291 = arith.andi %290, %287 : i1
    %292 = arith.addi %286, %285 : i32
    %293 = arith.select %291, %292, %286 : i32
    %294 = vector.extract_strided_slice %221 {offsets = [24, 0], sizes = [8, 128], strides = [1, 1]} : vector<32x128xf32> to vector<8x128xf32>
    %295 = arith.index_cast %293 : i32 to index
    %c0_101 = arith.constant 0 : index
    %c0_102 = arith.constant 0 : index
    %296 = vector.load %arg8[%295, %c0_101, %c0_102] : memref<4x8x128xf32, #tpu.memory_space<vmem>>, vector<1x8x128xf32>
    %297 = vector.shape_cast %296 : vector<1x8x128xf32> to vector<8x128xf32>
    %298 = arith.mulf %294, %297 : vector<8x128xf32>
    %c3_103 = arith.constant 3 : index
    %c0_104 = arith.constant 0 : index
    %c0_105 = arith.constant 0 : index
    %299 = vector.load %arg9[%c3_103, %c0_104, %c0_105] : memref<4x8x128xf32, #tpu.memory_space<vmem>>, vector<1x8x128xf32>
    %300 = vector.shape_cast %299 : vector<1x8x128xf32> to vector<8x128xf32>
    %301 = vector.shape_cast %298 : vector<8x128xf32> to vector<1x8x128xf32>
    tpu.vector_store %arg9[%c3_103, %c0_104, %c0_105], %301 {strides = array<i32>} : memref<4x8x128xf32, #tpu.memory_space<vmem>>, vector<1x8x128xf32>,
    return
  }
  func.func @transform_0(%arg0: i32) -> (i32, i32, i32) {
    %c0_i32 = arith.constant 0 : i32
    %c0_i32_0 = arith.constant 0 : i32
    %c0_i32_1 = arith.constant 0 : i32
    return %arg0, %c0_i32, %c0_i32_0 : i32, i32, i32
  }
  func.func @transform_1(%arg0: i32) -> (i32, i32, i32) {
    %c0_i32 = arith.constant 0 : i32
    %c0_i32_0 = arith.constant 0 : i32
    %c0_i32_1 = arith.constant 0 : i32
    %c0_i32_2 = arith.constant 0 : i32
    return %c0_i32, %c0_i32_0, %c0_i32_1 : i32, i32, i32
  }
  func.func @transform_2(%arg0: i32) -> (i32, i32) {
    %c0_i32 = arith.constant 0 : i32
    %c0_i32_0 = arith.constant 0 : i32
    %c0_i32_1 = arith.constant 0 : i32
    return %c0_i32, %c0_i32_0 : i32, i32
  }
  func.func @transform_3(%arg0: i32) -> (i32, i32, i32) {
    %c0_i32 = arith.constant 0 : i32
    %c0_i32_0 = arith.constant 0 : i32
    %c0_i32_1 = arith.constant 0 : i32
    %c0_i32_2 = arith.constant 0 : i32
    return %c0_i32, %c0_i32_0, %c0_i32_1 : i32, i32, i32
  }
  func.func @transform_4(%arg0: i32) -> (i32, i32) {
    %c0_i32 = arith.constant 0 : i32
    %c0_i32_0 = arith.constant 0 : i32
    %c0_i32_1 = arith.constant 0 : i32
    return %c0_i32, %c0_i32_0 : i32, i32
  }
  func.func @transform_5(%arg0: i32) -> (i32, i32) {
    %c0_i32 = arith.constant 0 : i32
    %c0_i32_0 = arith.constant 0 : i32
    %c0_i32_1 = arith.constant 0 : i32
    return %c0_i32, %c0_i32_0 : i32, i32
  }
  func.func @transform_6(%arg0: i32) -> (i32, i32) {
    %c0_i32 = arith.constant 0 : i32
    %c0_i32_0 = arith.constant 0 : i32
    %c0_i32_1 = arith.constant 0 : i32
    return %c0_i32, %c0_i32_0 : i32, i32
  }
  func.func @transform_7(%arg0: i32) -> (i32, i32, i32) {
    %c0_i32 = arith.constant 0 : i32
    %c0_i32_0 = arith.constant 0 : i32
    %c0_i32_1 = arith.constant 0 : i32
    %c0_i32_2 = arith.constant 0 : i32
    return %c0_i32, %c0_i32_0, %c0_i32_1 : i32, i32, i32
  }
  func.func @transform_8(%arg0: i32) -> (i32, i32, i32) {
    %c0_i32 = arith.constant 0 : i32
    %c0_i32_0 = arith.constant 0 : i32
    %c0_i32_1 = arith.constant 0 : i32
    return %arg0, %c0_i32, %c0_i32_0 : i32, i32, i32
  }
}

</mosaic_0001>

<llo_original>
// kernel: tpu_custom_call.1
$region0: #{tpu_custom_call.1}
  #allocation0 [shape = 'u32[]', space=smem, size = 0x4, offset = 0x4, fixed_abs, tag = 'smem constant byte address 0x4 - core index']
  #allocation1 [shape = 'u32[144,128]{1,0:T(1,128)}', space=vmem, size = 0x12000, scoped, tag = 'internal scratch']
  %s0 = inlined_call_operand.hbm [shape: f32[8,16,16], index: 0, kind: input, shape index: {}]
  %s1 = inlined_call_operand.vmem [shape: bf16[2,32,16], index: 1, kind: input, shape index: {}]
  %s2 = inlined_call_operand.vmem [shape: bf16[32,32], index: 2, kind: input, shape index: {}]
  %s3 = inlined_call_operand.hbm [shape: bf16[2,16,16], index: 3, kind: input, shape index: {}]
  %s4 = inlined_call_operand.vmem [shape: bf16[64,128], index: 4, kind: input, shape index: {}]
  %s5 = inlined_call_operand.hbm [shape: f32[16,16], index: 5, kind: input, shape index: {}]
  %s6 = inlined_call_operand.hbm [shape: f32[16,16], index: 6, kind: input, shape index: {}]
  %s7 = inlined_call_operand.hbm [shape: f32[4,8,128], index: 7, kind: input, shape index: {}]
  %s8 = inlined_call_operand.hbm [shape: f32[8,8,128], index: 8, kind: output, shape index: {}]
  %s9 = sld [smem:[#allocation0]]
  $region85: #{tpu_custom_call.1} parent=0
    _
  %s11 = ssub.s32 1, %s9
  %s12 = scalar_select 0, %s11, %s9
  $region1: #{tpu_custom_call.1} parent=0
    #allocation2 [shape = 'u8[65536]{0}', space=vmem, size = 0x10000, scoped, tag = 'input window, operand 0']
    #allocation3 [shape = 's32[2]{0}', space=sflag, size = 0x8, scoped, tag = 'scoped memory for tpu_custom_call.1']
    #allocation4 [shape = 's32[2]{0}', space=sflag, size = 0x8, scoped, tag = 'scoped memory for tpu_custom_call.1']
    #allocation5 [shape = 'u8[8192]{0}', space=vmem, size = 0x2000, scoped, tag = 'input window, operand 3, single buffered']
    #allocation6 [shape = 's32[1]{0}', space=sflag, size = 0x4, scoped, tag = 'scoped memory for tpu_custom_call.1']
    #allocation7 [shape = 'u8[8192]{0}', space=vmem, size = 0x2000, scoped, tag = 'input window, operand 5, single buffered']
    #allocation8 [shape = 'u8[8192]{0}', space=vmem, size = 0x2000, scoped, tag = 'input window, operand 6, single buffered']
    #allocation9 [shape = 's32[1]{0}', space=sflag, size = 0x4, scoped, tag = 'scoped memory for tpu_custom_call.1']
    #allocation10 [shape = 'u8[16384]{0}', space=vmem, size = 0x4000, scoped, tag = 'input window, operand 7, single buffered']
    #allocation11 [shape = 'u8[32768]{0}', space=vmem, size = 0x8000, scoped, tag = 'output window, operand 0']
    %13 = vsyncpa [#allocation3], 0
    %s14 = scalar_lea.sflag [#allocation3], 1
    %15 = vsyncpa %s14, 0
    %16 = vsyncpa [#allocation6], 0
    %17 = vsyncpa [#allocation9], 0
    %18 = vsyncpa [#allocation4], 0
    %s19 = scalar_lea.sflag [#allocation4], 1
    %20 = vsyncpa %s19, 0
    loop: start=0, step=1, limit=4
    $region2: #{tpu_custom_call.1} parent=1 // loop_pre_header
      _
    $region3: #{tpu_custom_call.1} parent=1 // loop_header
      %s22 = sphi 0, %s26
      %p23 = scmp.ge.s32.totalorder %s22, 4
      %s32 = sphi 0, %s34
      %s35 = sphi 0, %s32
      %s36 = sphi 0, %s35
      %s52 = sphi 0, %s36
      %s56 = sphi 0, %s56
      %s58 = sphi 0, %s56
      %s59 = sphi 0, %s58
      %s73 = sphi 0, %s59
      %s77 = sphi 0, %s77
      %s79 = sphi 0, %s77
      %s80 = sphi 0, %s79
      %s94 = sphi 0, %s80
      %s98 = sphi 0, %s98
      %s100 = sphi 0, %s98
      %s101 = sphi 0, %s100
      %s115 = sphi 0, %s101
      %s119 = sphi 0, %s119
      %s121 = sphi 0, %s119
      %s122 = sphi 0, %s121
      %s136 = sphi 0, %s122
      %s140 = sphi 0, %s140
      %s142 = sphi 0, %s140
      %s143 = sphi 0, %s142
      %s157 = sphi 0, %s143
      %s161 = sphi 0, %s161
      %s163 = sphi 0, %s161
      %s164 = sphi 0, %s163
      %s178 = sphi 0, %s164
      %s182 = sphi 0, %s182
      %s184 = sphi 0, %s182
      %s185 = sphi 0, %s184
      %s199 = sphi 0, %s185
      %s205 = sphi 0, %s207
      %s208 = sphi 0, %s205
      %s209 = sphi 0, %s208
      %s225 = sphi 0, %s209
    $region4: #{tpu_custom_call.1} parent=1 // loop_header_branch
      %25 = sbr.rel (%p23) target = $region8
    $region5: #{tpu_custom_call.1} parent=1 // loop_body
      %s27 = ssub.s32 %s22, 1
      %s28 = ssub.s32 %s22, 2
      %s29 = sadd.s32 %s22, 1
      %s30 = ssub.s32 %s22, %s29
      %p31 = scmp.eq.s32.totalorder %s30, 0
      %s33 = sadd.s32 %s32, 1
      %s34 = scalar_select %p31, %s32, %s33
      %p37 = pneg %p31
      %p38 = scmp.eq.s32.totalorder %s22, 1
      %p39 = por %p37, %p38
      %p40 = scmp.ne.s32.totalorder %s32, %s35
      %p41 = scmp.eq.s32.totalorder %s22, 0
      %p42 = por %p40, %p41
      %p43 = scmp.ne.s32.totalorder %s32, %s35
      %p44 = scmp.eq.s32.totalorder %s27, 1
      %p45 = por %p43, %p44
      %p46 = scmp.ne.s32.totalorder %s35, %s36
      %p47 = scmp.eq.s32.totalorder %s27, 0
      %p48 = por %p46, %p47
      %p49 = scmp.ne.s32.totalorder %s35, %s36
      %p50 = scmp.eq.s32.totalorder %s28, 1
      %p51 = por %p49, %p50
      %p53 = scmp.ne.s32.totalorder %s36, %s52
      %p54 = scmp.eq.s32.totalorder %s28, 0
      %p55 = por %p53, %p54
      %s57 = sadd.s32 %s56, 1
      %p60 = scmp.eq.s32.totalorder %s22, 1
      %p61 = scmp.ne.s32.totalorder %s56, %s58
      %p62 = scmp.eq.s32.totalorder %s22, 0
      %p63 = por %p61, %p62
      %p64 = scmp.ne.s32.totalorder %s56, %s58
      %p65 = scmp.eq.s32.totalorder %s27, 1
      %p66 = por %p64, %p65
      %p67 = scmp.ne.s32.totalorder %s58, %s59
      %p68 = scmp.eq.s32.totalorder %s27, 0
      %p69 = por %p67, %p68
      %p70 = scmp.ne.s32.totalorder %s58, %s59
      %p71 = scmp.eq.s32.totalorder %s28, 1
      %p72 = por %p70, %p71
      %p74 = scmp.ne.s32.totalorder %s59, %s73
      %p75 = scmp.eq.s32.totalorder %s28, 0
      %p76 = por %p74, %p75
      %s78 = sadd.s32 %s77, 1
      %p81 = scmp.eq.s32.totalorder %s22, 1
      %p82 = scmp.ne.s32.totalorder %s77, %s79
      %p83 = scmp.eq.s32.totalorder %s22, 0
      %p84 = por %p82, %p83
      %p85 = scmp.ne.s32.totalorder %s77, %s79
      %p86 = scmp.eq.s32.totalorder %s27, 1
      %p87 = por %p85, %p86
      %p88 = scmp.ne.s32.totalorder %s79, %s80
      %p89 = scmp.eq.s32.totalorder %s27, 0
      %p90 = por %p88, %p89
      %p91 = scmp.ne.s32.totalorder %s79, %s80
      %p92 = scmp.eq.s32.totalorder %s28, 1
      %p93 = por %p91, %p92
      %p95 = scmp.ne.s32.totalorder %s80, %s94
      %p96 = scmp.eq.s32.totalorder %s28, 0
      %p97 = por %p95, %p96
      %s99 = sadd.s32 %s98, 1
      %p102 = scmp.eq.s32.totalorder %s22, 1
      %p103 = scmp.ne.s32.totalorder %s98, %s100
      %p104 = scmp.eq.s32.totalorder %s22, 0
      %p105 = por %p103, %p104
      %p106 = scmp.ne.s32.totalorder %s98, %s100
      %p107 = scmp.eq.s32.totalorder %s27, 1
      %p108 = por %p106, %p107
      %p109 = scmp.ne.s32.totalorder %s100, %s101
      %p110 = scmp.eq.s32.totalorder %s27, 0
      %p111 = por %p109, %p110
      %p112 = scmp.ne.s32.totalorder %s100, %s101
      %p113 = scmp.eq.s32.totalorder %s28, 1
      %p114 = por %p112, %p113
      %p116 = scmp.ne.s32.totalorder %s101, %s115
      %p117 = scmp.eq.s32.totalorder %s28, 0
      %p118 = por %p116, %p117
      %s120 = sadd.s32 %s119, 1
      %p123 = scmp.eq.s32.totalorder %s22, 1
      %p124 = scmp.ne.s32.totalorder %s119, %s121
      %p125 = scmp.eq.s32.totalorder %s22, 0
      %p126 = por %p124, %p125
      %p127 = scmp.ne.s32.totalorder %s119, %s121
      %p128 = scmp.eq.s32.totalorder %s27, 1
      %p129 = por %p127, %p128
      %p130 = scmp.ne.s32.totalorder %s121, %s122
      %p131 = scmp.eq.s32.totalorder %s27, 0
      %p132 = por %p130, %p131
      %p133 = scmp.ne.s32.totalorder %s121, %s122
      %p134 = scmp.eq.s32.totalorder %s28, 1
      %p135 = por %p133, %p134
      %p137 = scmp.ne.s32.totalorder %s122, %s136
      %p138 = scmp.eq.s32.totalorder %s28, 0
      %p139 = por %p137, %p138
      %s141 = sadd.s32 %s140, 1
      %p144 = scmp.eq.s32.totalorder %s22, 1
      %p145 = scmp.ne.s32.totalorder %s140, %s142
      %p146 = scmp.eq.s32.totalorder %s22, 0
      %p147 = por %p145, %p146
      %p148 = scmp.ne.s32.totalorder %s140, %s142
      %p149 = scmp.eq.s32.totalorder %s27, 1
      %p150 = por %p148, %p149
      %p151 = scmp.ne.s32.totalorder %s142, %s143
      %p152 = scmp.eq.s32.totalorder %s27, 0
      %p153 = por %p151, %p152
      %p154 = scmp.ne.s32.totalorder %s142, %s143
      %p155 = scmp.eq.s32.totalorder %s28, 1
      %p156 = por %p154, %p155
      %p158 = scmp.ne.s32.totalorder %s143, %s157
      %p159 = scmp.eq.s32.totalorder %s28, 0
      %p160 = por %p158, %p159
      %s162 = sadd.s32 %s161, 1
      %p165 = scmp.eq.s32.totalorder %s22, 1
      %p166 = scmp.ne.s32.totalorder %s161, %s163
      %p167 = scmp.eq.s32.totalorder %s22, 0
      %p168 = por %p166, %p167
      %p169 = scmp.ne.s32.totalorder %s161, %s163
      %p170 = scmp.eq.s32.totalorder %s27, 1
      %p171 = por %p169, %p170
      %p172 = scmp.ne.s32.totalorder %s163, %s164
      %p173 = scmp.eq.s32.totalorder %s27, 0
      %p174 = por %p172, %p173
      %p175 = scmp.ne.s32.totalorder %s163, %s164
      %p176 = scmp.eq.s32.totalorder %s28, 1
      %p177 = por %p175, %p176
      %p179 = scmp.ne.s32.totalorder %s164, %s178
      %p180 = scmp.eq.s32.totalorder %s28, 0
      %p181 = por %p179, %p180
      %s183 = sadd.s32 %s182, 1
      %p186 = scmp.eq.s32.totalorder %s22, 1
      %p187 = scmp.ne.s32.totalorder %s182, %s184
      %p188 = scmp.eq.s32.totalorder %s22, 0
      %p189 = por %p187, %p188
      %p190 = scmp.ne.s32.totalorder %s182, %s184
      %p191 = scmp.eq.s32.totalorder %s27, 1
      %p192 = por %p190, %p191
      %p193 = scmp.ne.s32.totalorder %s184, %s185
      %p194 = scmp.eq.s32.totalorder %s27, 0
      %p195 = por %p193, %p194
      %p196 = scmp.ne.s32.totalorder %s184, %s185
      %p197 = scmp.eq.s32.totalorder %s28, 1
      %p198 = por %p196, %p197
      %p200 = scmp.ne.s32.totalorder %s185, %s199
      %p201 = scmp.eq.s32.totalorder %s28, 0
      %p202 = por %p200, %p201
      %s203 = ssub.s32 %s22, %s29
      %p204 = scmp.eq.s32.totalorder %s203, 0
      %s206 = sadd.s32 %s205, 1
      %s207 = scalar_select %p204, %s205, %s206
      %p210 = pneg %p204
      %p211 = scmp.eq.s32.totalorder %s22, 1
      %p212 = por %p210, %p211
      %p213 = scmp.ne.s32.totalorder %s205, %s208
      %p214 = scmp.eq.s32.totalorder %s22, 0
      %p215 = por %p213, %p214
      %p216 = scmp.ne.s32.totalorder %s205, %s208
      %p217 = scmp.eq.s32.totalorder %s27, 1
      %p218 = por %p216, %p217
      %p219 = scmp.ne.s32.totalorder %s208, %s209
      %p220 = scmp.eq.s32.totalorder %s27, 0
      %p221 = por %p219, %p220
      %p222 = scmp.ne.s32.totalorder %s208, %s209
      %p223 = scmp.eq.s32.totalorder %s28, 1
      %p224 = por %p222, %p223
      %p226 = scmp.ne.s32.totalorder %s209, %s225
      %p227 = scmp.eq.s32.totalorder %s28, 0
      %p228 = por %p226, %p227
      %p229 = scmp.le.s32.totalorder 1, %s22
      %p230 = scmp.lt.s32.totalorder %s22, 3
      %p231 = pnand %p229, %p230
      %p232 = pneg %p231
      // Predicated region
      $region9: #{tpu_custom_call.1} parent=5 // pred_check
        _
      $region10: #{tpu_custom_call.1} parent=5 // pred_check_branch
        %234 = sbr.rel (%p231) target = $region12
      $region11: #{tpu_custom_call.1} parent=5 // pred_region
        %s235 = ssub.s32 %s22, 1
        // Predicated region
        $region13: #{tpu_custom_call.1} parent=11 // pred_check
          %p236 = pneg %p69
        $region14: #{tpu_custom_call.1} parent=11 // pred_check_branch
          %238 = sbr.rel (%p236) target = $region16
        $region15: #{tpu_custom_call.1} parent=11 // pred_region
          _
        $region16: #{tpu_custom_call.1} parent=11 // pred_fallthru
          _
        // Predicated region
        $region17: #{tpu_custom_call.1} parent=11 // pred_check
          %p239 = pneg %p90
        $region18: #{tpu_custom_call.1} parent=11 // pred_check_branch
          %241 = sbr.rel (%p239) target = $region20
        $region19: #{tpu_custom_call.1} parent=11 // pred_region
          _
        $region20: #{tpu_custom_call.1} parent=11 // pred_fallthru
          _
        // Predicated region
        $region21: #{tpu_custom_call.1} parent=11 // pred_check
          %p242 = pneg %p111
        $region22: #{tpu_custom_call.1} parent=11 // pred_check_branch
          %244 = sbr.rel (%p242) target = $region24
        $region23: #{tpu_custom_call.1} parent=11 // pred_region
          %s246 = ssub.s32 256, 256
          %247 = vsyncadd [#allocation6], %s246
          %s248 = sshll.u32 [#allocation5], 4
          %s249 = int_to_ptr.vmem [resolvable:$true] %s248
          %254 = dma.hbm_to_vmem [thread:$0]  %s3, 256, %s249, [#allocation6], 64, 64, 4
        $region24: #{tpu_custom_call.1} parent=11 // pred_fallthru
          _
        // Predicated region
        $region25: #{tpu_custom_call.1} parent=11 // pred_check
          %p255 = pneg %p132
        $region26: #{tpu_custom_call.1} parent=11 // pred_check_branch
          %257 = sbr.rel (%p255) target = $region28
        $region27: #{tpu_custom_call.1} parent=11 // pred_region
          _
        $region28: #{tpu_custom_call.1} parent=11 // pred_fallthru
          _
        // Predicated region
        $region29: #{tpu_custom_call.1} parent=11 // pred_check
          %p258 = pneg %p153
        $region30: #{tpu_custom_call.1} parent=11 // pred_check_branch
          %260 = sbr.rel (%p258) target = $region32
        $region31: #{tpu_custom_call.1} parent=11 // pred_region
          %s262 = ssub.s32 256, 256
          %263 = vsyncadd [#allocation6], %s262
          %s264 = sshll.u32 [#allocation7], 4
          %s265 = int_to_ptr.vmem [resolvable:$true] %s264
          %270 = dma.hbm_to_vmem [thread:$0]  %s5, 256, %s265, [#allocation6], 128, 128, 8
        $region32: #{tpu_custom_call.1} parent=11 // pred_fallthru
          _
        // Predicated region
        $region33: #{tpu_custom_call.1} parent=11 // pred_check
          %p271 = pneg %p174
        $region34: #{tpu_custom_call.1} parent=11 // pred_check_branch
          %273 = sbr.rel (%p271) target = $region36
        $region35: #{tpu_custom_call.1} parent=11 // pred_region
          %s275 = ssub.s32 256, 256
          %276 = vsyncadd [#allocation9], %s275
          %s277 = sshll.u32 [#allocation8], 4
          %s278 = int_to_ptr.vmem [resolvable:$true] %s277
          %283 = dma.hbm_to_vmem [thread:$0]  %s6, 256, %s278, [#allocation9], 128, 128, 8
        $region36: #{tpu_custom_call.1} parent=11 // pred_fallthru
          _
        // Predicated region
        $region37: #{tpu_custom_call.1} parent=11 // pred_check
          %p284 = pneg %p195
        $region38: #{tpu_custom_call.1} parent=11 // pred_check_branch
          %286 = sbr.rel (%p284) target = $region40
        $region39: #{tpu_custom_call.1} parent=11 // pred_region
          %s288 = ssub.s32 512, 512
          %289 = vsyncadd [#allocation9], %s288
          %s290 = sshll.u32 [#allocation10], 4
          %s291 = int_to_ptr.vmem [resolvable:$true] %s290
          %296 = dma.hbm_to_vmem [thread:$0]  %s7, 512, %s291, [#allocation9], 128, 128, 8
        $region40: #{tpu_custom_call.1} parent=11 // pred_fallthru
          _
      $region12: #{tpu_custom_call.1} parent=5 // pred_fallthru
        _
      %p297 = scmp.lt.s32.totalorder %s22, 2
      // Predicated region
      $region41: #{tpu_custom_call.1} parent=5 // pred_check
        %p298 = pneg %p297
      $region42: #{tpu_custom_call.1} parent=5 // pred_check_branch
        %300 = sbr.rel (%p298) target = $region44
      $region43: #{tpu_custom_call.1} parent=5 // pred_region
        // Predicated region
        $region45: #{tpu_custom_call.1} parent=43 // pred_check
          %p301 = pneg %p42
        $region46: #{tpu_custom_call.1} parent=43 // pred_check_branch
          %303 = sbr.rel (%p301) target = $region48
        $region47: #{tpu_custom_call.1} parent=43 // pred_region
          %s304 = sand.u32 %s32, 1
          %s305 = scalar_lea.sflag [#allocation3], %s304
          %s306 = sand.u32 %s32, 1
          %s307 = smul.addr %s306, 64
          %s308 = scalar_lea.vmem [#allocation2], %s307
          %s309 = smul.u32 4, %s22
          %s311 = ssub.s32 1024, 1024
          %312 = vsyncadd %s305, %s311
          %s313 = smul.addr %s309, 2
          %s314 = smul.addr %s313, 128
          %s315 = scalar_lea.hbm %s0, %s314
          %s316 = sshll.u32 %s308, 4
          %s317 = int_to_ptr.vmem [resolvable:$true] %s316
          %322 = dma.hbm_to_vmem [thread:$0]  %s315, 1024, %s317, %s305, 128, 128, 8
        $region48: #{tpu_custom_call.1} parent=43 // pred_fallthru
          _
      $region44: #{tpu_custom_call.1} parent=5 // pred_fallthru
        _
      %p323 = scmp.le.s32.totalorder 1, %s22
      %p324 = scmp.lt.s32.totalorder %s22, 3
      %p325 = pnand %p323, %p324
      %p326 = pneg %p325
      // Predicated region
      $region49: #{tpu_custom_call.1} parent=5 // pred_check
        _
      $region50: #{tpu_custom_call.1} parent=5 // pred_check_branch
        %328 = sbr.rel (%p325) target = $region52
      $region51: #{tpu_custom_call.1} parent=5 // pred_region
        %s329 = ssub.s32 %s22, 1
        %s330 = sand.u32 %s35, 1
        %s331 = scalar_lea.sflag [#allocation3], %s330
        %s332 = sand.u32 %s35, 1
        %s333 = smul.addr %s332, 64
        %s334 = scalar_lea.vmem [#allocation2], %s333
        // Predicated region
        $region53: #{tpu_custom_call.1} parent=51 // pred_check
          %p335 = pneg %p48
        $region54: #{tpu_custom_call.1} parent=51 // pred_check_branch
          %337 = sbr.rel (%p335) target = $region56
        $region55: #{tpu_custom_call.1} parent=51 // pred_region
          %338 = dma.done %s331, 1024
        $region56: #{tpu_custom_call.1} parent=51 // pred_fallthru
          _
        // Predicated region
        $region57: #{tpu_custom_call.1} parent=51 // pred_check
          %p339 = pneg %p111
        $region58: #{tpu_custom_call.1} parent=51 // pred_check_branch
          %341 = sbr.rel (%p339) target = $region60
        $region59: #{tpu_custom_call.1} parent=51 // pred_region
          %342 = dma.done [#allocation6], 256
        $region60: #{tpu_custom_call.1} parent=51 // pred_fallthru
          _
        // Predicated region
        $region61: #{tpu_custom_call.1} parent=51 // pred_check
          %p343 = pneg %p153
        $region62: #{tpu_custom_call.1} parent=51 // pred_check_branch
          %345 = sbr.rel (%p343) target = $region64
        $region63: #{tpu_custom_call.1} parent=51 // pred_region
          %346 = dma.done [#allocation6], 256
        $region64: #{tpu_custom_call.1} parent=51 // pred_fallthru
          _
        // Predicated region
        $region65: #{tpu_custom_call.1} parent=51 // pred_check
          %p347 = pneg %p174
        $region66: #{tpu_custom_call.1} parent=51 // pred_check_branch
          %349 = sbr.rel (%p347) target = $region68
        $region67: #{tpu_custom_call.1} parent=51 // pred_region
          %350 = dma.done [#allocation9], 256
        $region68: #{tpu_custom_call.1} parent=51 // pred_fallthru
          _
        // Predicated region
        $region69: #{tpu_custom_call.1} parent=51 // pred_check
          %p351 = pneg %p195
        $region70: #{tpu_custom_call.1} parent=51 // pred_check_branch
          %353 = sbr.rel (%p351) target = $region72
        $region71: #{tpu_custom_call.1} parent=51 // pred_region
          %354 = dma.done [#allocation9], 512
        $region72: #{tpu_custom_call.1} parent=51 // pred_fallthru
          _
        %s355 = sand.u32 %s35, 1
        %s356 = scalar_lea.sflag [#allocation3], %s355
        %s357 = sand.u32 %s35, 1
        %s358 = smul.addr %s357, 64
        %s359 = scalar_lea.vmem [#allocation2], %s358
        %p360 = pneg %p48
        %p361 = pneg %p45
        %p362 = pneg %p69
        %p363 = pneg %p66
        %p364 = pneg %p90
        %p365 = pneg %p87
        %p366 = pneg %p111
        %p367 = pneg %p108
        %p368 = pneg %p132
        %p369 = pneg %p129
        %p370 = pneg %p153
        %p371 = pneg %p150
        %p372 = pneg %p174
        %p373 = pneg %p171
        %p374 = pneg %p195
        %p375 = pneg %p192
        %p376 = pneg %p221
        %p377 = pneg %p218
        %s378 = sand.u32 %s208, 1
        %s379 = scalar_lea.sflag [#allocation4], %s378
        %s380 = sand.u32 %s208, 1
        %s381 = smul.addr %s380, 32
        %s382 = scalar_lea.vmem [#allocation11], %s381
        %s383 = smul.u32 4, %s27
        %s384 = smul.u32 4, %s27
        %v386 = vld [vmem:[%s1] sm:$0xf]
        %v387 = vld [vmem:[%s1 + $0x4] sm:$0xf]
        %v388 = vld [vmem:[%s1 + $0x8] sm:$0xf]
        %v389 = vld [vmem:[%s1 + $0xc] sm:$0xf]
        %s390 = scalar_lea.vmem %s1, 16
        %v391 = vld [vmem:[%s390] sm:$0xf]
        %v392 = vld [vmem:[%s390 + $0x4] sm:$0xf]
        %v393 = vld [vmem:[%s390 + $0x8] sm:$0xf]
        %v394 = vld [vmem:[%s390 + $0xc] sm:$0xf]
        %v395 = vld [vmem:[#allocation5] sm:$0xf]
        %v396 = vld [vmem:[#allocation5 + $0x4] sm:$0xf]
        %s397 = scalar_lea.vmem [#allocation5], 8
        %v398 = vld [vmem:[%s397] sm:$0xf]
        %v399 = vld [vmem:[%s397 + $0x4] sm:$0xf]
        %v400 = vld [vmem:[#allocation7] sm:$0xff]
        %v401 = vld [vmem:[#allocation7 + $0x8] sm:$0xff]
        %v402 = vld [vmem:[#allocation8] sm:$0xff]
        %v403 = vld [vmem:[#allocation8 + $0x8] sm:$0xff]
        %v404 = vld [vmem:[%s334] sm:$0xff]
        %v405 = vld [vmem:[%s334 + $0x8] sm:$0xff]
        %v406 = vpack.c.bf16 %v405, %v404
        %v407 = vunpack.c.l.bf16 %v406
        %v408 = vunpack.c.h.bf16 %v406
        %v409 = vsub.f32 %v404, %v407
        %v410 = vsub.f32 %v405, %v408
        %v411 = vpack.c.bf16 %v410, %v409
        %v416 = vunpack.c.l.b16 %v391
        %v417 = vunpack.c.l.b16 %v392
        %v418 = vunpack.c.l.b16 %v393
        %v419 = vunpack.c.l.b16 %v394
        %v420 = vpack.c.b16 %v417, %v416
        %v421 = vpack.c.b16 %v419, %v418
        %vm422 = vcmask 130048
        %v424 = vsel %vm422, %v420, 0
        %v427 = vsel %vm422, %v421, 0
        %429 = vmatprep.subr.bf16.mxu0 0
        %430 = vmatpush1.bf16.msra.mxu0 0
        %431 = vmatprep.subr.bf16.mxu0 0
        %432 = vmatpush1.bf16.msra.mxu0 0
        %433 = vmatprep.subr.bf16.mxu0 0
        %434 = vmatpush1.bf16.msra.mxu0 0
        %435 = vmatprep.subr.bf16.mxu0 0
        %436 = vmatpush1.bf16.msra.mxu0 0
        %437 = vmatprep.subr.bf16.mxu0 0
        %438 = vmatpush1.bf16.msra.mxu0 0
        %439 = vmatprep.subr.bf16.mxu0 0
        %440 = vmatpush1.bf16.msra.mxu0 0
        %441 = vmatprep.subr.bf16.mxu0 0
        %442 = vmatpush1.bf16.msra.mxu0 0
        %443 = vmatprep.subr.bf16.mxu0 0
        %444 = vmatpush1.bf16.msra.mxu0 %v406
        %445 = vmatprep.subr.bf16.mxu0 0
        %446 = vmatpush2.bf16.msra.mxu0 0
        %447 = vmatprep.subr.bf16.mxu0 0
        %448 = vmatpush2.bf16.msra.mxu0 0
        %449 = vmatprep.subr.bf16.mxu0 0
        %450 = vmatpush2.bf16.msra.mxu0 0
        %451 = vmatprep.subr.bf16.mxu0 0
        %452 = vmatpush2.bf16.msra.mxu0 0
        %453 = vmatprep.subr.bf16.mxu0 0
        %454 = vmatpush2.bf16.msra.mxu0 0
        %455 = vmatprep.subr.bf16.mxu0 0
        %456 = vmatpush2.bf16.msra.mxu0 0
        %457 = vmatprep.subr.bf16.mxu0 0
        %458 = vmatpush2.bf16.msra.mxu0 0
        %459 = vmatprep.subr.bf16.mxu0 0
        %460 = vmatpush2.bf16.msra.mxu0 0
        %461 = vmatprep.mubr.bf16.mxu0 0
        %462 = vmatmul.mubr.bf16.gmra.mxu0 %v424
        %v463 = vpop.f32.mrf.mxu0
        %v464 = vadd.f32 0.0, %v463
        %v465 = vpop.f32.mrf.mxu0
        %v466 = vpop.f32.mrf.mxu0
        %v467 = vadd.f32 0.0, %v466
        %v468 = vpop.f32.mrf.mxu0
        %469 = vmatprep.mubr.bf16.mxu0 0
        %470 = vmatmul.mubr.bf16.gmra.mxu0 %v427
        %v471 = vpop.f32.mrf.mxu0
        %v472 = vadd.f32 0.0, %v471
        %v473 = vpop.f32.mrf.mxu0
        %v474 = vpop.f32.mrf.mxu0
        %v475 = vadd.f32 0.0, %v474
        %v476 = vpop.f32.mrf.mxu0
        %477 = vdwg.mxu0
        %v482 = vunpack.c.l.b16 %v386
        %v483 = vunpack.c.l.b16 %v387
        %v484 = vunpack.c.l.b16 %v388
        %v485 = vunpack.c.l.b16 %v389
        %v486 = vpack.c.b16 %v483, %v482
        %v487 = vpack.c.b16 %v485, %v484
        %v489 = vsel %vm422, %v486, 0
        %v492 = vsel %vm422, %v487, 0
        %494 = vmatprep.subr.bf16.mxu0 0
        %495 = vmatpush1.bf16.msra.mxu0 0
        %496 = vmatprep.subr.bf16.mxu0 0
        %497 = vmatpush1.bf16.msra.mxu0 0
        %498 = vmatprep.subr.bf16.mxu0 0
        %499 = vmatpush1.bf16.msra.mxu0 0
        %500 = vmatprep.subr.bf16.mxu0 0
        %501 = vmatpush1.bf16.msra.mxu0 0
        %502 = vmatprep.subr.bf16.mxu0 0
        %503 = vmatpush1.bf16.msra.mxu0 0
        %504 = vmatprep.subr.bf16.mxu0 0
        %505 = vmatpush1.bf16.msra.mxu0 0
        %506 = vmatprep.subr.bf16.mxu0 0
        %507 = vmatpush1.bf16.msra.mxu0 0
        %508 = vmatprep.subr.bf16.mxu0 0
        %509 = vmatpush1.bf16.msra.mxu0 %v406
        %510 = vmatprep.subr.bf16.mxu0 0
        %511 = vmatpush2.bf16.msra.mxu0 0
        %512 = vmatprep.subr.bf16.mxu0 0
        %513 = vmatpush2.bf16.msra.mxu0 0
        %514 = vmatprep.subr.bf16.mxu0 0
        %515 = vmatpush2.bf16.msra.mxu0 0
        %516 = vmatprep.subr.bf16.mxu0 0
        %517 = vmatpush2.bf16.msra.mxu0 0
        %518 = vmatprep.subr.bf16.mxu0 0
        %519 = vmatpush2.bf16.msra.mxu0 0
        %520 = vmatprep.subr.bf16.mxu0 0
        %521 = vmatpush2.bf16.msra.mxu0 0
        %522 = vmatprep.subr.bf16.mxu0 0
        %523 = vmatpush2.bf16.msra.mxu0 0
        %524 = vmatprep.subr.bf16.mxu0 0
        %525 = vmatpush2.bf16.msra.mxu0 0
        %526 = vmatprep.mubr.bf16.mxu0 0
        %527 = vmatmul.mubr.bf16.gmra.mxu0 %v489
        %v528 = vpop.f32.mrf.mxu0
        %v529 = vadd.f32 %v464, %v528
        %v530 = vpop.f32.mrf.mxu0
        %v531 = vpop.f32.mrf.mxu0
        %v532 = vadd.f32 %v467, %v531
        %v533 = vpop.f32.mrf.mxu0
        %534 = vmatprep.mubr.bf16.mxu0 0
        %535 = vmatmul.mubr.bf16.gmra.mxu0 %v492
        %v536 = vpop.f32.mrf.mxu0
        %v537 = vadd.f32 %v472, %v536
        %v538 = vpop.f32.mrf.mxu0
        %v539 = vpop.f32.mrf.mxu0
        %v540 = vadd.f32 %v475, %v539
        %v541 = vpop.f32.mrf.mxu0
        %542 = vdwg.mxu0
        %543 = vmatprep.subr.bf16.mxu0 0
        %544 = vmatpush1.bf16.msra.mxu0 0
        %545 = vmatprep.subr.bf16.mxu0 0
        %546 = vmatpush1.bf16.msra.mxu0 0
        %547 = vmatprep.subr.bf16.mxu0 0
        %548 = vmatpush1.bf16.msra.mxu0 0
        %549 = vmatprep.subr.bf16.mxu0 0
        %550 = vmatpush1.bf16.msra.mxu0 0
        %551 = vmatprep.subr.bf16.mxu0 0
        %552 = vmatpush1.bf16.msra.mxu0 0
        %553 = vmatprep.subr.bf16.mxu0 0
        %554 = vmatpush1.bf16.msra.mxu0 0
        %555 = vmatprep.subr.bf16.mxu0 0
        %556 = vmatpush1.bf16.msra.mxu0 0
        %557 = vmatprep.subr.bf16.mxu0 0
        %558 = vmatpush1.bf16.msra.mxu0 %v411
        %559 = vmatprep.subr.bf16.mxu0 0
        %560 = vmatpush2.bf16.msra.mxu0 0
        %561 = vmatprep.subr.bf16.mxu0 0
        %562 = vmatpush2.bf16.msra.mxu0 0
        %563 = vmatprep.subr.bf16.mxu0 0
        %564 = vmatpush2.bf16.msra.mxu0 0
        %565 = vmatprep.subr.bf16.mxu0 0
        %566 = vmatpush2.bf16.msra.mxu0 0
        %567 = vmatprep.subr.bf16.mxu0 0
        %568 = vmatpush2.bf16.msra.mxu0 0
        %569 = vmatprep.subr.bf16.mxu0 0
        %570 = vmatpush2.bf16.msra.mxu0 0
        %571 = vmatprep.subr.bf16.mxu0 0
        %572 = vmatpush2.bf16.msra.mxu0 0
        %573 = vmatprep.subr.bf16.mxu0 0
        %574 = vmatpush2.bf16.msra.mxu0 0
        %575 = vmatprep.mubr.bf16.mxu0 0
        %576 = vmatmul.mubr.bf16.gmra.mxu0 %v489
        %v577 = vpop.f32.mrf.mxu0
        %v578 = vadd.f32 0.0, %v577
        %v579 = vpop.f32.mrf.mxu0
        %v580 = vpop.f32.mrf.mxu0
        %v581 = vadd.f32 0.0, %v580
        %v582 = vpop.f32.mrf.mxu0
        %583 = vmatprep.mubr.bf16.mxu0 0
        %584 = vmatmul.mubr.bf16.gmra.mxu0 %v492
        %v585 = vpop.f32.mrf.mxu0
        %v586 = vadd.f32 0.0, %v585
        %v587 = vpop.f32.mrf.mxu0
        %v588 = vpop.f32.mrf.mxu0
        %v589 = vadd.f32 0.0, %v588
        %v590 = vpop.f32.mrf.mxu0
        %591 = vdwg.mxu0
        %v592 = vadd.f32 %v529, %v578
        %v593 = vadd.f32 %v532, %v581
        %v594 = vadd.f32 %v537, %v586
        %v595 = vadd.f32 %v540, %v589
        %v596 = vpack.c.bf16 %v593, %v592
        %v597 = vpack.c.bf16 %v595, %v594
        %v598 = vunpack.c.l.bf16 %v596
        %v599 = vunpack.c.h.bf16 %v596
        %v600 = vunpack.c.l.bf16 %v597
        %v601 = vunpack.c.h.bf16 %v597
        %v602 = vsub.f32 %v592, %v598
        %v603 = vsub.f32 %v593, %v599
        %v604 = vsub.f32 %v594, %v600
        %v605 = vsub.f32 %v595, %v601
        %v606 = vpack.c.bf16 %v603, %v602
        %v607 = vpack.c.bf16 %v605, %v604
        %s608 = scalar_lea.vmem %s334, 16 [#allocation2]
        %v609 = vld [vmem:[%s608] sm:$0xff]
        %v610 = vld [vmem:[%s608 + $0x8] sm:$0xff]
        %v611 = vpack.c.bf16 %v610, %v609
        %v612 = vunpack.c.l.bf16 %v611
        %v613 = vunpack.c.h.bf16 %v611
        %v614 = vsub.f32 %v609, %v612
        %v615 = vsub.f32 %v610, %v613
        %v616 = vpack.c.bf16 %v615, %v614
        %617 = vmatprep.subr.bf16.mxu0 0
        %618 = vmatpush1.bf16.msra.mxu0 0
        %619 = vmatprep.subr.bf16.mxu0 0
        %620 = vmatpush1.bf16.msra.mxu0 0
        %621 = vmatprep.subr.bf16.mxu0 0
        %622 = vmatpush1.bf16.msra.mxu0 0
        %623 = vmatprep.subr.bf16.mxu0 0
        %624 = vmatpush1.bf16.msra.mxu0 0
        %625 = vmatprep.subr.bf16.mxu0 0
        %626 = vmatpush1.bf16.msra.mxu0 0
        %627 = vmatprep.subr.bf16.mxu0 0
        %628 = vmatpush1.bf16.msra.mxu0 0
        %629 = vmatprep.subr.bf16.mxu0 0
        %630 = vmatpush1.bf16.msra.mxu0 0
        %631 = vmatprep.subr.bf16.mxu0 0
        %632 = vmatpush1.bf16.msra.mxu0 %v611
        %633 = vmatprep.subr.bf16.mxu0 0
        %634 = vmatpush2.bf16.msra.mxu0 0
        %635 = vmatprep.subr.bf16.mxu0 0
        %636 = vmatpush2.bf16.msra.mxu0 0
        %637 = vmatprep.subr.bf16.mxu0 0
        %638 = vmatpush2.bf16.msra.mxu0 0
        %639 = vmatprep.subr.bf16.mxu0 0
        %640 = vmatpush2.bf16.msra.mxu0 0
        %641 = vmatprep.subr.bf16.mxu0 0
        %642 = vmatpush2.bf16.msra.mxu0 0
        %643 = vmatprep.subr.bf16.mxu0 0
        %644 = vmatpush2.bf16.msra.mxu0 0
        %645 = vmatprep.subr.bf16.mxu0 0
        %646 = vmatpush2.bf16.msra.mxu0 0
        %647 = vmatprep.subr.bf16.mxu0 0
        %648 = vmatpush2.bf16.msra.mxu0 0
        %649 = vmatprep.mubr.bf16.mxu0 0
        %650 = vmatmul.mubr.bf16.gmra.mxu0 %v424
        %v651 = vpop.f32.mrf.mxu0
        %v652 = vadd.f32 0.0, %v651
        %v653 = vpop.f32.mrf.mxu0
        %v654 = vpop.f32.mrf.mxu0
        %v655 = vadd.f32 0.0, %v654
        %v656 = vpop.f32.mrf.mxu0
        %657 = vmatprep.mubr.bf16.mxu0 0
        %658 = vmatmul.mubr.bf16.gmra.mxu0 %v427
        %v659 = vpop.f32.mrf.mxu0
        %v660 = vadd.f32 0.0, %v659
        %v661 = vpop.f32.mrf.mxu0
        %v662 = vpop.f32.mrf.mxu0
        %v663 = vadd.f32 0.0, %v662
        %v664 = vpop.f32.mrf.mxu0
        %665 = vdwg.mxu0
        %666 = vmatprep.subr.bf16.mxu0 0
        %667 = vmatpush1.bf16.msra.mxu0 0
        %668 = vmatprep.subr.bf16.mxu0 0
        %669 = vmatpush1.bf16.msra.mxu0 0
        %670 = vmatprep.subr.bf16.mxu0 0
        %671 = vmatpush1.bf16.msra.mxu0 0
        %672 = vmatprep.subr.bf16.mxu0 0
        %673 = vmatpush1.bf16.msra.mxu0 0
        %674 = vmatprep.subr.bf16.mxu0 0
        %675 = vmatpush1.bf16.msra.mxu0 0
        %676 = vmatprep.subr.bf16.mxu0 0
        %677 = vmatpush1.bf16.msra.mxu0 0
        %678 = vmatprep.subr.bf16.mxu0 0
        %679 = vmatpush1.bf16.msra.mxu0 0
        %680 = vmatprep.subr.bf16.mxu0 0
        %681 = vmatpush1.bf16.msra.mxu0 %v611
        %682 = vmatprep.subr.bf16.mxu0 0
        %683 = vmatpush2.bf16.msra.mxu0 0
        %684 = vmatprep.subr.bf16.mxu0 0
        %685 = vmatpush2.bf16.msra.mxu0 0
        %686 = vmatprep.subr.bf16.mxu0 0
        %687 = vmatpush2.bf16.msra.mxu0 0
        %688 = vmatprep.subr.bf16.mxu0 0
        %689 = vmatpush2.bf16.msra.mxu0 0
        %690 = vmatprep.subr.bf16.mxu0 0
        %691 = vmatpush2.bf16.msra.mxu0 0
        %692 = vmatprep.subr.bf16.mxu0 0
        %693 = vmatpush2.bf16.msra.mxu0 0
        %694 = vmatprep.subr.bf16.mxu0 0
        %695 = vmatpush2.bf16.msra.mxu0 0
        %696 = vmatprep.subr.bf16.mxu0 0
        %697 = vmatpush2.bf16.msra.mxu0 0
        %698 = vmatprep.mubr.bf16.mxu0 0
        %699 = vmatmul.mubr.bf16.gmra.mxu0 %v489
        %v700 = vpop.f32.mrf.mxu0
        %v701 = vadd.f32 %v652, %v700
        %v702 = vpop.f32.mrf.mxu0
        %v703 = vpop.f32.mrf.mxu0
        %v704 = vadd.f32 %v655, %v703
        %v705 = vpop.f32.mrf.mxu0
        %706 = vmatprep.mubr.bf16.mxu0 0
        %707 = vmatmul.mubr.bf16.gmra.mxu0 %v492
        %v708 = vpop.f32.mrf.mxu0
        %v709 = vadd.f32 %v660, %v708
        %v710 = vpop.f32.mrf.mxu0
        %v711 = vpop.f32.mrf.mxu0
        %v712 = vadd.f32 %v663, %v711
        %v713 = vpop.f32.mrf.mxu0
        %714 = vdwg.mxu0
        %715 = vmatprep.subr.bf16.mxu0 0
        %716 = vmatpush1.bf16.msra.mxu0 0
        %717 = vmatprep.subr.bf16.mxu0 0
        %718 = vmatpush1.bf16.msra.mxu0 0
        %719 = vmatprep.subr.bf16.mxu0 0
        %720 = vmatpush1.bf16.msra.mxu0 0
        %721 = vmatprep.subr.bf16.mxu0 0
        %722 = vmatpush1.bf16.msra.mxu0 0
        %723 = vmatprep.subr.bf16.mxu0 0
        %724 = vmatpush1.bf16.msra.mxu0 0
        %725 = vmatprep.subr.bf16.mxu0 0
        %726 = vmatpush1.bf16.msra.mxu0 0
        %727 = vmatprep.subr.bf16.mxu0 0
        %728 = vmatpush1.bf16.msra.mxu0 0
        %729 = vmatprep.subr.bf16.mxu0 0
        %730 = vmatpush1.bf16.msra.mxu0 %v616
        %731 = vmatprep.subr.bf16.mxu0 0
        %732 = vmatpush2.bf16.msra.mxu0 0
        %733 = vmatprep.subr.bf16.mxu0 0
        %734 = vmatpush2.bf16.msra.mxu0 0
        %735 = vmatprep.subr.bf16.mxu0 0
        %736 = vmatpush2.bf16.msra.mxu0 0
        %737 = vmatprep.subr.bf16.mxu0 0
        %738 = vmatpush2.bf16.msra.mxu0 0
        %739 = vmatprep.subr.bf16.mxu0 0
        %740 = vmatpush2.bf16.msra.mxu0 0
        %741 = vmatprep.subr.bf16.mxu0 0
        %742 = vmatpush2.bf16.msra.mxu0 0
        %743 = vmatprep.subr.bf16.mxu0 0
        %744 = vmatpush2.bf16.msra.mxu0 0
        %745 = vmatprep.subr.bf16.mxu0 0
        %746 = vmatpush2.bf16.msra.mxu0 0
        %747 = vmatprep.mubr.bf16.mxu0 0
        %748 = vmatmul.mubr.bf16.gmra.mxu0 %v489
        %v749 = vpop.f32.mrf.mxu0
        %v750 = vadd.f32 0.0, %v749
        %v751 = vpop.f32.mrf.mxu0
        %v752 = vpop.f32.mrf.mxu0
        %v753 = vadd.f32 0.0, %v752
        %v754 = vpop.f32.mrf.mxu0
        %755 = vmatprep.mubr.bf16.mxu0 0
        %756 = vmatmul.mubr.bf16.gmra.mxu0 %v492
        %v757 = vpop.f32.mrf.mxu0
        %v758 = vadd.f32 0.0, %v757
        %v759 = vpop.f32.mrf.mxu0
        %v760 = vpop.f32.mrf.mxu0
        %v761 = vadd.f32 0.0, %v760
        %v762 = vpop.f32.mrf.mxu0
        %763 = vdwg.mxu0
        %v764 = vadd.f32 %v701, %v750
        %v765 = vadd.f32 %v704, %v753
        %v766 = vadd.f32 %v709, %v758
        %v767 = vadd.f32 %v712, %v761
        %v768 = vpack.c.bf16 %v765, %v764
        %v769 = vpack.c.bf16 %v767, %v766
        %v770 = vunpack.c.l.bf16 %v768
        %v771 = vunpack.c.h.bf16 %v768
        %v772 = vunpack.c.l.bf16 %v769
        %v773 = vunpack.c.h.bf16 %v769
        %v774 = vsub.f32 %v764, %v770
        %v775 = vsub.f32 %v765, %v771
        %v776 = vsub.f32 %v766, %v772
        %v777 = vsub.f32 %v767, %v773
        %v778 = vpack.c.bf16 %v775, %v774
        %v779 = vpack.c.bf16 %v777, %v776
        %s780 = scalar_lea.vmem %s334, 32 [#allocation2]
        %v781 = vld [vmem:[%s780] sm:$0xff]
        %v782 = vld [vmem:[%s780 + $0x8] sm:$0xff]
        %v783 = vpack.c.bf16 %v782, %v781
        %v784 = vunpack.c.l.bf16 %v783
        %v785 = vunpack.c.h.bf16 %v783
        %v786 = vsub.f32 %v781, %v784
        %v787 = vsub.f32 %v782, %v785
        %v788 = vpack.c.bf16 %v787, %v786
        %789 = vmatprep.subr.bf16.mxu0 0
        %790 = vmatpush1.bf16.msra.mxu0 0
        %791 = vmatprep.subr.bf16.mxu0 0
        %792 = vmatpush1.bf16.msra.mxu0 0
        %793 = vmatprep.subr.bf16.mxu0 0
        %794 = vmatpush1.bf16.msra.mxu0 0
        %795 = vmatprep.subr.bf16.mxu0 0
        %796 = vmatpush1.bf16.msra.mxu0 0
        %797 = vmatprep.subr.bf16.mxu0 0
        %798 = vmatpush1.bf16.msra.mxu0 0
        %799 = vmatprep.subr.bf16.mxu0 0
        %800 = vmatpush1.bf16.msra.mxu0 0
        %801 = vmatprep.subr.bf16.mxu0 0
        %802 = vmatpush1.bf16.msra.mxu0 0
        %803 = vmatprep.subr.bf16.mxu0 0
        %804 = vmatpush1.bf16.msra.mxu0 %v783
        %805 = vmatprep.subr.bf16.mxu0 0
        %806 = vmatpush2.bf16.msra.mxu0 0
        %807 = vmatprep.subr.bf16.mxu0 0
        %808 = vmatpush2.bf16.msra.mxu0 0
        %809 = vmatprep.subr.bf16.mxu0 0
        %810 = vmatpush2.bf16.msra.mxu0 0
        %811 = vmatprep.subr.bf16.mxu0 0
        %812 = vmatpush2.bf16.msra.mxu0 0
        %813 = vmatprep.subr.bf16.mxu0 0
        %814 = vmatpush2.bf16.msra.mxu0 0
        %815 = vmatprep.subr.bf16.mxu0 0
        %816 = vmatpush2.bf16.msra.mxu0 0
        %817 = vmatprep.subr.bf16.mxu0 0
        %818 = vmatpush2.bf16.msra.mxu0 0
        %819 = vmatprep.subr.bf16.mxu0 0
        %820 = vmatpush2.bf16.msra.mxu0 0
        %821 = vmatprep.mubr.bf16.mxu0 0
        %822 = vmatmul.mubr.bf16.gmra.mxu0 %v424
        %v823 = vpop.f32.mrf.mxu0
        %v824 = vadd.f32 0.0, %v823
        %v825 = vpop.f32.mrf.mxu0
        %v826 = vpop.f32.mrf.mxu0
        %v827 = vadd.f32 0.0, %v826
        %v828 = vpop.f32.mrf.mxu0
        %829 = vmatprep.mubr.bf16.mxu0 0
        %830 = vmatmul.mubr.bf16.gmra.mxu0 %v427
        %v831 = vpop.f32.mrf.mxu0
        %v832 = vadd.f32 0.0, %v831
        %v833 = vpop.f32.mrf.mxu0
        %v834 = vpop.f32.mrf.mxu0
        %v835 = vadd.f32 0.0, %v834
        %v836 = vpop.f32.mrf.mxu0
        %837 = vdwg.mxu0
        %838 = vmatprep.subr.bf16.mxu0 0
        %839 = vmatpush1.bf16.msra.mxu0 0
        %840 = vmatprep.subr.bf16.mxu0 0
        %841 = vmatpush1.bf16.msra.mxu0 0
        %842 = vmatprep.subr.bf16.mxu0 0
        %843 = vmatpush1.bf16.msra.mxu0 0
        %844 = vmatprep.subr.bf16.mxu0 0
        %845 = vmatpush1.bf16.msra.mxu0 0
        %846 = vmatprep.subr.bf16.mxu0 0
        %847 = vmatpush1.bf16.msra.mxu0 0
        %848 = vmatprep.subr.bf16.mxu0 0
        %849 = vmatpush1.bf16.msra.mxu0 0
        %850 = vmatprep.subr.bf16.mxu0 0
        %851 = vmatpush1.bf16.msra.mxu0 0
        %852 = vmatprep.subr.bf16.mxu0 0
        %853 = vmatpush1.bf16.msra.mxu0 %v783
        %854 = vmatprep.subr.bf16.mxu0 0
        %855 = vmatpush2.bf16.msra.mxu0 0
        %856 = vmatprep.subr.bf16.mxu0 0
        %857 = vmatpush2.bf16.msra.mxu0 0
        %858 = vmatprep.subr.bf16.mxu0 0
        %859 = vmatpush2.bf16.msra.mxu0 0
        %860 = vmatprep.subr.bf16.mxu0 0
        %861 = vmatpush2.bf16.msra.mxu0 0
        %862 = vmatprep.subr.bf16.mxu0 0
        %863 = vmatpush2.bf16.msra.mxu0 0
        %864 = vmatprep.subr.bf16.mxu0 0
        %865 = vmatpush2.bf16.msra.mxu0 0
        %866 = vmatprep.subr.bf16.mxu0 0
        %867 = vmatpush2.bf16.msra.mxu0 0
        %868 = vmatprep.subr.bf16.mxu0 0
        %869 = vmatpush2.bf16.msra.mxu0 0
        %870 = vmatprep.mubr.bf16.mxu0 0
        %871 = vmatmul.mubr.bf16.gmra.mxu0 %v489
        %v872 = vpop.f32.mrf.mxu0
        %v873 = vadd.f32 %v824, %v872
        %v874 = vpop.f32.mrf.mxu0
        %v875 = vpop.f32.mrf.mxu0
        %v876 = vadd.f32 %v827, %v875
        %v877 = vpop.f32.mrf.mxu0
        %878 = vmatprep.mubr.bf16.mxu0 0
        %879 = vmatmul.mubr.bf16.gmra.mxu0 %v492
        %v880 = vpop.f32.mrf.mxu0
        %v881 = vadd.f32 %v832, %v880
        %v882 = vpop.f32.mrf.mxu0
        %v883 = vpop.f32.mrf.mxu0
        %v884 = vadd.f32 %v835, %v883
        %v885 = vpop.f32.mrf.mxu0
        %886 = vdwg.mxu0
        %887 = vmatprep.subr.bf16.mxu0 0
        %888 = vmatpush1.bf16.msra.mxu0 0
        %889 = vmatprep.subr.bf16.mxu0 0
        %890 = vmatpush1.bf16.msra.mxu0 0
        %891 = vmatprep.subr.bf16.mxu0 0
        %892 = vmatpush1.bf16.msra.mxu0 0
        %893 = vmatprep.subr.bf16.mxu0 0
        %894 = vmatpush1.bf16.msra.mxu0 0
        %895 = vmatprep.subr.bf16.mxu0 0
        %896 = vmatpush1.bf16.msra.mxu0 0
        %897 = vmatprep.subr.bf16.mxu0 0
        %898 = vmatpush1.bf16.msra.mxu0 0
        %899 = vmatprep.subr.bf16.mxu0 0
        %900 = vmatpush1.bf16.msra.mxu0 0
        %901 = vmatprep.subr.bf16.mxu0 0
        %902 = vmatpush1.bf16.msra.mxu0 %v788
        %903 = vmatprep.subr.bf16.mxu0 0
        %904 = vmatpush2.bf16.msra.mxu0 0
        %905 = vmatprep.subr.bf16.mxu0 0
        %906 = vmatpush2.bf16.msra.mxu0 0
        %907 = vmatprep.subr.bf16.mxu0 0
        %908 = vmatpush2.bf16.msra.mxu0 0
        %909 = vmatprep.subr.bf16.mxu0 0
        %910 = vmatpush2.bf16.msra.mxu0 0
        %911 = vmatprep.subr.bf16.mxu0 0
        %912 = vmatpush2.bf16.msra.mxu0 0
        %913 = vmatprep.subr.bf16.mxu0 0
        %914 = vmatpush2.bf16.msra.mxu0 0
        %915 = vmatprep.subr.bf16.mxu0 0
        %916 = vmatpush2.bf16.msra.mxu0 0
        %917 = vmatprep.subr.bf16.mxu0 0
        %918 = vmatpush2.bf16.msra.mxu0 0
        %919 = vmatprep.mubr.bf16.mxu0 0
        %920 = vmatmul.mubr.bf16.gmra.mxu0 %v489
        %v921 = vpop.f32.mrf.mxu0
        %v922 = vadd.f32 0.0, %v921
        %v923 = vpop.f32.mrf.mxu0
        %v924 = vpop.f32.mrf.mxu0
        %v925 = vadd.f32 0.0, %v924
        %v926 = vpop.f32.mrf.mxu0
        %927 = vmatprep.mubr.bf16.mxu0 0
        %928 = vmatmul.mubr.bf16.gmra.mxu0 %v492
        %v929 = vpop.f32.mrf.mxu0
        %v930 = vadd.f32 0.0, %v929
        %v931 = vpop.f32.mrf.mxu0
        %v932 = vpop.f32.mrf.mxu0
        %v933 = vadd.f32 0.0, %v932
        %v934 = vpop.f32.mrf.mxu0
        %935 = vdwg.mxu0
        %v936 = vadd.f32 %v873, %v922
        %v937 = vadd.f32 %v876, %v925
        %v938 = vadd.f32 %v881, %v930
        %v939 = vadd.f32 %v884, %v933
        %v940 = vpack.c.bf16 %v937, %v936
        %v941 = vpack.c.bf16 %v939, %v938
        %v942 = vunpack.c.l.bf16 %v940
        %v943 = vunpack.c.h.bf16 %v940
        %v944 = vunpack.c.l.bf16 %v941
        %v945 = vunpack.c.h.bf16 %v941
        %v946 = vsub.f32 %v936, %v942
        %v947 = vsub.f32 %v937, %v943
        %v948 = vsub.f32 %v938, %v944
        %v949 = vsub.f32 %v939, %v945
        %v950 = vpack.c.bf16 %v947, %v946
        %v951 = vpack.c.bf16 %v949, %v948
        %s952 = scalar_lea.vmem %s334, 48 [#allocation2]
        %v953 = vld [vmem:[%s952] sm:$0xff]
        %v954 = vld [vmem:[%s952 + $0x8] sm:$0xff]
        %v955 = vpack.c.bf16 %v954, %v953
        %v956 = vunpack.c.l.bf16 %v955
        %v957 = vunpack.c.h.bf16 %v955
        %v958 = vsub.f32 %v953, %v956
        %v959 = vsub.f32 %v954, %v957
        %v960 = vpack.c.bf16 %v959, %v958
        %961 = vmatprep.subr.bf16.mxu0 0
        %962 = vmatpush1.bf16.msra.mxu0 0
        %963 = vmatprep.subr.bf16.mxu0 0
        %964 = vmatpush1.bf16.msra.mxu0 0
        %965 = vmatprep.subr.bf16.mxu0 0
        %966 = vmatpush1.bf16.msra.mxu0 0
        %967 = vmatprep.subr.bf16.mxu0 0
        %968 = vmatpush1.bf16.msra.mxu0 0
        %969 = vmatprep.subr.bf16.mxu0 0
        %970 = vmatpush1.bf16.msra.mxu0 0
        %971 = vmatprep.subr.bf16.mxu0 0
        %972 = vmatpush1.bf16.msra.mxu0 0
        %973 = vmatprep.subr.bf16.mxu0 0
        %974 = vmatpush1.bf16.msra.mxu0 0
        %975 = vmatprep.subr.bf16.mxu0 0
        %976 = vmatpush1.bf16.msra.mxu0 %v955
        %977 = vmatprep.subr.bf16.mxu0 0
        %978 = vmatpush2.bf16.msra.mxu0 0
        %979 = vmatprep.subr.bf16.mxu0 0
        %980 = vmatpush2.bf16.msra.mxu0 0
        %981 = vmatprep.subr.bf16.mxu0 0
        %982 = vmatpush2.bf16.msra.mxu0 0
        %983 = vmatprep.subr.bf16.mxu0 0
        %984 = vmatpush2.bf16.msra.mxu0 0
        %985 = vmatprep.subr.bf16.mxu0 0
        %986 = vmatpush2.bf16.msra.mxu0 0
        %987 = vmatprep.subr.bf16.mxu0 0
        %988 = vmatpush2.bf16.msra.mxu0 0
        %989 = vmatprep.subr.bf16.mxu0 0
        %990 = vmatpush2.bf16.msra.mxu0 0
        %991 = vmatprep.subr.bf16.mxu0 0
        %992 = vmatpush2.bf16.msra.mxu0 0
        %993 = vmatprep.mubr.bf16.mxu0 0
        %994 = vmatmul.mubr.bf16.gmra.mxu0 %v424
        %v995 = vpop.f32.mrf.mxu0
        %v996 = vadd.f32 0.0, %v995
        %v997 = vpop.f32.mrf.mxu0
        %v998 = vpop.f32.mrf.mxu0
        %v999 = vadd.f32 0.0, %v998
        %v1000 = vpop.f32.mrf.mxu0
        %1001 = vmatprep.mubr.bf16.mxu0 0
        %1002 = vmatmul.mubr.bf16.gmra.mxu0 %v427
        %v1003 = vpop.f32.mrf.mxu0
        %v1004 = vadd.f32 0.0, %v1003
        %v1005 = vpop.f32.mrf.mxu0
        %v1006 = vpop.f32.mrf.mxu0
        %v1007 = vadd.f32 0.0, %v1006
        %v1008 = vpop.f32.mrf.mxu0
        %1009 = vdwg.mxu0
        %1010 = vmatprep.subr.bf16.mxu0 0
        %1011 = vmatpush1.bf16.msra.mxu0 0
        %1012 = vmatprep.subr.bf16.mxu0 0
        %1013 = vmatpush1.bf16.msra.mxu0 0
        %1014 = vmatprep.subr.bf16.mxu0 0
        %1015 = vmatpush1.bf16.msra.mxu0 0
        %1016 = vmatprep.subr.bf16.mxu0 0
        %1017 = vmatpush1.bf16.msra.mxu0 0
        %1018 = vmatprep.subr.bf16.mxu0 0
        %1019 = vmatpush1.bf16.msra.mxu0 0
        %1020 = vmatprep.subr.bf16.mxu0 0
        %1021 = vmatpush1.bf16.msra.mxu0 0
        %1022 = vmatprep.subr.bf16.mxu0 0
        %1023 = vmatpush1.bf16.msra.mxu0 0
        %1024 = vmatprep.subr.bf16.mxu0 0
        %1025 = vmatpush1.bf16.msra.mxu0 %v955
        %1026 = vmatprep.subr.bf16.mxu0 0
        %1027 = vmatpush2.bf16.msra.mxu0 0
        %1028 = vmatprep.subr.bf16.mxu0 0
        %1029 = vmatpush2.bf16.msra.mxu0 0
        %1030 = vmatprep.subr.bf16.mxu0 0
        %1031 = vmatpush2.bf16.msra.mxu0 0
        %1032 = vmatprep.subr.bf16.mxu0 0
        %1033 = vmatpush2.bf16.msra.mxu0 0
        %1034 = vmatprep.subr.bf16.mxu0 0
        %1035 = vmatpush2.bf16.msra.mxu0 0
        %1036 = vmatprep.subr.bf16.mxu0 0
        %1037 = vmatpush2.bf16.msra.mxu0 0
        %1038 = vmatprep.subr.bf16.mxu0 0
        %1039 = vmatpush2.bf16.msra.mxu0 0
        %1040 = vmatprep.subr.bf16.mxu0 0
        %1041 = vmatpush2.bf16.msra.mxu0 0
        %1042 = vmatprep.mubr.bf16.mxu0 0
        %1043 = vmatmul.mubr.bf16.gmra.mxu0 %v489
        %v1044 = vpop.f32.mrf.mxu0
        %v1045 = vadd.f32 %v996, %v1044
        %v1046 = vpop.f32.mrf.mxu0
        %v1047 = vpop.f32.mrf.mxu0
        %v1048 = vadd.f32 %v999, %v1047
        %v1049 = vpop.f32.mrf.mxu0
        %1050 = vmatprep.mubr.bf16.mxu0 0
        %1051 = vmatmul.mubr.bf16.gmra.mxu0 %v492
        %v1052 = vpop.f32.mrf.mxu0
        %v1053 = vadd.f32 %v1004, %v1052
        %v1054 = vpop.f32.mrf.mxu0
        %v1055 = vpop.f32.mrf.mxu0
        %v1056 = vadd.f32 %v1007, %v1055
        %v1057 = vpop.f32.mrf.mxu0
        %1058 = vdwg.mxu0
        %1059 = vmatprep.subr.bf16.mxu0 0
        %1060 = vmatpush1.bf16.msra.mxu0 0
        %1061 = vmatprep.subr.bf16.mxu0 0
        %1062 = vmatpush1.bf16.msra.mxu0 0
        %1063 = vmatprep.subr.bf16.mxu0 0
        %1064 = vmatpush1.bf16.msra.mxu0 0
        %1065 = vmatprep.subr.bf16.mxu0 0
        %1066 = vmatpush1.bf16.msra.mxu0 0
        %1067 = vmatprep.subr.bf16.mxu0 0
        %1068 = vmatpush1.bf16.msra.mxu0 0
        %1069 = vmatprep.subr.bf16.mxu0 0
        %1070 = vmatpush1.bf16.msra.mxu0 0
        %1071 = vmatprep.subr.bf16.mxu0 0
        %1072 = vmatpush1.bf16.msra.mxu0 0
        %1073 = vmatprep.subr.bf16.mxu0 0
        %1074 = vmatpush1.bf16.msra.mxu0 %v960
        %1075 = vmatprep.subr.bf16.mxu0 0
        %1076 = vmatpush2.bf16.msra.mxu0 0
        %1077 = vmatprep.subr.bf16.mxu0 0
        %1078 = vmatpush2.bf16.msra.mxu0 0
        %1079 = vmatprep.subr.bf16.mxu0 0
        %1080 = vmatpush2.bf16.msra.mxu0 0
        %1081 = vmatprep.subr.bf16.mxu0 0
        %1082 = vmatpush2.bf16.msra.mxu0 0
        %1083 = vmatprep.subr.bf16.mxu0 0
        %1084 = vmatpush2.bf16.msra.mxu0 0
        %1085 = vmatprep.subr.bf16.mxu0 0
        %1086 = vmatpush2.bf16.msra.mxu0 0
        %1087 = vmatprep.subr.bf16.mxu0 0
        %1088 = vmatpush2.bf16.msra.mxu0 0
        %1089 = vmatprep.subr.bf16.mxu0 0
        %1090 = vmatpush2.bf16.msra.mxu0 0
        %1091 = vmatprep.mubr.bf16.mxu0 0
        %1092 = vmatmul.mubr.bf16.gmra.mxu0 %v489
        %v1093 = vpop.f32.mrf.mxu0
        %v1094 = vadd.f32 0.0, %v1093
        %v1095 = vpop.f32.mrf.mxu0
        %v1096 = vpop.f32.mrf.mxu0
        %v1097 = vadd.f32 0.0, %v1096
        %v1098 = vpop.f32.mrf.mxu0
        %1099 = vmatprep.mubr.bf16.mxu0 0
        %1100 = vmatmul.mubr.bf16.gmra.mxu0 %v492
        %v1101 = vpop.f32.mrf.mxu0
        %v1102 = vadd.f32 0.0, %v1101
        %v1103 = vpop.f32.mrf.mxu0
        %v1104 = vpop.f32.mrf.mxu0
        %v1105 = vadd.f32 0.0, %v1104
        %v1106 = vpop.f32.mrf.mxu0
        %1107 = vdwg.mxu0
        %v1108 = vadd.f32 %v1045, %v1094
        %v1109 = vadd.f32 %v1048, %v1097
        %v1110 = vadd.f32 %v1053, %v1102
        %v1111 = vadd.f32 %v1056, %v1105
        %v1112 = vpack.c.bf16 %v1109, %v1108
        %v1113 = vpack.c.bf16 %v1111, %v1110
        %v1114 = vunpack.c.l.bf16 %v1112
        %v1115 = vunpack.c.h.bf16 %v1112
        %v1116 = vunpack.c.l.bf16 %v1113
        %v1117 = vunpack.c.h.bf16 %v1113
        %v1118 = vsub.f32 %v1108, %v1114
        %v1119 = vsub.f32 %v1109, %v1115
        %v1120 = vsub.f32 %v1110, %v1116
        %v1121 = vsub.f32 %v1111, %v1117
        %v1122 = vpack.c.bf16 %v1119, %v1118
        %v1123 = vpack.c.bf16 %v1121, %v1120
        %v1124 = vld [vmem:[%s2] sm:$0xf]
        %v1125 = vld [vmem:[%s2 + $0x4] sm:$0xf]
        %1134 = vrot.lane.b32.xlu0 %v596, 16
        %v1135 = vpop.permute.xlu0 %1134
        %1136 = vrot.lane.b32.xlu0 %v597, 16
        %v1137 = vpop.permute.xlu0 %1136
        %1138 = vrot.lane.b32.xlu0 %v768, 16
        %v1139 = vpop.permute.xlu0 %1138
        %1140 = vrot.lane.b32.xlu0 %v769, 16
        %v1141 = vpop.permute.xlu0 %1140
        %1142 = vrot.lane.b32.xlu0 %v940, 16
        %v1143 = vpop.permute.xlu0 %1142
        %1144 = vrot.lane.b32.xlu0 %v941, 16
        %v1145 = vpop.permute.xlu0 %1144
        %1146 = vrot.lane.b32.xlu0 %v1112, 16
        %v1147 = vpop.permute.xlu0 %1146
        %1148 = vrot.lane.b32.xlu0 %v1113, 16
        %v1149 = vpop.permute.xlu0 %1148
        %v1152 = vsel %vm422, %v606, %v1135
        %v1155 = vsel %vm422, %v607, %v1137
        %v1158 = vsel %vm422, %v778, %v1139
        %v1161 = vsel %vm422, %v779, %v1141
        %v1164 = vsel %vm422, %v950, %v1143
        %v1167 = vsel %vm422, %v951, %v1145
        %v1170 = vsel %vm422, %v1122, %v1147
        %v1173 = vsel %vm422, %v1123, %v1149
        %v1174 = vld [vmem:[%s2 + $0x8] sm:$0xf]
        %v1175 = vld [vmem:[%s2 + $0xc] sm:$0xf]
        %v1180 = vunpack.c.l.b16 %v1124
        %v1181 = vunpack.c.l.b16 %v1125
        %v1182 = vunpack.c.l.b16 %v1174
        %v1183 = vunpack.c.l.b16 %v1175
        %v1184 = vpack.c.b16 %v1181, %v1180
        %v1185 = vpack.c.b16 %v1183, %v1182
        %vm1188 = vcmask 261120
        %v1189 = vsel %vm1188, %v1152, 0
        %v1191 = vsel %vm1188, %v1155, 0
        %v1193 = vsel %vm1188, %v1158, 0
        %v1195 = vsel %vm1188, %v1161, 0
        %v1197 = vsel %vm1188, %v1164, 0
        %v1199 = vsel %vm1188, %v1167, 0
        %v1201 = vsel %vm1188, %v1170, 0
        %v1203 = vsel %vm1188, %v1173, 0
        %1205 = vmatprep.subr.bf16.mxu0 0
        %1206 = vmatpush1.bf16.msra.mxu0 0
        %1207 = vmatprep.subr.bf16.mxu0 0
        %1208 = vmatpush1.bf16.msra.mxu0 0
        %1209 = vmatprep.subr.bf16.mxu0 0
        %1210 = vmatpush1.bf16.msra.mxu0 0
        %1211 = vmatprep.subr.bf16.mxu0 0
        %1212 = vmatpush1.bf16.msra.mxu0 0
        %1213 = vmatprep.subr.bf16.mxu0 0
        %1214 = vmatpush1.bf16.msra.mxu0 0
        %1215 = vmatprep.subr.bf16.mxu0 0
        %1216 = vmatpush1.bf16.msra.mxu0 0
        %1217 = vmatprep.subr.bf16.mxu0 0
        %1218 = vmatpush1.bf16.msra.mxu0 %v1185
        %1219 = vmatprep.subr.bf16.mxu0 0
        %1220 = vmatpush1.bf16.msra.mxu0 %v1184
        %1221 = vmatprep.subr.bf16.mxu0 0
        %1222 = vmatpush2.bf16.msra.mxu0 0
        %1223 = vmatprep.subr.bf16.mxu0 0
        %1224 = vmatpush2.bf16.msra.mxu0 0
        %1225 = vmatprep.subr.bf16.mxu0 0
        %1226 = vmatpush2.bf16.msra.mxu0 0
        %1227 = vmatprep.subr.bf16.mxu0 0
        %1228 = vmatpush2.bf16.msra.mxu0 0
        %1229 = vmatprep.subr.bf16.mxu0 0
        %1230 = vmatpush2.bf16.msra.mxu0 0
        %1231 = vmatprep.subr.bf16.mxu0 0
        %1232 = vmatpush2.bf16.msra.mxu0 0
        %1233 = vmatprep.subr.bf16.mxu0 0
        %1234 = vmatpush2.bf16.msra.mxu0 0
        %1235 = vmatprep.subr.bf16.mxu0 0
        %1236 = vmatpush2.bf16.msra.mxu0 0
        %1237 = vmatprep.mubr.bf16.mxu0 0
        %1238 = vmatmul.mubr.bf16.gmra.mxu0 %v1189
        %v1239 = vpop.f32.mrf.mxu0
        %v1240 = vadd.f32 0.0, %v1239
        %v1241 = vpop.f32.mrf.mxu0
        %v1242 = vpop.f32.mrf.mxu0
        %v1243 = vadd.f32 0.0, %v1242
        %v1244 = vpop.f32.mrf.mxu0
        %1245 = vmatprep.mubr.bf16.mxu0 0
        %1246 = vmatmul.mubr.bf16.gmra.mxu0 %v1191
        %v1247 = vpop.f32.mrf.mxu0
        %v1248 = vadd.f32 0.0, %v1247
        %v1249 = vpop.f32.mrf.mxu0
        %v1250 = vpop.f32.mrf.mxu0
        %v1251 = vadd.f32 0.0, %v1250
        %v1252 = vpop.f32.mrf.mxu0
        %1253 = vmatprep.mubr.bf16.mxu0 0
        %1254 = vmatmul.mubr.bf16.gmra.mxu0 %v1193
        %v1255 = vpop.f32.mrf.mxu0
        %v1256 = vadd.f32 0.0, %v1255
        %v1257 = vpop.f32.mrf.mxu0
        %v1258 = vpop.f32.mrf.mxu0
        %v1259 = vadd.f32 0.0, %v1258
        %v1260 = vpop.f32.mrf.mxu0
        %1261 = vmatprep.mubr.bf16.mxu0 0
        %1262 = vmatmul.mubr.bf16.gmra.mxu0 %v1195
        %v1263 = vpop.f32.mrf.mxu0
        %v1264 = vadd.f32 0.0, %v1263
        %v1265 = vpop.f32.mrf.mxu0
        %v1266 = vpop.f32.mrf.mxu0
        %v1267 = vadd.f32 0.0, %v1266
        %v1268 = vpop.f32.mrf.mxu0
        %1269 = vmatprep.mubr.bf16.mxu0 0
        %1270 = vmatmul.mubr.bf16.gmra.mxu0 %v1197
        %v1271 = vpop.f32.mrf.mxu0
        %v1272 = vadd.f32 0.0, %v1271
        %v1273 = vpop.f32.mrf.mxu0
        %v1274 = vpop.f32.mrf.mxu0
        %v1275 = vadd.f32 0.0, %v1274
        %v1276 = vpop.f32.mrf.mxu0
        %1277 = vmatprep.mubr.bf16.mxu0 0
        %1278 = vmatmul.mubr.bf16.gmra.mxu0 %v1199
        %v1279 = vpop.f32.mrf.mxu0
        %v1280 = vadd.f32 0.0, %v1279
        %v1281 = vpop.f32.mrf.mxu0
        %v1282 = vpop.f32.mrf.mxu0
        %v1283 = vadd.f32 0.0, %v1282
        %v1284 = vpop.f32.mrf.mxu0
        %1285 = vmatprep.mubr.bf16.mxu0 0
        %1286 = vmatmul.mubr.bf16.gmra.mxu0 %v1201
        %v1287 = vpop.f32.mrf.mxu0
        %v1288 = vadd.f32 0.0, %v1287
        %v1289 = vpop.f32.mrf.mxu0
        %v1290 = vpop.f32.mrf.mxu0
        %v1291 = vadd.f32 0.0, %v1290
        %v1292 = vpop.f32.mrf.mxu0
        %1293 = vmatprep.mubr.bf16.mxu0 0
        %1294 = vmatmul.mubr.bf16.gmra.mxu0 %v1203
        %v1295 = vpop.f32.mrf.mxu0
        %v1296 = vadd.f32 0.0, %v1295
        %v1297 = vpop.f32.mrf.mxu0
        %v1298 = vpop.f32.mrf.mxu0
        %v1299 = vadd.f32 0.0, %v1298
        %v1300 = vpop.f32.mrf.mxu0
        %1301 = vdwg.mxu0
        %v1303 = vsel %vm422, %v596, 0
        %v1306 = vsel %vm422, %v597, 0
        %v1309 = vsel %vm422, %v768, 0
        %v1312 = vsel %vm422, %v769, 0
        %v1315 = vsel %vm422, %v940, 0
        %v1318 = vsel %vm422, %v941, 0
        %v1321 = vsel %vm422, %v1112, 0
        %v1324 = vsel %vm422, %v1113, 0
        %1326 = vmatprep.subr.bf16.mxu0 0
        %1327 = vmatpush1.bf16.msra.mxu0 0
        %1328 = vmatprep.subr.bf16.mxu0 0
        %1329 = vmatpush1.bf16.msra.mxu0 0
        %1330 = vmatprep.subr.bf16.mxu0 0
        %1331 = vmatpush1.bf16.msra.mxu0 0
        %1332 = vmatprep.subr.bf16.mxu0 0
        %1333 = vmatpush1.bf16.msra.mxu0 0
        %1334 = vmatprep.subr.bf16.mxu0 0
        %1335 = vmatpush1.bf16.msra.mxu0 0
        %1336 = vmatprep.subr.bf16.mxu0 0
        %1337 = vmatpush1.bf16.msra.mxu0 0
        %1338 = vmatprep.subr.bf16.mxu0 0
        %1339 = vmatpush1.bf16.msra.mxu0 0
        %1340 = vmatprep.subr.bf16.mxu0 0
        %1341 = vmatpush1.bf16.msra.mxu0 %v1184
        %1342 = vmatprep.subr.bf16.mxu0 0
        %1343 = vmatpush2.bf16.msra.mxu0 0
        %1344 = vmatprep.subr.bf16.mxu0 0
        %1345 = vmatpush2.bf16.msra.mxu0 0
        %1346 = vmatprep.subr.bf16.mxu0 0
        %1347 = vmatpush2.bf16.msra.mxu0 0
        %1348 = vmatprep.subr.bf16.mxu0 0
        %1349 = vmatpush2.bf16.msra.mxu0 0
        %1350 = vmatprep.subr.bf16.mxu0 0
        %1351 = vmatpush2.bf16.msra.mxu0 0
        %1352 = vmatprep.subr.bf16.mxu0 0
        %1353 = vmatpush2.bf16.msra.mxu0 0
        %1354 = vmatprep.subr.bf16.mxu0 0
        %1355 = vmatpush2.bf16.msra.mxu0 0
        %1356 = vmatprep.subr.bf16.mxu0 0
        %1357 = vmatpush2.bf16.msra.mxu0 0
        %1358 = vmatprep.mubr.bf16.mxu0 0
        %1359 = vmatmul.mubr.bf16.gmra.mxu0 %v1303
        %v1360 = vpop.f32.mrf.mxu0
        %v1361 = vadd.f32 %v1240, %v1360
        %v1362 = vpop.f32.mrf.mxu0
        %v1363 = vpop.f32.mrf.mxu0
        %v1364 = vadd.f32 %v1243, %v1363
        %v1365 = vpop.f32.mrf.mxu0
        %1366 = vmatprep.mubr.bf16.mxu0 0
        %1367 = vmatmul.mubr.bf16.gmra.mxu0 %v1306
        %v1368 = vpop.f32.mrf.mxu0
        %v1369 = vadd.f32 %v1248, %v1368
        %v1370 = vpop.f32.mrf.mxu0
        %v1371 = vpop.f32.mrf.mxu0
        %v1372 = vadd.f32 %v1251, %v1371
        %v1373 = vpop.f32.mrf.mxu0
        %1374 = vmatprep.mubr.bf16.mxu0 0
        %1375 = vmatmul.mubr.bf16.gmra.mxu0 %v1309
        %v1376 = vpop.f32.mrf.mxu0
        %v1377 = vadd.f32 %v1256, %v1376
        %v1378 = vpop.f32.mrf.mxu0
        %v1379 = vpop.f32.mrf.mxu0
        %v1380 = vadd.f32 %v1259, %v1379
        %v1381 = vpop.f32.mrf.mxu0
        %1382 = vmatprep.mubr.bf16.mxu0 0
        %1383 = vmatmul.mubr.bf16.gmra.mxu0 %v1312
        %v1384 = vpop.f32.mrf.mxu0
        %v1385 = vadd.f32 %v1264, %v1384
        %v1386 = vpop.f32.mrf.mxu0
        %v1387 = vpop.f32.mrf.mxu0
        %v1388 = vadd.f32 %v1267, %v1387
        %v1389 = vpop.f32.mrf.mxu0
        %1390 = vmatprep.mubr.bf16.mxu0 0
        %1391 = vmatmul.mubr.bf16.gmra.mxu0 %v1315
        %v1392 = vpop.f32.mrf.mxu0
        %v1393 = vadd.f32 %v1272, %v1392
        %v1394 = vpop.f32.mrf.mxu0
        %v1395 = vpop.f32.mrf.mxu0
        %v1396 = vadd.f32 %v1275, %v1395
        %v1397 = vpop.f32.mrf.mxu0
        %1398 = vmatprep.mubr.bf16.mxu0 0
        %1399 = vmatmul.mubr.bf16.gmra.mxu0 %v1318
        %v1400 = vpop.f32.mrf.mxu0
        %v1401 = vadd.f32 %v1280, %v1400
        %v1402 = vpop.f32.mrf.mxu0
        %v1403 = vpop.f32.mrf.mxu0
        %v1404 = vadd.f32 %v1283, %v1403
        %v1405 = vpop.f32.mrf.mxu0
        %1406 = vmatprep.mubr.bf16.mxu0 0
        %1407 = vmatmul.mubr.bf16.gmra.mxu0 %v1321
        %v1408 = vpop.f32.mrf.mxu0
        %v1409 = vadd.f32 %v1288, %v1408
        %v1410 = vpop.f32.mrf.mxu0
        %v1411 = vpop.f32.mrf.mxu0
        %v1412 = vadd.f32 %v1291, %v1411
        %v1413 = vpop.f32.mrf.mxu0
        %1414 = vmatprep.mubr.bf16.mxu0 0
        %1415 = vmatmul.mubr.bf16.gmra.mxu0 %v1324
        %v1416 = vpop.f32.mrf.mxu0
        %v1417 = vadd.f32 %v1296, %v1416
        %v1418 = vpop.f32.mrf.mxu0
        %v1419 = vpop.f32.mrf.mxu0
        %v1420 = vadd.f32 %v1299, %v1419
        %v1421 = vpop.f32.mrf.mxu0
        %1422 = vdwg.mxu0
        %1425 = vrot.lane.b32.xlu0 %v1369, 112
        %v1426 = vpop.permute.xlu0 %1425
        %1427 = vrot.lane.b32.xlu0 %v1372, 112
        %v1428 = vpop.permute.xlu0 %1427
        %v1431 = vadd.f32 %v1361, %v1426
        %v1432 = vadd.f32 %v1364, %v1428
        %1435 = vrot.lane.b32.xlu0 %v1361, 112
        %v1436 = vpop.permute.xlu0 %1435
        %1437 = vrot.lane.b32.xlu0 %v1364, 112
        %v1438 = vpop.permute.xlu0 %1437
        %v1441 = vsub.f32 %v1369, %v1436
        %v1442 = vsub.f32 %v1372, %v1438
        %v1443 = vmul.f32 %v400, %v1431
        %v1444 = vmul.f32 %v401, %v1432
        %v1445 = vmul.f32 %v402, %v1441
        %v1446 = vmul.f32 %v403, %v1442
        %v1447 = vsub.f32 %v1443, %v1445
        %v1448 = vsub.f32 %v1444, %v1446
        %v1449 = vmul.f32 %v400, %v1441
        %v1450 = vmul.f32 %v401, %v1442
        %v1451 = vmul.f32 %v402, %v1431
        %v1452 = vmul.f32 %v403, %v1432
        %v1453 = vadd.f32 %v1449, %v1451
        %v1454 = vadd.f32 %v1450, %v1452
        %1457 = vrot.lane.b32.xlu0 %v1453, 16
        %v1458 = vpop.permute.xlu0 %1457
        %1459 = vrot.lane.b32.xlu0 %v1454, 16
        %v1460 = vpop.permute.xlu0 %1459
        %v1463 = vsel %vm422, %v1447, %v1458
        %v1464 = vsel %vm422, %v1448, %v1460
        %v1465 = vpack.c.bf16 %v1464, %v1463
        %v1466 = vunpack.c.l.bf16 %v1465
        %v1467 = vunpack.c.h.bf16 %v1465
        %v1468 = vsub.f32 %v1463, %v1466
        %v1469 = vsub.f32 %v1464, %v1467
        %v1470 = vpack.c.bf16 %v1469, %v1468
        %v1473 = vunpack.c.l.b16 %v398
        %v1474 = vunpack.c.l.b16 %v399
        %v1475 = vpack.c.b16 %v1474, %v1473
        %v1477 = vsel %vm422, %v1475, 0
        %1479 = vmatprep.subr.bf16.mxu0 0
        %1480 = vmatpush1.bf16.msra.mxu0 0
        %1481 = vmatprep.subr.bf16.mxu0 0
        %1482 = vmatpush1.bf16.msra.mxu0 0
        %1483 = vmatprep.subr.bf16.mxu0 0
        %1484 = vmatpush1.bf16.msra.mxu0 0
        %1485 = vmatprep.subr.bf16.mxu0 0
        %1486 = vmatpush1.bf16.msra.mxu0 0
        %1487 = vmatprep.subr.bf16.mxu0 0
        %1488 = vmatpush1.bf16.msra.mxu0 0
        %1489 = vmatprep.subr.bf16.mxu0 0
        %1490 = vmatpush1.bf16.msra.mxu0 0
        %1491 = vmatprep.subr.bf16.mxu0 0
        %1492 = vmatpush1.bf16.msra.mxu0 0
        %1493 = vmatprep.subr.bf16.mxu0 0
        %1494 = vmatpush1.bf16.msra.mxu0 %v1465
        %1495 = vmatprep.subr.bf16.mxu0 0
        %1496 = vmatpush2.bf16.msra.mxu0 0
        %1497 = vmatprep.subr.bf16.mxu0 0
        %1498 = vmatpush2.bf16.msra.mxu0 0
        %1499 = vmatprep.subr.bf16.mxu0 0
        %1500 = vmatpush2.bf16.msra.mxu0 0
        %1501 = vmatprep.subr.bf16.mxu0 0
        %1502 = vmatpush2.bf16.msra.mxu0 0
        %1503 = vmatprep.subr.bf16.mxu0 0
        %1504 = vmatpush2.bf16.msra.mxu0 0
        %1505 = vmatprep.subr.bf16.mxu0 0
        %1506 = vmatpush2.bf16.msra.mxu0 0
        %1507 = vmatprep.subr.bf16.mxu0 0
        %1508 = vmatpush2.bf16.msra.mxu0 0
        %1509 = vmatprep.subr.bf16.mxu0 0
        %1510 = vmatpush2.bf16.msra.mxu0 0
        %1511 = vmatprep.mubr.bf16.mxu0 0
        %1512 = vmatmul.mubr.bf16.gmra.mxu0 %v1477
        %v1513 = vpop.f32.mrf.mxu0
        %v1514 = vadd.f32 0.0, %v1513
        %v1515 = vpop.f32.mrf.mxu0
        %v1516 = vpop.f32.mrf.mxu0
        %v1517 = vadd.f32 0.0, %v1516
        %v1518 = vpop.f32.mrf.mxu0
        %1519 = vdwg.mxu0
        %v1522 = vunpack.c.l.b16 %v395
        %v1523 = vunpack.c.l.b16 %v396
        %v1524 = vpack.c.b16 %v1523, %v1522
        %v1526 = vsel %vm422, %v1524, 0
        %1528 = vmatprep.subr.bf16.mxu0 0
        %1529 = vmatpush1.bf16.msra.mxu0 0
        %1530 = vmatprep.subr.bf16.mxu0 0
        %1531 = vmatpush1.bf16.msra.mxu0 0
        %1532 = vmatprep.subr.bf16.mxu0 0
        %1533 = vmatpush1.bf16.msra.mxu0 0
        %1534 = vmatprep.subr.bf16.mxu0 0
        %1535 = vmatpush1.bf16.msra.mxu0 0
        %1536 = vmatprep.subr.bf16.mxu0 0
        %1537 = vmatpush1.bf16.msra.mxu0 0
        %1538 = vmatprep.subr.bf16.mxu0 0
        %1539 = vmatpush1.bf16.msra.mxu0 0
        %1540 = vmatprep.subr.bf16.mxu0 0
        %1541 = vmatpush1.bf16.msra.mxu0 0
        %1542 = vmatprep.subr.bf16.mxu0 0
        %1543 = vmatpush1.bf16.msra.mxu0 %v1465
        %1544 = vmatprep.subr.bf16.mxu0 0
        %1545 = vmatpush2.bf16.msra.mxu0 0
        %1546 = vmatprep.subr.bf16.mxu0 0
        %1547 = vmatpush2.bf16.msra.mxu0 0
        %1548 = vmatprep.subr.bf16.mxu0 0
        %1549 = vmatpush2.bf16.msra.mxu0 0
        %1550 = vmatprep.subr.bf16.mxu0 0
        %1551 = vmatpush2.bf16.msra.mxu0 0
        %1552 = vmatprep.subr.bf16.mxu0 0
        %1553 = vmatpush2.bf16.msra.mxu0 0
        %1554 = vmatprep.subr.bf16.mxu0 0
        %1555 = vmatpush2.bf16.msra.mxu0 0
        %1556 = vmatprep.subr.bf16.mxu0 0
        %1557 = vmatpush2.bf16.msra.mxu0 0
        %1558 = vmatprep.subr.bf16.mxu0 0
        %1559 = vmatpush2.bf16.msra.mxu0 0
        %1560 = vmatprep.mubr.bf16.mxu0 0
        %1561 = vmatmul.mubr.bf16.gmra.mxu0 %v1526
        %v1562 = vpop.f32.mrf.mxu0
        %v1563 = vadd.f32 %v1514, %v1562
        %v1564 = vpop.f32.mrf.mxu0
        %v1565 = vpop.f32.mrf.mxu0
        %v1566 = vadd.f32 %v1517, %v1565
        %v1567 = vpop.f32.mrf.mxu0
        %1568 = vdwg.mxu0
        %1569 = vmatprep.subr.bf16.mxu0 0
        %1570 = vmatpush1.bf16.msra.mxu0 0
        %1571 = vmatprep.subr.bf16.mxu0 0
        %1572 = vmatpush1.bf16.msra.mxu0 0
        %1573 = vmatprep.subr.bf16.mxu0 0
        %1574 = vmatpush1.bf16.msra.mxu0 0
        %1575 = vmatprep.subr.bf16.mxu0 0
        %1576 = vmatpush1.bf16.msra.mxu0 0
        %1577 = vmatprep.subr.bf16.mxu0 0
        %1578 = vmatpush1.bf16.msra.mxu0 0
        %1579 = vmatprep.subr.bf16.mxu0 0
        %1580 = vmatpush1.bf16.msra.mxu0 0
        %1581 = vmatprep.subr.bf16.mxu0 0
        %1582 = vmatpush1.bf16.msra.mxu0 0
        %1583 = vmatprep.subr.bf16.mxu0 0
        %1584 = vmatpush1.bf16.msra.mxu0 %v1470
        %1585 = vmatprep.subr.bf16.mxu0 0
        %1586 = vmatpush2.bf16.msra.mxu0 0
        %1587 = vmatprep.subr.bf16.mxu0 0
        %1588 = vmatpush2.bf16.msra.mxu0 0
        %1589 = vmatprep.subr.bf16.mxu0 0
        %1590 = vmatpush2.bf16.msra.mxu0 0
        %1591 = vmatprep.subr.bf16.mxu0 0
        %1592 = vmatpush2.bf16.msra.mxu0 0
        %1593 = vmatprep.subr.bf16.mxu0 0
        %1594 = vmatpush2.bf16.msra.mxu0 0
        %1595 = vmatprep.subr.bf16.mxu0 0
        %1596 = vmatpush2.bf16.msra.mxu0 0
        %1597 = vmatprep.subr.bf16.mxu0 0
        %1598 = vmatpush2.bf16.msra.mxu0 0
        %1599 = vmatprep.subr.bf16.mxu0 0
        %1600 = vmatpush2.bf16.msra.mxu0 0
        %1601 = vmatprep.mubr.bf16.mxu0 0
        %1602 = vmatmul.mubr.bf16.gmra.mxu0 %v1526
        %v1603 = vpop.f32.mrf.mxu0
        %v1604 = vadd.f32 0.0, %v1603
        %v1605 = vpop.f32.mrf.mxu0
        %v1606 = vpop.f32.mrf.mxu0
        %v1607 = vadd.f32 0.0, %v1606
        %v1608 = vpop.f32.mrf.mxu0
        %1609 = vdwg.mxu0
        %v1610 = vadd.f32 %v1563, %v1604
        %v1611 = vadd.f32 %v1566, %v1607
        %1613 = vrot.lane.b32.xlu0 %v1611, 112
        %v1614 = vpop.permute.xlu0 %1613
        %v1616 = vsub.f32 %v1610, %v1614
        %1617 = vrot.lane.b32.xlu0 %v1611, 16
        %v1618 = vpop.permute.xlu0 %1617
        %v1620 = vadd.f32 %v1610, %v1618
        %v1621 = vsel %vm422, %v1616, %v1620
        %v1622 = vpack.c.bf16 %v1621, %v1621
        %v1623 = vunpack.c.l.bf16 %v1622
        %v1624 = vsub.f32 %v1621, %v1623
        %v1625 = vpack.c.bf16 %v1624, %v1624
        %1628 = vrot.lane.b32.xlu0 %v1385, 112
        %v1629 = vpop.permute.xlu0 %1628
        %1630 = vrot.lane.b32.xlu0 %v1388, 112
        %v1631 = vpop.permute.xlu0 %1630
        %v1634 = vadd.f32 %v1377, %v1629
        %v1635 = vadd.f32 %v1380, %v1631
        %1638 = vrot.lane.b32.xlu0 %v1377, 112
        %v1639 = vpop.permute.xlu0 %1638
        %1640 = vrot.lane.b32.xlu0 %v1380, 112
        %v1641 = vpop.permute.xlu0 %1640
        %v1644 = vsub.f32 %v1385, %v1639
        %v1645 = vsub.f32 %v1388, %v1641
        %v1646 = vmul.f32 %v400, %v1634
        %v1647 = vmul.f32 %v401, %v1635
        %v1648 = vmul.f32 %v402, %v1644
        %v1649 = vmul.f32 %v403, %v1645
        %v1650 = vsub.f32 %v1646, %v1648
        %v1651 = vsub.f32 %v1647, %v1649
        %v1652 = vmul.f32 %v400, %v1644
        %v1653 = vmul.f32 %v401, %v1645
        %v1654 = vmul.f32 %v402, %v1634
        %v1655 = vmul.f32 %v403, %v1635
        %v1656 = vadd.f32 %v1652, %v1654
        %v1657 = vadd.f32 %v1653, %v1655
        %1660 = vrot.lane.b32.xlu0 %v1656, 16
        %v1661 = vpop.permute.xlu0 %1660
        %1662 = vrot.lane.b32.xlu0 %v1657, 16
        %v1663 = vpop.permute.xlu0 %1662
        %v1666 = vsel %vm422, %v1650, %v1661
        %v1667 = vsel %vm422, %v1651, %v1663
        %v1668 = vpack.c.bf16 %v1667, %v1666
        %v1669 = vunpack.c.l.bf16 %v1668
        %v1670 = vunpack.c.h.bf16 %v1668
        %v1671 = vsub.f32 %v1666, %v1669
        %v1672 = vsub.f32 %v1667, %v1670
        %v1673 = vpack.c.bf16 %v1672, %v1671
        %1674 = vmatprep.subr.bf16.mxu0 0
        %1675 = vmatpush1.bf16.msra.mxu0 0
        %1676 = vmatprep.subr.bf16.mxu0 0
        %1677 = vmatpush1.bf16.msra.mxu0 0
        %1678 = vmatprep.subr.bf16.mxu0 0
        %1679 = vmatpush1.bf16.msra.mxu0 0
        %1680 = vmatprep.subr.bf16.mxu0 0
        %1681 = vmatpush1.bf16.msra.mxu0 0
        %1682 = vmatprep.subr.bf16.mxu0 0
        %1683 = vmatpush1.bf16.msra.mxu0 0
        %1684 = vmatprep.subr.bf16.mxu0 0
        %1685 = vmatpush1.bf16.msra.mxu0 0
        %1686 = vmatprep.subr.bf16.mxu0 0
        %1687 = vmatpush1.bf16.msra.mxu0 0
        %1688 = vmatprep.subr.bf16.mxu0 0
        %1689 = vmatpush1.bf16.msra.mxu0 %v1668
        %1690 = vmatprep.subr.bf16.mxu0 0
        %1691 = vmatpush2.bf16.msra.mxu0 0
        %1692 = vmatprep.subr.bf16.mxu0 0
        %1693 = vmatpush2.bf16.msra.mxu0 0
        %1694 = vmatprep.subr.bf16.mxu0 0
        %1695 = vmatpush2.bf16.msra.mxu0 0
        %1696 = vmatprep.subr.bf16.mxu0 0
        %1697 = vmatpush2.bf16.msra.mxu0 0
        %1698 = vmatprep.subr.bf16.mxu0 0
        %1699 = vmatpush2.bf16.msra.mxu0 0
        %1700 = vmatprep.subr.bf16.mxu0 0
        %1701 = vmatpush2.bf16.msra.mxu0 0
        %1702 = vmatprep.subr.bf16.mxu0 0
        %1703 = vmatpush2.bf16.msra.mxu0 0
        %1704 = vmatprep.subr.bf16.mxu0 0
        %1705 = vmatpush2.bf16.msra.mxu0 0
        %1706 = vmatprep.mubr.bf16.mxu0 0
        %1707 = vmatmul.mubr.bf16.gmra.mxu0 %v1477
        %v1708 = vpop.f32.mrf.mxu0
        %v1709 = vadd.f32 0.0, %v1708
        %v1710 = vpop.f32.mrf.mxu0
        %v1711 = vpop.f32.mrf.mxu0
        %v1712 = vadd.f32 0.0, %v1711
        %v1713 = vpop.f32.mrf.mxu0
        %1714 = vdwg.mxu0
        %1715 = vmatprep.subr.bf16.mxu0 0
        %1716 = vmatpush1.bf16.msra.mxu0 0
        %1717 = vmatprep.subr.bf16.mxu0 0
        %1718 = vmatpush1.bf16.msra.mxu0 0
        %1719 = vmatprep.subr.bf16.mxu0 0
        %1720 = vmatpush1.bf16.msra.mxu0 0
        %1721 = vmatprep.subr.bf16.mxu0 0
        %1722 = vmatpush1.bf16.msra.mxu0 0
        %1723 = vmatprep.subr.bf16.mxu0 0
        %1724 = vmatpush1.bf16.msra.mxu0 0
        %1725 = vmatprep.subr.bf16.mxu0 0
        %1726 = vmatpush1.bf16.msra.mxu0 0
        %1727 = vmatprep.subr.bf16.mxu0 0
        %1728 = vmatpush1.bf16.msra.mxu0 0
        %1729 = vmatprep.subr.bf16.mxu0 0
        %1730 = vmatpush1.bf16.msra.mxu0 %v1668
        %1731 = vmatprep.subr.bf16.mxu0 0
        %1732 = vmatpush2.bf16.msra.mxu0 0
        %1733 = vmatprep.subr.bf16.mxu0 0
        %1734 = vmatpush2.bf16.msra.mxu0 0
        %1735 = vmatprep.subr.bf16.mxu0 0
        %1736 = vmatpush2.bf16.msra.mxu0 0
        %1737 = vmatprep.subr.bf16.mxu0 0
        %1738 = vmatpush2.bf16.msra.mxu0 0
        %1739 = vmatprep.subr.bf16.mxu0 0
        %1740 = vmatpush2.bf16.msra.mxu0 0
        %1741 = vmatprep.subr.bf16.mxu0 0
        %1742 = vmatpush2.bf16.msra.mxu0 0
        %1743 = vmatprep.subr.bf16.mxu0 0
        %1744 = vmatpush2.bf16.msra.mxu0 0
        %1745 = vmatprep.subr.bf16.mxu0 0
        %1746 = vmatpush2.bf16.msra.mxu0 0
        %1747 = vmatprep.mubr.bf16.mxu0 0
        %1748 = vmatmul.mubr.bf16.gmra.mxu0 %v1526
        %v1749 = vpop.f32.mrf.mxu0
        %v1750 = vadd.f32 %v1709, %v1749
        %v1751 = vpop.f32.mrf.mxu0
        %v1752 = vpop.f32.mrf.mxu0
        %v1753 = vadd.f32 %v1712, %v1752
        %v1754 = vpop.f32.mrf.mxu0
        %1755 = vdwg.mxu0
        %1756 = vmatprep.subr.bf16.mxu0 0
        %1757 = vmatpush1.bf16.msra.mxu0 0
        %1758 = vmatprep.subr.bf16.mxu0 0
        %1759 = vmatpush1.bf16.msra.mxu0 0
        %1760 = vmatprep.subr.bf16.mxu0 0
        %1761 = vmatpush1.bf16.msra.mxu0 0
        %1762 = vmatprep.subr.bf16.mxu0 0
        %1763 = vmatpush1.bf16.msra.mxu0 0
        %1764 = vmatprep.subr.bf16.mxu0 0
        %1765 = vmatpush1.bf16.msra.mxu0 0
        %1766 = vmatprep.subr.bf16.mxu0 0
        %1767 = vmatpush1.bf16.msra.mxu0 0
        %1768 = vmatprep.subr.bf16.mxu0 0
        %1769 = vmatpush1.bf16.msra.mxu0 0
        %1770 = vmatprep.subr.bf16.mxu0 0
        %1771 = vmatpush1.bf16.msra.mxu0 %v1673
        %1772 = vmatprep.subr.bf16.mxu0 0
        %1773 = vmatpush2.bf16.msra.mxu0 0
        %1774 = vmatprep.subr.bf16.mxu0 0
        %1775 = vmatpush2.bf16.msra.mxu0 0
        %1776 = vmatprep.subr.bf16.mxu0 0
        %1777 = vmatpush2.bf16.msra.mxu0 0
        %1778 = vmatprep.subr.bf16.mxu0 0
        %1779 = vmatpush2.bf16.msra.mxu0 0
        %1780 = vmatprep.subr.bf16.mxu0 0
        %1781 = vmatpush2.bf16.msra.mxu0 0
        %1782 = vmatprep.subr.bf16.mxu0 0
        %1783 = vmatpush2.bf16.msra.mxu0 0
        %1784 = vmatprep.subr.bf16.mxu0 0
        %1785 = vmatpush2.bf16.msra.mxu0 0
        %1786 = vmatprep.subr.bf16.mxu0 0
        %1787 = vmatpush2.bf16.msra.mxu0 0
        %1788 = vmatprep.mubr.bf16.mxu0 0
        %1789 = vmatmul.mubr.bf16.gmra.mxu0 %v1526
        %v1790 = vpop.f32.mrf.mxu0
        %v1791 = vadd.f32 0.0, %v1790
        %v1792 = vpop.f32.mrf.mxu0
        %v1793 = vpop.f32.mrf.mxu0
        %v1794 = vadd.f32 0.0, %v1793
        %v1795 = vpop.f32.mrf.mxu0
        %1796 = vdwg.mxu0
        %v1797 = vadd.f32 %v1750, %v1791
        %v1798 = vadd.f32 %v1753, %v1794
        %1800 = vrot.lane.b32.xlu0 %v1798, 112
        %v1801 = vpop.permute.xlu0 %1800
        %v1803 = vsub.f32 %v1797, %v1801
        %1804 = vrot.lane.b32.xlu0 %v1798, 16
        %v1805 = vpop.permute.xlu0 %1804
        %v1807 = vadd.f32 %v1797, %v1805
        %v1808 = vsel %vm422, %v1803, %v1807
        %v1809 = vpack.c.bf16 %v1808, %v1808
        %v1810 = vunpack.c.l.bf16 %v1809
        %v1811 = vsub.f32 %v1808, %v1810
        %v1812 = vpack.c.bf16 %v1811, %v1811
        %1815 = vrot.lane.b32.xlu0 %v1401, 112
        %v1816 = vpop.permute.xlu0 %1815
        %1817 = vrot.lane.b32.xlu0 %v1404, 112
        %v1818 = vpop.permute.xlu0 %1817
        %v1821 = vadd.f32 %v1393, %v1816
        %v1822 = vadd.f32 %v1396, %v1818
        %1825 = vrot.lane.b32.xlu0 %v1393, 112
        %v1826 = vpop.permute.xlu0 %1825
        %1827 = vrot.lane.b32.xlu0 %v1396, 112
        %v1828 = vpop.permute.xlu0 %1827
        %v1831 = vsub.f32 %v1401, %v1826
        %v1832 = vsub.f32 %v1404, %v1828
        %v1833 = vmul.f32 %v400, %v1821
        %v1834 = vmul.f32 %v401, %v1822
        %v1835 = vmul.f32 %v402, %v1831
        %v1836 = vmul.f32 %v403, %v1832
        %v1837 = vsub.f32 %v1833, %v1835
        %v1838 = vsub.f32 %v1834, %v1836
        %v1839 = vmul.f32 %v400, %v1831
        %v1840 = vmul.f32 %v401, %v1832
        %v1841 = vmul.f32 %v402, %v1821
        %v1842 = vmul.f32 %v403, %v1822
        %v1843 = vadd.f32 %v1839, %v1841
        %v1844 = vadd.f32 %v1840, %v1842
        %1847 = vrot.lane.b32.xlu0 %v1843, 16
        %v1848 = vpop.permute.xlu0 %1847
        %1849 = vrot.lane.b32.xlu0 %v1844, 16
        %v1850 = vpop.permute.xlu0 %1849
        %v1853 = vsel %vm422, %v1837, %v1848
        %v1854 = vsel %vm422, %v1838, %v1850
        %v1855 = vpack.c.bf16 %v1854, %v1853
        %v1856 = vunpack.c.l.bf16 %v1855
        %v1857 = vunpack.c.h.bf16 %v1855
        %v1858 = vsub.f32 %v1853, %v1856
        %v1859 = vsub.f32 %v1854, %v1857
        %v1860 = vpack.c.bf16 %v1859, %v1858
        %1861 = vmatprep.subr.bf16.mxu0 0
        %1862 = vmatpush1.bf16.msra.mxu0 0
        %1863 = vmatprep.subr.bf16.mxu0 0
        %1864 = vmatpush1.bf16.msra.mxu0 0
        %1865 = vmatprep.subr.bf16.mxu0 0
        %1866 = vmatpush1.bf16.msra.mxu0 0
        %1867 = vmatprep.subr.bf16.mxu0 0
        %1868 = vmatpush1.bf16.msra.mxu0 0
        %1869 = vmatprep.subr.bf16.mxu0 0
        %1870 = vmatpush1.bf16.msra.mxu0 0
        %1871 = vmatprep.subr.bf16.mxu0 0
        %1872 = vmatpush1.bf16.msra.mxu0 0
        %1873 = vmatprep.subr.bf16.mxu0 0
        %1874 = vmatpush1.bf16.msra.mxu0 0
        %1875 = vmatprep.subr.bf16.mxu0 0
        %1876 = vmatpush1.bf16.msra.mxu0 %v1855
        %1877 = vmatprep.subr.bf16.mxu0 0
        %1878 = vmatpush2.bf16.msra.mxu0 0
        %1879 = vmatprep.subr.bf16.mxu0 0
        %1880 = vmatpush2.bf16.msra.mxu0 0
        %1881 = vmatprep.subr.bf16.mxu0 0
        %1882 = vmatpush2.bf16.msra.mxu0 0
        %1883 = vmatprep.subr.bf16.mxu0 0
        %1884 = vmatpush2.bf16.msra.mxu0 0
        %1885 = vmatprep.subr.bf16.mxu0 0
        %1886 = vmatpush2.bf16.msra.mxu0 0
        %1887 = vmatprep.subr.bf16.mxu0 0
        %1888 = vmatpush2.bf16.msra.mxu0 0
        %1889 = vmatprep.subr.bf16.mxu0 0
        %1890 = vmatpush2.bf16.msra.mxu0 0
        %1891 = vmatprep.subr.bf16.mxu0 0
        %1892 = vmatpush2.bf16.msra.mxu0 0
        %1893 = vmatprep.mubr.bf16.mxu0 0
        %1894 = vmatmul.mubr.bf16.gmra.mxu0 %v1477
        %v1895 = vpop.f32.mrf.mxu0
        %v1896 = vadd.f32 0.0, %v1895
        %v1897 = vpop.f32.mrf.mxu0
        %v1898 = vpop.f32.mrf.mxu0
        %v1899 = vadd.f32 0.0, %v1898
        %v1900 = vpop.f32.mrf.mxu0
        %1901 = vdwg.mxu0
        %1902 = vmatprep.subr.bf16.mxu0 0
        %1903 = vmatpush1.bf16.msra.mxu0 0
        %1904 = vmatprep.subr.bf16.mxu0 0
        %1905 = vmatpush1.bf16.msra.mxu0 0
        %1906 = vmatprep.subr.bf16.mxu0 0
        %1907 = vmatpush1.bf16.msra.mxu0 0
        %1908 = vmatprep.subr.bf16.mxu0 0
        %1909 = vmatpush1.bf16.msra.mxu0 0
        %1910 = vmatprep.subr.bf16.mxu0 0
        %1911 = vmatpush1.bf16.msra.mxu0 0
        %1912 = vmatprep.subr.bf16.mxu0 0
        %1913 = vmatpush1.bf16.msra.mxu0 0
        %1914 = vmatprep.subr.bf16.mxu0 0
        %1915 = vmatpush1.bf16.msra.mxu0 0
        %1916 = vmatprep.subr.bf16.mxu0 0
        %1917 = vmatpush1.bf16.msra.mxu0 %v1855
        %1918 = vmatprep.subr.bf16.mxu0 0
        %1919 = vmatpush2.bf16.msra.mxu0 0
        %1920 = vmatprep.subr.bf16.mxu0 0
        %1921 = vmatpush2.bf16.msra.mxu0 0
        %1922 = vmatprep.subr.bf16.mxu0 0
        %1923 = vmatpush2.bf16.msra.mxu0 0
        %1924 = vmatprep.subr.bf16.mxu0 0
        %1925 = vmatpush2.bf16.msra.mxu0 0
        %1926 = vmatprep.subr.bf16.mxu0 0
        %1927 = vmatpush2.bf16.msra.mxu0 0
        %1928 = vmatprep.subr.bf16.mxu0 0
        %1929 = vmatpush2.bf16.msra.mxu0 0
        %1930 = vmatprep.subr.bf16.mxu0 0
        %1931 = vmatpush2.bf16.msra.mxu0 0
        %1932 = vmatprep.subr.bf16.mxu0 0
        %1933 = vmatpush2.bf16.msra.mxu0 0
        %1934 = vmatprep.mubr.bf16.mxu0 0
        %1935 = vmatmul.mubr.bf16.gmra.mxu0 %v1526
        %v1936 = vpop.f32.mrf.mxu0
        %v1937 = vadd.f32 %v1896, %v1936
        %v1938 = vpop.f32.mrf.mxu0
        %v1939 = vpop.f32.mrf.mxu0
        %v1940 = vadd.f32 %v1899, %v1939
        %v1941 = vpop.f32.mrf.mxu0
        %1942 = vdwg.mxu0
        %1943 = vmatprep.subr.bf16.mxu0 0
        %1944 = vmatpush1.bf16.msra.mxu0 0
        %1945 = vmatprep.subr.bf16.mxu0 0
        %1946 = vmatpush1.bf16.msra.mxu0 0
        %1947 = vmatprep.subr.bf16.mxu0 0
        %1948 = vmatpush1.bf16.msra.mxu0 0
        %1949 = vmatprep.subr.bf16.mxu0 0
        %1950 = vmatpush1.bf16.msra.mxu0 0
        %1951 = vmatprep.subr.bf16.mxu0 0
        %1952 = vmatpush1.bf16.msra.mxu0 0
        %1953 = vmatprep.subr.bf16.mxu0 0
        %1954 = vmatpush1.bf16.msra.mxu0 0
        %1955 = vmatprep.subr.bf16.mxu0 0
        %1956 = vmatpush1.bf16.msra.mxu0 0
        %1957 = vmatprep.subr.bf16.mxu0 0
        %1958 = vmatpush1.bf16.msra.mxu0 %v1860
        %1959 = vmatprep.subr.bf16.mxu0 0
        %1960 = vmatpush2.bf16.msra.mxu0 0
        %1961 = vmatprep.subr.bf16.mxu0 0
        %1962 = vmatpush2.bf16.msra.mxu0 0
        %1963 = vmatprep.subr.bf16.mxu0 0
        %1964 = vmatpush2.bf16.msra.mxu0 0
        %1965 = vmatprep.subr.bf16.mxu0 0
        %1966 = vmatpush2.bf16.msra.mxu0 0
        %1967 = vmatprep.subr.bf16.mxu0 0
        %1968 = vmatpush2.bf16.msra.mxu0 0
        %1969 = vmatprep.subr.bf16.mxu0 0
        %1970 = vmatpush2.bf16.msra.mxu0 0
        %1971 = vmatprep.subr.bf16.mxu0 0
        %1972 = vmatpush2.bf16.msra.mxu0 0
        %1973 = vmatprep.subr.bf16.mxu0 0
        %1974 = vmatpush2.bf16.msra.mxu0 0
        %1975 = vmatprep.mubr.bf16.mxu0 0
        %1976 = vmatmul.mubr.bf16.gmra.mxu0 %v1526
        %v1977 = vpop.f32.mrf.mxu0
        %v1978 = vadd.f32 0.0, %v1977
        %v1979 = vpop.f32.mrf.mxu0
        %v1980 = vpop.f32.mrf.mxu0
        %v1981 = vadd.f32 0.0, %v1980
        %v1982 = vpop.f32.mrf.mxu0
        %1983 = vdwg.mxu0
        %v1984 = vadd.f32 %v1937, %v1978
        %v1985 = vadd.f32 %v1940, %v1981
        %1987 = vrot.lane.b32.xlu0 %v1985, 112
        %v1988 = vpop.permute.xlu0 %1987
        %v1990 = vsub.f32 %v1984, %v1988
        %1991 = vrot.lane.b32.xlu0 %v1985, 16
        %v1992 = vpop.permute.xlu0 %1991
        %v1994 = vadd.f32 %v1984, %v1992
        %v1995 = vsel %vm422, %v1990, %v1994
        %v1996 = vpack.c.bf16 %v1995, %v1995
        %v1997 = vunpack.c.l.bf16 %v1996
        %v1998 = vsub.f32 %v1995, %v1997
        %v1999 = vpack.c.bf16 %v1998, %v1998
        %2002 = vrot.lane.b32.xlu0 %v1417, 112
        %v2003 = vpop.permute.xlu0 %2002
        %2004 = vrot.lane.b32.xlu0 %v1420, 112
        %v2005 = vpop.permute.xlu0 %2004
        %v2008 = vadd.f32 %v1409, %v2003
        %v2009 = vadd.f32 %v1412, %v2005
        %2012 = vrot.lane.b32.xlu0 %v1409, 112
        %v2013 = vpop.permute.xlu0 %2012
        %2014 = vrot.lane.b32.xlu0 %v1412, 112
        %v2015 = vpop.permute.xlu0 %2014
        %v2018 = vsub.f32 %v1417, %v2013
        %v2019 = vsub.f32 %v1420, %v2015
        %v2020 = vmul.f32 %v400, %v2008
        %v2021 = vmul.f32 %v401, %v2009
        %v2022 = vmul.f32 %v402, %v2018
        %v2023 = vmul.f32 %v403, %v2019
        %v2024 = vsub.f32 %v2020, %v2022
        %v2025 = vsub.f32 %v2021, %v2023
        %v2026 = vmul.f32 %v400, %v2018
        %v2027 = vmul.f32 %v401, %v2019
        %v2028 = vmul.f32 %v402, %v2008
        %v2029 = vmul.f32 %v403, %v2009
        %v2030 = vadd.f32 %v2026, %v2028
        %v2031 = vadd.f32 %v2027, %v2029
        %2034 = vrot.lane.b32.xlu0 %v2030, 16
        %v2035 = vpop.permute.xlu0 %2034
        %2036 = vrot.lane.b32.xlu0 %v2031, 16
        %v2037 = vpop.permute.xlu0 %2036
        %v2040 = vsel %vm422, %v2024, %v2035
        %v2041 = vsel %vm422, %v2025, %v2037
        %v2042 = vpack.c.bf16 %v2041, %v2040
        %v2043 = vunpack.c.l.bf16 %v2042
        %v2044 = vunpack.c.h.bf16 %v2042
        %v2045 = vsub.f32 %v2040, %v2043
        %v2046 = vsub.f32 %v2041, %v2044
        %v2047 = vpack.c.bf16 %v2046, %v2045
        %2048 = vmatprep.subr.bf16.mxu0 0
        %2049 = vmatpush1.bf16.msra.mxu0 0
        %2050 = vmatprep.subr.bf16.mxu0 0
        %2051 = vmatpush1.bf16.msra.mxu0 0
        %2052 = vmatprep.subr.bf16.mxu0 0
        %2053 = vmatpush1.bf16.msra.mxu0 0
        %2054 = vmatprep.subr.bf16.mxu0 0
        %2055 = vmatpush1.bf16.msra.mxu0 0
        %2056 = vmatprep.subr.bf16.mxu0 0
        %2057 = vmatpush1.bf16.msra.mxu0 0
        %2058 = vmatprep.subr.bf16.mxu0 0
        %2059 = vmatpush1.bf16.msra.mxu0 0
        %2060 = vmatprep.subr.bf16.mxu0 0
        %2061 = vmatpush1.bf16.msra.mxu0 0
        %2062 = vmatprep.subr.bf16.mxu0 0
        %2063 = vmatpush1.bf16.msra.mxu0 %v2042
        %2064 = vmatprep.subr.bf16.mxu0 0
        %2065 = vmatpush2.bf16.msra.mxu0 0
        %2066 = vmatprep.subr.bf16.mxu0 0
        %2067 = vmatpush2.bf16.msra.mxu0 0
        %2068 = vmatprep.subr.bf16.mxu0 0
        %2069 = vmatpush2.bf16.msra.mxu0 0
        %2070 = vmatprep.subr.bf16.mxu0 0
        %2071 = vmatpush2.bf16.msra.mxu0 0
        %2072 = vmatprep.subr.bf16.mxu0 0
        %2073 = vmatpush2.bf16.msra.mxu0 0
        %2074 = vmatprep.subr.bf16.mxu0 0
        %2075 = vmatpush2.bf16.msra.mxu0 0
        %2076 = vmatprep.subr.bf16.mxu0 0
        %2077 = vmatpush2.bf16.msra.mxu0 0
        %2078 = vmatprep.subr.bf16.mxu0 0
        %2079 = vmatpush2.bf16.msra.mxu0 0
        %2080 = vmatprep.mubr.bf16.mxu0 0
        %2081 = vmatmul.mubr.bf16.gmra.mxu0 %v1477
        %v2082 = vpop.f32.mrf.mxu0
        %v2083 = vadd.f32 0.0, %v2082
        %v2084 = vpop.f32.mrf.mxu0
        %v2085 = vpop.f32.mrf.mxu0
        %v2086 = vadd.f32 0.0, %v2085
        %v2087 = vpop.f32.mrf.mxu0
        %2088 = vdwg.mxu0
        %2089 = vmatprep.subr.bf16.mxu0 0
        %2090 = vmatpush1.bf16.msra.mxu0 0
        %2091 = vmatprep.subr.bf16.mxu0 0
        %2092 = vmatpush1.bf16.msra.mxu0 0
        %2093 = vmatprep.subr.bf16.mxu0 0
        %2094 = vmatpush1.bf16.msra.mxu0 0
        %2095 = vmatprep.subr.bf16.mxu0 0
        %2096 = vmatpush1.bf16.msra.mxu0 0
        %2097 = vmatprep.subr.bf16.mxu0 0
        %2098 = vmatpush1.bf16.msra.mxu0 0
        %2099 = vmatprep.subr.bf16.mxu0 0
        %2100 = vmatpush1.bf16.msra.mxu0 0
        %2101 = vmatprep.subr.bf16.mxu0 0
        %2102 = vmatpush1.bf16.msra.mxu0 0
        %2103 = vmatprep.subr.bf16.mxu0 0
        %2104 = vmatpush1.bf16.msra.mxu0 %v2042
        %2105 = vmatprep.subr.bf16.mxu0 0
        %2106 = vmatpush2.bf16.msra.mxu0 0
        %2107 = vmatprep.subr.bf16.mxu0 0
        %2108 = vmatpush2.bf16.msra.mxu0 0
        %2109 = vmatprep.subr.bf16.mxu0 0
        %2110 = vmatpush2.bf16.msra.mxu0 0
        %2111 = vmatprep.subr.bf16.mxu0 0
        %2112 = vmatpush2.bf16.msra.mxu0 0
        %2113 = vmatprep.subr.bf16.mxu0 0
        %2114 = vmatpush2.bf16.msra.mxu0 0
        %2115 = vmatprep.subr.bf16.mxu0 0
        %2116 = vmatpush2.bf16.msra.mxu0 0
        %2117 = vmatprep.subr.bf16.mxu0 0
        %2118 = vmatpush2.bf16.msra.mxu0 0
        %2119 = vmatprep.subr.bf16.mxu0 0
        %2120 = vmatpush2.bf16.msra.mxu0 0
        %2121 = vmatprep.mubr.bf16.mxu0 0
        %2122 = vmatmul.mubr.bf16.gmra.mxu0 %v1526
        %v2123 = vpop.f32.mrf.mxu0
        %v2124 = vadd.f32 %v2083, %v2123
        %v2125 = vpop.f32.mrf.mxu0
        %v2126 = vpop.f32.mrf.mxu0
        %v2127 = vadd.f32 %v2086, %v2126
        %v2128 = vpop.f32.mrf.mxu0
        %2129 = vdwg.mxu0
        %2130 = vmatprep.subr.bf16.mxu0 0
        %2131 = vmatpush1.bf16.msra.mxu0 0
        %2132 = vmatprep.subr.bf16.mxu0 0
        %2133 = vmatpush1.bf16.msra.mxu0 0
        %2134 = vmatprep.subr.bf16.mxu0 0
        %2135 = vmatpush1.bf16.msra.mxu0 0
        %2136 = vmatprep.subr.bf16.mxu0 0
        %2137 = vmatpush1.bf16.msra.mxu0 0
        %2138 = vmatprep.subr.bf16.mxu0 0
        %2139 = vmatpush1.bf16.msra.mxu0 0
        %2140 = vmatprep.subr.bf16.mxu0 0
        %2141 = vmatpush1.bf16.msra.mxu0 0
        %2142 = vmatprep.subr.bf16.mxu0 0
        %2143 = vmatpush1.bf16.msra.mxu0 0
        %2144 = vmatprep.subr.bf16.mxu0 0
        %2145 = vmatpush1.bf16.msra.mxu0 %v2047
        %2146 = vmatprep.subr.bf16.mxu0 0
        %2147 = vmatpush2.bf16.msra.mxu0 0
        %2148 = vmatprep.subr.bf16.mxu0 0
        %2149 = vmatpush2.bf16.msra.mxu0 0
        %2150 = vmatprep.subr.bf16.mxu0 0
        %2151 = vmatpush2.bf16.msra.mxu0 0
        %2152 = vmatprep.subr.bf16.mxu0 0
        %2153 = vmatpush2.bf16.msra.mxu0 0
        %2154 = vmatprep.subr.bf16.mxu0 0
        %2155 = vmatpush2.bf16.msra.mxu0 0
        %2156 = vmatprep.subr.bf16.mxu0 0
        %2157 = vmatpush2.bf16.msra.mxu0 0
        %2158 = vmatprep.subr.bf16.mxu0 0
        %2159 = vmatpush2.bf16.msra.mxu0 0
        %2160 = vmatprep.subr.bf16.mxu0 0
        %2161 = vmatpush2.bf16.msra.mxu0 0
        %2162 = vmatprep.mubr.bf16.mxu0 0
        %2163 = vmatmul.mubr.bf16.gmra.mxu0 %v1526
        %v2164 = vpop.f32.mrf.mxu0
        %v2165 = vadd.f32 0.0, %v2164
        %v2166 = vpop.f32.mrf.mxu0
        %v2167 = vpop.f32.mrf.mxu0
        %v2168 = vadd.f32 0.0, %v2167
        %v2169 = vpop.f32.mrf.mxu0
        %2170 = vdwg.mxu0
        %v2171 = vadd.f32 %v2124, %v2165
        %v2172 = vadd.f32 %v2127, %v2168
        %2174 = vrot.lane.b32.xlu0 %v2172, 112
        %v2175 = vpop.permute.xlu0 %2174
        %v2177 = vsub.f32 %v2171, %v2175
        %2178 = vrot.lane.b32.xlu0 %v2172, 16
        %v2179 = vpop.permute.xlu0 %2178
        %v2181 = vadd.f32 %v2171, %v2179
        %v2182 = vsel %vm422, %v2177, %v2181
        %v2183 = vpack.c.bf16 %v2182, %v2182
        %v2184 = vunpack.c.l.bf16 %v2183
        %v2185 = vsub.f32 %v2182, %v2184
        %v2186 = vpack.c.bf16 %v2185, %v2185
        %v2188 = vrot.slane %v1809, 4
        %v2190 = vrot.slane %v2183, 4
        %vm2191 = vcmask 1043456
        %v2194 = vsel %vm2191, %v1622, %v2188
        %v2197 = vsel %vm2191, %v1996, %v2190
        %v2199 = vrot.slane %v1812, 4
        %v2201 = vrot.slane %v2186, 4
        %v2204 = vsel %vm2191, %v1625, %v2199
        %v2207 = vsel %vm2191, %v1999, %v2201
        %v2208 = vld [vmem:[%s4] sm:$0xf]
        %v2209 = vld [vmem:[%s4 + $0x4] sm:$0xf]
        %v2210 = vld [vmem:[%s4 + $0x8] sm:$0xf]
        %v2211 = vld [vmem:[%s4 + $0xc] sm:$0xf]
        %2214 = vrot.lane.b32.xlu0 %v2194, 32
        %v2215 = vpop.permute.xlu0 %2214
        %2216 = vrot.lane.b32.xlu0 %v2197, 32
        %v2217 = vpop.permute.xlu0 %2216
        %v2219 = vsel %vm1188, %v2204, %v2215
        %v2221 = vsel %vm1188, %v2207, %v2217
        %v2222 = vld [vmem:[%s4] sm:$0xf]
        %v2223 = vld [vmem:[%s4 + $0x4] sm:$0xf]
        %v2224 = vld [vmem:[%s4 + $0x8] sm:$0xf]
        %v2225 = vld [vmem:[%s4 + $0xc] sm:$0xf]
        %v2226 = vld [vmem:[%s4 + $0x10] sm:$0xf]
        %v2227 = vld [vmem:[%s4 + $0x14] sm:$0xf]
        %v2228 = vld [vmem:[%s4 + $0x18] sm:$0xf]
        %v2229 = vld [vmem:[%s4 + $0x1c] sm:$0xf]
        %v2238 = vunpack.c.l.b16 %v2222
        %v2239 = vunpack.c.l.b16 %v2223
        %v2240 = vunpack.c.l.b16 %v2224
        %v2241 = vunpack.c.l.b16 %v2225
        %v2242 = vunpack.c.l.b16 %v2226
        %v2243 = vunpack.c.l.b16 %v2227
        %v2244 = vunpack.c.l.b16 %v2228
        %v2245 = vunpack.c.l.b16 %v2229
        %v2246 = vpack.c.b16 %v2239, %v2238
        %v2247 = vpack.c.b16 %v2241, %v2240
        %v2248 = vpack.c.b16 %v2243, %v2242
        %v2249 = vpack.c.b16 %v2245, %v2244
        %vm2254 = vcmask 523264
        %v2255 = vsel %vm2254, %v2219, 0
        %v2257 = vsel %vm2254, %v2221, 0
        %2259 = vmatprep.subr.bf16.mxu0 0
        %2260 = vmatpush1.bf16.msra.mxu0 0
        %2261 = vmatprep.subr.bf16.mxu0 0
        %2262 = vmatpush1.bf16.msra.mxu0 0
        %2263 = vmatprep.subr.bf16.mxu0 0
        %2264 = vmatpush1.bf16.msra.mxu0 0
        %2265 = vmatprep.subr.bf16.mxu0 0
        %2266 = vmatpush1.bf16.msra.mxu0 0
        %2267 = vmatprep.subr.bf16.mxu0 0
        %2268 = vmatpush1.bf16.msra.mxu0 %v2249
        %2269 = vmatprep.subr.bf16.mxu0 0
        %2270 = vmatpush1.bf16.msra.mxu0 %v2248
        %2271 = vmatprep.subr.bf16.mxu0 0
        %2272 = vmatpush1.bf16.msra.mxu0 %v2247
        %2273 = vmatprep.subr.bf16.mxu0 0
        %2274 = vmatpush1.bf16.msra.mxu0 %v2246
        %2275 = vmatprep.subr.bf16.mxu0 0
        %2276 = vmatpush2.bf16.msra.mxu0 0
        %2277 = vmatprep.subr.bf16.mxu0 0
        %2278 = vmatpush2.bf16.msra.mxu0 0
        %2279 = vmatprep.subr.bf16.mxu0 0
        %2280 = vmatpush2.bf16.msra.mxu0 0
        %2281 = vmatprep.subr.bf16.mxu0 0
        %2282 = vmatpush2.bf16.msra.mxu0 0
        %2283 = vmatprep.subr.bf16.mxu0 0
        %2284 = vmatpush2.bf16.msra.mxu0 0
        %2285 = vmatprep.subr.bf16.mxu0 0
        %2286 = vmatpush2.bf16.msra.mxu0 0
        %2287 = vmatprep.subr.bf16.mxu0 0
        %2288 = vmatpush2.bf16.msra.mxu0 0
        %2289 = vmatprep.subr.bf16.mxu0 0
        %2290 = vmatpush2.bf16.msra.mxu0 0
        %2291 = vmatprep.mubr.bf16.mxu0 0
        %2292 = vmatmul.mubr.bf16.gmra.mxu0 %v2255
        %v2293 = vpop.f32.mrf.mxu0
        %v2294 = vadd.f32 0.0, %v2293
        %v2295 = vpop.f32.mrf.mxu0
        %v2296 = vpop.f32.mrf.mxu0
        %v2297 = vadd.f32 0.0, %v2296
        %v2298 = vpop.f32.mrf.mxu0
        %2299 = vmatprep.mubr.bf16.mxu0 0
        %2300 = vmatmul.mubr.bf16.gmra.mxu0 %v2257
        %v2301 = vpop.f32.mrf.mxu0
        %v2302 = vadd.f32 0.0, %v2301
        %v2303 = vpop.f32.mrf.mxu0
        %v2304 = vpop.f32.mrf.mxu0
        %v2305 = vadd.f32 0.0, %v2304
        %v2306 = vpop.f32.mrf.mxu0
        %2307 = vdwg.mxu0
        %v2312 = vunpack.c.l.b16 %v2208
        %v2313 = vunpack.c.l.b16 %v2209
        %v2314 = vunpack.c.l.b16 %v2210
        %v2315 = vunpack.c.l.b16 %v2211
        %v2316 = vpack.c.b16 %v2313, %v2312
        %v2317 = vpack.c.b16 %v2315, %v2314
        %v2320 = vsel %vm1188, %v2194, 0
        %v2322 = vsel %vm1188, %v2197, 0
        %2324 = vmatprep.subr.bf16.mxu0 0
        %2325 = vmatpush1.bf16.msra.mxu0 0
        %2326 = vmatprep.subr.bf16.mxu0 0
        %2327 = vmatpush1.bf16.msra.mxu0 0
        %2328 = vmatprep.subr.bf16.mxu0 0
        %2329 = vmatpush1.bf16.msra.mxu0 0
        %2330 = vmatprep.subr.bf16.mxu0 0
        %2331 = vmatpush1.bf16.msra.mxu0 0
        %2332 = vmatprep.subr.bf16.mxu0 0
        %2333 = vmatpush1.bf16.msra.mxu0 0
        %2334 = vmatprep.subr.bf16.mxu0 0
        %2335 = vmatpush1.bf16.msra.mxu0 0
        %2336 = vmatprep.subr.bf16.mxu0 0
        %2337 = vmatpush1.bf16.msra.mxu0 %v2317
        %2338 = vmatprep.subr.bf16.mxu0 0
        %2339 = vmatpush1.bf16.msra.mxu0 %v2316
        %2340 = vmatprep.subr.bf16.mxu0 0
        %2341 = vmatpush2.bf16.msra.mxu0 0
        %2342 = vmatprep.subr.bf16.mxu0 0
        %2343 = vmatpush2.bf16.msra.mxu0 0
        %2344 = vmatprep.subr.bf16.mxu0 0
        %2345 = vmatpush2.bf16.msra.mxu0 0
        %2346 = vmatprep.subr.bf16.mxu0 0
        %2347 = vmatpush2.bf16.msra.mxu0 0
        %2348 = vmatprep.subr.bf16.mxu0 0
        %2349 = vmatpush2.bf16.msra.mxu0 0
        %2350 = vmatprep.subr.bf16.mxu0 0
        %2351 = vmatpush2.bf16.msra.mxu0 0
        %2352 = vmatprep.subr.bf16.mxu0 0
        %2353 = vmatpush2.bf16.msra.mxu0 0
        %2354 = vmatprep.subr.bf16.mxu0 0
        %2355 = vmatpush2.bf16.msra.mxu0 0
        %2356 = vmatprep.mubr.bf16.mxu0 0
        %2357 = vmatmul.mubr.bf16.gmra.mxu0 %v2320
        %v2358 = vpop.f32.mrf.mxu0
        %v2359 = vadd.f32 %v2294, %v2358
        %v2360 = vpop.f32.mrf.mxu0
        %v2361 = vpop.f32.mrf.mxu0
        %v2362 = vadd.f32 %v2297, %v2361
        %v2363 = vpop.f32.mrf.mxu0
        %2364 = vmatprep.mubr.bf16.mxu0 0
        %2365 = vmatmul.mubr.bf16.gmra.mxu0 %v2322
        %v2366 = vpop.f32.mrf.mxu0
        %v2367 = vadd.f32 %v2302, %v2366
        %v2368 = vpop.f32.mrf.mxu0
        %v2369 = vpop.f32.mrf.mxu0
        %v2370 = vadd.f32 %v2305, %v2369
        %v2371 = vpop.f32.mrf.mxu0
        %2372 = vdwg.mxu0
        %s2373 = smul.u32 %s27, 4
        %p2374 = scmp.lt.s32.totalorder %s2373, 0
        %s2375 = ssub.s32 0, %s2373
        %s2376 = scalar_select %p2374, %s2375, %s2373
        %s2377 = sand.u32 %s2376, 3
        %s2378 = ssub.s32 0, %s2377
        %s2379 = scalar_select %p2374, %s2378, %s2377
        %p2380 = scmp.ne.s32.totalorder %s2379, 0
        %p2381 = scmp.lt.s32.totalorder %s2379, 0
        %p2382 = pnand %p2381, %p2380
        %p2383 = pneg %p2382
        %s2384 = sadd.s32 %s2379, 4
        %s2385 = scalar_select %p2383, %s2384, %s2379
        %s2386 = smul.u32 %s2385, 8
        %s2387 = scalar_lea.vmem [#allocation10], %s2386
        %v2388 = vld [vmem:[%s2387] sm:$0xff]
        %v2389 = vmul.f32 %v2359, %v2388
        %2390 = vst [vmem:[%s382] sm:$0xff] %v2389
        %s2391 = sadd.s32 %s2373, 1
        %p2392 = scmp.lt.s32.totalorder %s2391, 0
        %s2393 = ssub.s32 0, %s2391
        %s2394 = scalar_select %p2392, %s2393, %s2391
        %s2395 = sand.u32 %s2394, 3
        %s2396 = ssub.s32 0, %s2395
        %s2397 = scalar_select %p2392, %s2396, %s2395
        %p2398 = scmp.ne.s32.totalorder %s2397, 0
        %p2399 = scmp.lt.s32.totalorder %s2397, 0
        %p2400 = pnand %p2399, %p2398
        %p2401 = pneg %p2400
        %s2402 = sadd.s32 %s2397, 4
        %s2403 = scalar_select %p2401, %s2402, %s2397
        %s2404 = smul.u32 %s2403, 8
        %s2405 = scalar_lea.vmem [#allocation10], %s2404
        %v2406 = vld [vmem:[%s2405] sm:$0xff]
        %v2407 = vmul.f32 %v2362, %v2406
        %s2408 = scalar_lea.vmem %s382, 8 [#allocation11]
        %2409 = vst [vmem:[%s2408] sm:$0xff] %v2407
        %s2410 = sadd.s32 %s2373, 2
        %p2411 = scmp.lt.s32.totalorder %s2410, 0
        %s2412 = ssub.s32 0, %s2410
        %s2413 = scalar_select %p2411, %s2412, %s2410
        %s2414 = sand.u32 %s2413, 3
        %s2415 = ssub.s32 0, %s2414
        %s2416 = scalar_select %p2411, %s2415, %s2414
        %p2417 = scmp.ne.s32.totalorder %s2416, 0
        %p2418 = scmp.lt.s32.totalorder %s2416, 0
        %p2419 = pnand %p2418, %p2417
        %p2420 = pneg %p2419
        %s2421 = sadd.s32 %s2416, 4
        %s2422 = scalar_select %p2420, %s2421, %s2416
        %s2423 = smul.u32 %s2422, 8
        %s2424 = scalar_lea.vmem [#allocation10], %s2423
        %v2425 = vld [vmem:[%s2424] sm:$0xff]
        %v2426 = vmul.f32 %v2367, %v2425
        %s2427 = scalar_lea.vmem %s382, 16 [#allocation11]
        %2428 = vst [vmem:[%s2427] sm:$0xff] %v2426
        %s2429 = sadd.s32 %s2373, 3
        %p2430 = scmp.lt.s32.totalorder %s2429, 0
        %s2431 = ssub.s32 0, %s2429
        %s2432 = scalar_select %p2430, %s2431, %s2429
        %s2433 = sand.u32 %s2432, 3
        %s2434 = ssub.s32 0, %s2433
        %s2435 = scalar_select %p2430, %s2434, %s2433
        %p2436 = scmp.ne.s32.totalorder %s2435, 0
        %p2437 = scmp.lt.s32.totalorder %s2435, 0
        %p2438 = pnand %p2437, %p2436
        %p2439 = pneg %p2438
        %s2440 = sadd.s32 %s2435, 4
        %s2441 = scalar_select %p2439, %s2440, %s2435
        %s2442 = smul.u32 %s2441, 8
        %s2443 = scalar_lea.vmem [#allocation10], %s2442
        %v2444 = vld [vmem:[%s2443] sm:$0xff]
        %v2445 = vmul.f32 %v2370, %v2444
        %s2446 = scalar_lea.vmem %s382, 24 [#allocation11]
        %2447 = vst [vmem:[%s2446] sm:$0xff] %v2445
        %s2448 = sand.u32 %s208, 1
        %s2449 = scalar_lea.sflag [#allocation4], %s2448
        %s2450 = sand.u32 %s208, 1
        %s2451 = smul.addr %s2450, 32
        %s2452 = scalar_lea.vmem [#allocation11], %s2451
        // Predicated region
        $region73: #{tpu_custom_call.1} parent=51 // pred_check
          %p2453 = pneg %p218
        $region74: #{tpu_custom_call.1} parent=51 // pred_check_branch
          %2455 = sbr.rel (%p2453) target = $region76
        $region75: #{tpu_custom_call.1} parent=51 // pred_region
          %s2456 = smul.u32 4, %s27
          %s2458 = ssub.s32 512, 512
          %2459 = vsyncadd %s2449, %s2458
          %s2460 = smul.addr %s2456, 128
          %s2461 = scalar_lea.hbm %s8, %s2460
          %s2462 = sshll.u32 %s2452, 4
          %s2463 = int_to_ptr.vmem [resolvable:$true] %s2462
          %2468 = dma.vmem_to_hbm [thread:$0]  %s2463, 512, %s2461, %s2449, 128, 128, 8
        $region76: #{tpu_custom_call.1} parent=51 // pred_fallthru
          _
      $region52: #{tpu_custom_call.1} parent=5 // pred_fallthru
        _
      %p2469 = scmp.le.s32.totalorder 2, %s22
      // Predicated region
      $region77: #{tpu_custom_call.1} parent=5 // pred_check
        %p2470 = pneg %p2469
      $region78: #{tpu_custom_call.1} parent=5 // pred_check_branch
        %2472 = sbr.rel (%p2470) target = $region80
      $region79: #{tpu_custom_call.1} parent=5 // pred_region
        %s2473 = ssub.s32 %s22, 2
        // Predicated region
        $region81: #{tpu_custom_call.1} parent=79 // pred_check
          %p2474 = pneg %p224
        $region82: #{tpu_custom_call.1} parent=79 // pred_check_branch
          %2476 = sbr.rel (%p2474) target = $region84
        $region83: #{tpu_custom_call.1} parent=79 // pred_region
          %s2477 = sand.u32 %s209, 1
          %s2478 = scalar_lea.sflag [#allocation4], %s2477
          %s2479 = sand.u32 %s209, 1
          %s2480 = smul.addr %s2479, 32
          %s2481 = scalar_lea.vmem [#allocation11], %s2480
          %2482 = dma.done %s2478, 512
        $region84: #{tpu_custom_call.1} parent=79 // pred_fallthru
          _
      $region80: #{tpu_custom_call.1} parent=5 // pred_fallthru
        _
    $region6: #{tpu_custom_call.1} parent=1 // loop_footer
      %s26 = sadd.s32 1, %s22
    $region7: #{tpu_custom_call.1} parent=1 // loop_footer_branch
      %21 = sbr.rel target = $region3
    $region8: #{tpu_custom_call.1} parent=1 // loop_exit
      _
    %2483 = vsyncpa [#allocation3], 1
    %s2484 = scalar_lea.sflag [#allocation3], 1
    %2485 = vsyncpa %s2484, 1
    %2486 = vsyncpa [#allocation6], 1
    %2487 = vsyncpa [#allocation9], 1
    %2488 = vsyncpa [#allocation4], 1
    %s2489 = scalar_lea.sflag [#allocation4], 1
    %2490 = vsyncpa %s2489, 1

// kernel: tpu_custom_call.1
$region0: #{tpu_custom_call.1}
  #allocation0 [shape = 'u32[]', space=smem, size = 0x4, offset = 0x4, fixed_abs, tag = 'smem constant byte address 0x4 - core index']
  #allocation1 [shape = 'u32[144,128]{1,0:T(1,128)}', space=vmem, size = 0x12000, scoped, tag = 'internal scratch']
  %s0 = inlined_call_operand.hbm [shape: f32[8,16,16], index: 0, kind: input, shape index: {}]
  %s1 = inlined_call_operand.vmem [shape: bf16[2,32,16], index: 1, kind: input, shape index: {}]
  %s2 = inlined_call_operand.vmem [shape: bf16[32,32], index: 2, kind: input, shape index: {}]
  %s3 = inlined_call_operand.hbm [shape: bf16[2,16,16], index: 3, kind: input, shape index: {}]
  %s4 = inlined_call_operand.vmem [shape: bf16[64,128], index: 4, kind: input, shape index: {}]
  %s5 = inlined_call_operand.hbm [shape: f32[16,16], index: 5, kind: input, shape index: {}]
  %s6 = inlined_call_operand.hbm [shape: f32[16,16], index: 6, kind: input, shape index: {}]
  %s7 = inlined_call_operand.hbm [shape: f32[4,8,128], index: 7, kind: input, shape index: {}]
  %s8 = inlined_call_operand.hbm [shape: f32[8,8,128], index: 8, kind: output, shape index: {}]
  %s9 = sld [smem:[#allocation0]]
  $region85: #{tpu_custom_call.1} parent=0
    _
  %s11 = ssub.s32 1, %s9
  %s12 = scalar_select 0, %s11, %s9
  $region1: #{tpu_custom_call.1} parent=0
    #allocation2 [shape = 'u8[65536]{0}', space=vmem, size = 0x10000, scoped, tag = 'input window, operand 0']
    #allocation3 [shape = 's32[2]{0}', space=sflag, size = 0x8, scoped, tag = 'scoped memory for tpu_custom_call.1']
    #allocation4 [shape = 's32[2]{0}', space=sflag, size = 0x8, scoped, tag = 'scoped memory for tpu_custom_call.1']
    #allocation5 [shape = 'u8[8192]{0}', space=vmem, size = 0x2000, scoped, tag = 'input window, operand 3, single buffered']
    #allocation6 [shape = 's32[1]{0}', space=sflag, size = 0x4, scoped, tag = 'scoped memory for tpu_custom_call.1']
    #allocation7 [shape = 'u8[8192]{0}', space=vmem, size = 0x2000, scoped, tag = 'input window, operand 5, single buffered']
    #allocation8 [shape = 'u8[8192]{0}', space=vmem, size = 0x2000, scoped, tag = 'input window, operand 6, single buffered']
    #allocation9 [shape = 's32[1]{0}', space=sflag, size = 0x4, scoped, tag = 'scoped memory for tpu_custom_call.1']
    #allocation10 [shape = 'u8[16384]{0}', space=vmem, size = 0x4000, scoped, tag = 'input window, operand 7, single buffered']
    #allocation11 [shape = 'u8[32768]{0}', space=vmem, size = 0x8000, scoped, tag = 'output window, operand 0']
    %13 = vsyncpa [#allocation3], 0
    %s14 = scalar_lea.sflag [#allocation3], 1
    %15 = vsyncpa %s14, 0
    %16 = vsyncpa [#allocation6], 0
    %17 = vsyncpa [#allocation9], 0
    %18 = vsyncpa [#allocation4], 0
    %s19 = scalar_lea.sflag [#allocation4], 1
    %20 = vsyncpa %s19, 0
    loop: start=0, step=1, limit=4
    $region2: #{tpu_custom_call.1} parent=1 // loop_pre_header
      _
    $region3: #{tpu_custom_call.1} parent=1 // loop_header
      %s22 = sphi 0, %s26
      %p23 = scmp.ge.s32.totalorder %s22, 4
      %s32 = sphi 0, %s34
      %s35 = sphi 0, %s32
      %s36 = sphi 0, %s35
      %s52 = sphi 0, %s36
      %s56 = sphi 0, %s56
      %s58 = sphi 0, %s56
      %s59 = sphi 0, %s58
      %s73 = sphi 0, %s59
      %s77 = sphi 0, %s77
      %s79 = sphi 0, %s77
      %s80 = sphi 0, %s79
      %s94 = sphi 0, %s80
      %s98 = sphi 0, %s98
      %s100 = sphi 0, %s98
      %s101 = sphi 0, %s100
      %s115 = sphi 0, %s101
      %s119 = sphi 0, %s119
      %s121 = sphi 0, %s119
      %s122 = sphi 0, %s121
      %s136 = sphi 0, %s122
      %s140 = sphi 0, %s140
      %s142 = sphi 0, %s140
      %s143 = sphi 0, %s142
      %s157 = sphi 0, %s143
      %s161 = sphi 0, %s161
      %s163 = sphi 0, %s161
      %s164 = sphi 0, %s163
      %s178 = sphi 0, %s164
      %s182 = sphi 0, %s182
      %s184 = sphi 0, %s182
      %s185 = sphi 0, %s184
      %s199 = sphi 0, %s185
      %s205 = sphi 0, %s207
      %s208 = sphi 0, %s205
      %s209 = sphi 0, %s208
      %s225 = sphi 0, %s209
    $region4: #{tpu_custom_call.1} parent=1 // loop_header_branch
      %25 = sbr.rel (%p23) target = $region8
    $region5: #{tpu_custom_call.1} parent=1 // loop_body
      %s27 = ssub.s32 %s22, 1
      %s28 = ssub.s32 %s22, 2
      %s29 = sadd.s32 %s22, 1
      %s30 = ssub.s32 %s22, %s29
      %p31 = scmp.eq.s32.totalorder %s30, 0
      %s33 = sadd.s32 %s32, 1
      %s34 = scalar_select %p31, %s32, %s33
      %p37 = pneg %p31
      %p38 = scmp.eq.s32.totalorder %s22, 1
      %p39 = por %p37, %p38
      %p40 = scmp.ne.s32.totalorder %s32, %s35
      %p41 = scmp.eq.s32.totalorder %s22, 0
      %p42 = por %p40, %p41
      %p43 = scmp.ne.s32.totalorder %s32, %s35
      %p44 = scmp.eq.s32.totalorder %s27, 1
      %p45 = por %p43, %p44
      %p46 = scmp.ne.s32.totalorder %s35, %s36
      %p47 = scmp.eq.s32.totalorder %s27, 0
      %p48 = por %p46, %p47
      %p49 = scmp.ne.s32.totalorder %s35, %s36
      %p50 = scmp.eq.s32.totalorder %s28, 1
      %p51 = por %p49, %p50
      %p53 = scmp.ne.s32.totalorder %s36, %s52
      %p54 = scmp.eq.s32.totalorder %s28, 0
      %p55 = por %p53, %p54
      %s57 = sadd.s32 %s56, 1
      %p60 = scmp.eq.s32.totalorder %s22, 1
      %p61 = scmp.ne.s32.totalorder %s56, %s58
      %p62 = scmp.eq.s32.totalorder %s22, 0
      %p63 = por %p61, %p62
      %p64 = scmp.ne.s32.totalorder %s56, %s58
      %p65 = scmp.eq.s32.totalorder %s27, 1
      %p66 = por %p64, %p65
      %p67 = scmp.ne.s32.totalorder %s58, %s59
      %p68 = scmp.eq.s32.totalorder %s27, 0
      %p69 = por %p67, %p68
      %p70 = scmp.ne.s32.totalorder %s58, %s59
      %p71 = scmp.eq.s32.totalorder %s28, 1
      %p72 = por %p70, %p71
      %p74 = scmp.ne.s32.totalorder %s59, %s73
      %p75 = scmp.eq.s32.totalorder %s28, 0
      %p76 = por %p74, %p75
      %s78 = sadd.s32 %s77, 1
      %p81 = scmp.eq.s32.totalorder %s22, 1
      %p82 = scmp.ne.s32.totalorder %s77, %s79
      %p83 = scmp.eq.s32.totalorder %s22, 0
      %p84 = por %p82, %p83
      %p85 = scmp.ne.s32.totalorder %s77, %s79
      %p86 = scmp.eq.s32.totalorder %s27, 1
      %p87 = por %p85, %p86
      %p88 = scmp.ne.s32.totalorder %s79, %s80
      %p89 = scmp.eq.s32.totalorder %s27, 0
      %p90 = por %p88, %p89
      %p91 = scmp.ne.s32.totalorder %s79, %s80
      %p92 = scmp.eq.s32.totalorder %s28, 1
      %p93 = por %p91, %p92
      %p95 = scmp.ne.s32.totalorder %s80, %s94
      %p96 = scmp.eq.s32.totalorder %s28, 0
      %p97 = por %p95, %p96
      %s99 = sadd.s32 %s98, 1
      %p102 = scmp.eq.s32.totalorder %s22, 1
      %p103 = scmp.ne.s32.totalorder %s98, %s100
      %p104 = scmp.eq.s32.totalorder %s22, 0
      %p105 = por %p103, %p104
      %p106 = scmp.ne.s32.totalorder %s98, %s100
      %p107 = scmp.eq.s32.totalorder %s27, 1
      %p108 = por %p106, %p107
      %p109 = scmp.ne.s32.totalorder %s100, %s101
      %p110 = scmp.eq.s32.totalorder %s27, 0
      %p111 = por %p109, %p110
      %p112 = scmp.ne.s32.totalorder %s100, %s101
      %p113 = scmp.eq.s32.totalorder %s28, 1
      %p114 = por %p112, %p113
      %p116 = scmp.ne.s32.totalorder %s101, %s115
      %p117 = scmp.eq.s32.totalorder %s28, 0
      %p118 = por %p116, %p117
      %s120 = sadd.s32 %s119, 1
      %p123 = scmp.eq.s32.totalorder %s22, 1
      %p124 = scmp.ne.s32.totalorder %s119, %s121
      %p125 = scmp.eq.s32.totalorder %s22, 0
      %p126 = por %p124, %p125
      %p127 = scmp.ne.s32.totalorder %s119, %s121
      %p128 = scmp.eq.s32.totalorder %s27, 1
      %p129 = por %p127, %p128
      %p130 = scmp.ne.s32.totalorder %s121, %s122
      %p131 = scmp.eq.s32.totalorder %s27, 0
      %p132 = por %p130, %p131
      %p133 = scmp.ne.s32.totalorder %s121, %s122
      %p134 = scmp.eq.s32.totalorder %s28, 1
      %p135 = por %p133, %p134
      %p137 = scmp.ne.s32.totalorder %s122, %s136
      %p138 = scmp.eq.s32.totalorder %s28, 0
      %p139 = por %p137, %p138
      %s141 = sadd.s32 %s140, 1
      %p144 = scmp.eq.s32.totalorder %s22, 1
      %p145 = scmp.ne.s32.totalorder %s140, %s142
      %p146 = scmp.eq.s32.totalorder %s22, 0
      %p147 = por %p145, %p146
      %p148 = scmp.ne.s32.totalorder %s140, %s142
      %p149 = scmp.eq.s32.totalorder %s27, 1
      %p150 = por %p148, %p149
      %p151 = scmp.ne.s32.totalorder %s142, %s143
      %p152 = scmp.eq.s32.totalorder %s27, 0
      %p153 = por %p151, %p152
      %p154 = scmp.ne.s32.totalorder %s142, %s143
      %p155 = scmp.eq.s32.totalorder %s28, 1
      %p156 = por %p154, %p155
      %p158 = scmp.ne.s32.totalorder %s143, %s157
      %p159 = scmp.eq.s32.totalorder %s28, 0
      %p160 = por %p158, %p159
      %s162 = sadd.s32 %s161, 1
      %p165 = scmp.eq.s32.totalorder %s22, 1
      %p166 = scmp.ne.s32.totalorder %s161, %s163
      %p167 = scmp.eq.s32.totalorder %s22, 0
      %p168 = por %p166, %p167
      %p169 = scmp.ne.s32.totalorder %s161, %s163
      %p170 = scmp.eq.s32.totalorder %s27, 1
      %p171 = por %p169, %p170
      %p172 = scmp.ne.s32.totalorder %s163, %s164
      %p173 = scmp.eq.s32.totalorder %s27, 0
      %p174 = por %p172, %p173
      %p175 = scmp.ne.s32.totalorder %s163, %s164
      %p176 = scmp.eq.s32.totalorder %s28, 1
      %p177 = por %p175, %p176
      %p179 = scmp.ne.s32.totalorder %s164, %s178
      %p180 = scmp.eq.s32.totalorder %s28, 0
      %p181 = por %p179, %p180
      %s183 = sadd.s32 %s182, 1
      %p186 = scmp.eq.s32.totalorder %s22, 1
      %p187 = scmp.ne.s32.totalorder %s182, %s184
      %p188 = scmp.eq.s32.totalorder %s22, 0
      %p189 = por %p187, %p188
      %p190 = scmp.ne.s32.totalorder %s182, %s184
      %p191 = scmp.eq.s32.totalorder %s27, 1
      %p192 = por %p190, %p191
      %p193 = scmp.ne.s32.totalorder %s184, %s185
      %p194 = scmp.eq.s32.totalorder %s27, 0
      %p195 = por %p193, %p194
      %p196 = scmp.ne.s32.totalorder %s184, %s185
      %p197 = scmp.eq.s32.totalorder %s28, 1
      %p198 = por %p196, %p197
      %p200 = scmp.ne.s32.totalorder %s185, %s199
      %p201 = scmp.eq.s32.totalorder %s28, 0
      %p202 = por %p200, %p201
      %s203 = ssub.s32 %s22, %s29
      %p204 = scmp.eq.s32.totalorder %s203, 0
      %s206 = sadd.s32 %s205, 1
      %s207 = scalar_select %p204, %s205, %s206
      %p210 = pneg %p204
      %p211 = scmp.eq.s32.totalorder %s22, 1
      %p212 = por %p210, %p211
      %p213 = scmp.ne.s32.totalorder %s205, %s208
      %p214 = scmp.eq.s32.totalorder %s22, 0
      %p215 = por %p213, %p214
      %p216 = scmp.ne.s32.totalorder %s205, %s208
      %p217 = scmp.eq.s32.totalorder %s27, 1
      %p218 = por %p216, %p217
      %p219 = scmp.ne.s32.totalorder %s208, %s209
      %p220 = scmp.eq.s32.totalorder %s27, 0
      %p221 = por %p219, %p220
      %p222 = scmp.ne.s32.totalorder %s208, %s209
      %p223 = scmp.eq.s32.totalorder %s28, 1
      %p224 = por %p222, %p223
      %p226 = scmp.ne.s32.totalorder %s209, %s225
      %p227 = scmp.eq.s32.totalorder %s28, 0
      %p228 = por %p226, %p227
      %p229 = scmp.le.s32.totalorder 1, %s22
      %p230 = scmp.lt.s32.totalorder %s22, 3
      %p231 = pnand %p229, %p230
      %p232 = pneg %p231
      // Predicated region
      $region9: #{tpu_custom_call.1} parent=5 // pred_check
        _
      $region10: #{tpu_custom_call.1} parent=5 // pred_check_branch
        %234 = sbr.rel (%p231) target = $region12
      $region11: #{tpu_custom_call.1} parent=5 // pred_region
        %s235 = ssub.s32 %s22, 1
        // Predicated region
        $region13: #{tpu_custom_call.1} parent=11 // pred_check
          %p236 = pneg %p69
        $region14: #{tpu_custom_call.1} parent=11 // pred_check_branch
          %238 = sbr.rel (%p236) target = $region16
        $region15: #{tpu_custom_call.1} parent=11 // pred_region
          _
        $region16: #{tpu_custom_call.1} parent=11 // pred_fallthru
          _
        // Predicated region
        $region17: #{tpu_custom_call.1} parent=11 // pred_check
          %p239 = pneg %p90
        $region18: #{tpu_custom_call.1} parent=11 // pred_check_branch
          %241 = sbr.rel (%p239) target = $region20
        $region19: #{tpu_custom_call.1} parent=11 // pred_region
          _
        $region20: #{tpu_custom_call.1} parent=11 // pred_fallthru
          _
        // Predicated region
        $region21: #{tpu_custom_call.1} parent=11 // pred_check
          %p242 = pneg %p111
        $region22: #{tpu_custom_call.1} parent=11 // pred_check_branch
          %244 = sbr.rel (%p242) target = $region24
        $region23: #{tpu_custom_call.1} parent=11 // pred_region
          %s246 = ssub.s32 256, 256
          %247 = vsyncadd [#allocation6], %s246
          %s248 = sshll.u32 [#allocation5], 4
          %s249 = int_to_ptr.vmem [resolvable:$true] %s248
          %254 = dma.hbm_to_vmem [thread:$0]  %s3, 256, %s249, [#allocation6], 64, 64, 4
        $region24: #{tpu_custom_call.1} parent=11 // pred_fallthru
          _
        // Predicated region
        $region25: #{tpu_custom_call.1} parent=11 // pred_check
          %p255 = pneg %p132
        $region26: #{tpu_custom_call.1} parent=11 // pred_check_branch
          %257 = sbr.rel (%p255) target = $region28
        $region27: #{tpu_custom_call.1} parent=11 // pred_region
          _
        $region28: #{tpu_custom_call.1} parent=11 // pred_fallthru
          _
        // Predicated region
        $region29: #{tpu_custom_call.1} parent=11 // pred_check
          %p258 = pneg %p153
        $region30: #{tpu_custom_call.1} parent=11 // pred_check_branch
          %260 = sbr.rel (%p258) target = $region32
        $region31: #{tpu_custom_call.1} parent=11 // pred_region
          %s262 = ssub.s32 256, 256
          %263 = vsyncadd [#allocation6], %s262
          %s264 = sshll.u32 [#allocation7], 4
          %s265 = int_to_ptr.vmem [resolvable:$true] %s264
          %270 = dma.hbm_to_vmem [thread:$0]  %s5, 256, %s265, [#allocation6], 128, 128, 8
        $region32: #{tpu_custom_call.1} parent=11 // pred_fallthru
          _
        // Predicated region
        $region33: #{tpu_custom_call.1} parent=11 // pred_check
          %p271 = pneg %p174
        $region34: #{tpu_custom_call.1} parent=11 // pred_check_branch
          %273 = sbr.rel (%p271) target = $region36
        $region35: #{tpu_custom_call.1} parent=11 // pred_region
          %s275 = ssub.s32 256, 256
          %276 = vsyncadd [#allocation9], %s275
          %s277 = sshll.u32 [#allocation8], 4
          %s278 = int_to_ptr.vmem [resolvable:$true] %s277
          %283 = dma.hbm_to_vmem [thread:$0]  %s6, 256, %s278, [#allocation9], 128, 128, 8
        $region36: #{tpu_custom_call.1} parent=11 // pred_fallthru
          _
        // Predicated region
        $region37: #{tpu_custom_call.1} parent=11 // pred_check
          %p284 = pneg %p195
        $region38: #{tpu_custom_call.1} parent=11 // pred_check_branch
          %286 = sbr.rel (%p284) target = $region40
        $region39: #{tpu_custom_call.1} parent=11 // pred_region
          %s288 = ssub.s32 512, 512
          %289 = vsyncadd [#allocation9], %s288
          %s290 = sshll.u32 [#allocation10], 4
          %s291 = int_to_ptr.vmem [resolvable:$true] %s290
          %296 = dma.hbm_to_vmem [thread:$0]  %s7, 512, %s291, [#allocation9], 128, 128, 8
        $region40: #{tpu_custom_call.1} parent=11 // pred_fallthru
          _
      $region12: #{tpu_custom_call.1} parent=5 // pred_fallthru
        _
      %p297 = scmp.lt.s32.totalorder %s22, 2
      // Predicated region
      $region41: #{tpu_custom_call.1} parent=5 // pred_check
        %p298 = pneg %p297
      $region42: #{tpu_custom_call.1} parent=5 // pred_check_branch
        %300 = sbr.rel (%p298) target = $region44
      $region43: #{tpu_custom_call.1} parent=5 // pred_region
        // Predicated region
        $region45: #{tpu_custom_call.1} parent=43 // pred_check
          %p301 = pneg %p42
        $region46: #{tpu_custom_call.1} parent=43 // pred_check_branch
          %303 = sbr.rel (%p301) target = $region48
        $region47: #{tpu_custom_call.1} parent=43 // pred_region
          %s304 = sand.u32 %s32, 1
          %s305 = scalar_lea.sflag [#allocation3], %s304
          %s306 = sand.u32 %s32, 1
          %s307 = smul.addr %s306, 64
          %s308 = scalar_lea.vmem [#allocation2], %s307
          %s309 = smul.u32 4, %s22
          %s311 = ssub.s32 1024, 1024
          %312 = vsyncadd %s305, %s311
          %s313 = smul.addr %s309, 2
          %s314 = smul.addr %s313, 128
          %s315 = scalar_lea.hbm %s0, %s314
          %s316 = sshll.u32 %s308, 4
          %s317 = int_to_ptr.vmem [resolvable:$true] %s316
          %322 = dma.hbm_to_vmem [thread:$0]  %s315, 1024, %s317, %s305, 128, 128, 8
        $region48: #{tpu_custom_call.1} parent=43 // pred_fallthru
          _
      $region44: #{tpu_custom_call.1} parent=5 // pred_fallthru
        _
      %p323 = scmp.le.s32.totalorder 1, %s22
      %p324 = scmp.lt.s32.totalorder %s22, 3
      %p325 = pnand %p323, %p324
      %p326 = pneg %p325
      // Predicated region
      $region49: #{tpu_custom_call.1} parent=5 // pred_check
        _
      $region50: #{tpu_custom_call.1} parent=5 // pred_check_branch
        %328 = sbr.rel (%p325) target = $region52
      $region51: #{tpu_custom_call.1} parent=5 // pred_region
        %s329 = ssub.s32 %s22, 1
        %s330 = sand.u32 %s35, 1
        %s331 = scalar_lea.sflag [#allocation3], %s330
        %s332 = sand.u32 %s35, 1
        %s333 = smul.addr %s332, 64
        %s334 = scalar_lea.vmem [#allocation2], %s333
        // Predicated region
        $region53: #{tpu_custom_call.1} parent=51 // pred_check
          %p335 = pneg %p48
        $region54: #{tpu_custom_call.1} parent=51 // pred_check_branch
          %337 = sbr.rel (%p335) target = $region56
        $region55: #{tpu_custom_call.1} parent=51 // pred_region
          %338 = dma.done %s331, 1024
        $region56: #{tpu_custom_call.1} parent=51 // pred_fallthru
          _
        // Predicated region
        $region57: #{tpu_custom_call.1} parent=51 // pred_check
          %p339 = pneg %p111
        $region58: #{tpu_custom_call.1} parent=51 // pred_check_branch
          %341 = sbr.rel (%p339) target = $region60
        $region59: #{tpu_custom_call.1} parent=51 // pred_region
          %342 = dma.done [#allocation6], 256
        $region60: #{tpu_custom_call.1} parent=51 // pred_fallthru
          _
        // Predicated region
        $region61: #{tpu_custom_call.1} parent=51 // pred_check
          %p343 = pneg %p153
        $region62: #{tpu_custom_call.1} parent=51 // pred_check_branch
          %345 = sbr.rel (%p343) target = $region64
        $region63: #{tpu_custom_call.1} parent=51 // pred_region
          %346 = dma.done [#allocation6], 256
        $region64: #{tpu_custom_call.1} parent=51 // pred_fallthru
          _
        // Predicated region
        $region65: #{tpu_custom_call.1} parent=51 // pred_check
          %p347 = pneg %p174
        $region66: #{tpu_custom_call.1} parent=51 // pred_check_branch
          %349 = sbr.rel (%p347) target = $region68
        $region67: #{tpu_custom_call.1} parent=51 // pred_region
          %350 = dma.done [#allocation9], 256
        $region68: #{tpu_custom_call.1} parent=51 // pred_fallthru
          _
        // Predicated region
        $region69: #{tpu_custom_call.1} parent=51 // pred_check
          %p351 = pneg %p195
        $region70: #{tpu_custom_call.1} parent=51 // pred_check_branch
          %353 = sbr.rel (%p351) target = $region72
        $region71: #{tpu_custom_call.1} parent=51 // pred_region
          %354 = dma.done [#allocation9], 512
        $region72: #{tpu_custom_call.1} parent=51 // pred_fallthru
          _
        %s355 = sand.u32 %s35, 1
        %s356 = scalar_lea.sflag [#allocation3], %s355
        %s357 = sand.u32 %s35, 1
        %s358 = smul.addr %s357, 64
        %s359 = scalar_lea.vmem [#allocation2], %s358
        %p360 = pneg %p48
        %p361 = pneg %p45
        %p362 = pneg %p69
        %p363 = pneg %p66
        %p364 = pneg %p90
        %p365 = pneg %p87
        %p366 = pneg %p111
        %p367 = pneg %p108
        %p368 = pneg %p132
        %p369 = pneg %p129
        %p370 = pneg %p153
        %p371 = pneg %p150
        %p372 = pneg %p174
        %p373 = pneg %p171
        %p374 = pneg %p195
        %p375 = pneg %p192
        %p376 = pneg %p221
        %p377 = pneg %p218
        %s378 = sand.u32 %s208, 1
        %s379 = scalar_lea.sflag [#allocation4], %s378
        %s380 = sand.u32 %s208, 1
        %s381 = smul.addr %s380, 32
        %s382 = scalar_lea.vmem [#allocation11], %s381
        %s383 = smul.u32 4, %s27
        %s384 = smul.u32 4, %s27
        %v386 = vld [vmem:[%s1] sm:$0xf]
        %v387 = vld [vmem:[%s1 + $0x4] sm:$0xf]
        %v388 = vld [vmem:[%s1 + $0x8] sm:$0xf]
        %v389 = vld [vmem:[%s1 + $0xc] sm:$0xf]
        %s390 = scalar_lea.vmem %s1, 16
        %v391 = vld [vmem:[%s390] sm:$0xf]
        %v392 = vld [vmem:[%s390 + $0x4] sm:$0xf]
        %v393 = vld [vmem:[%s390 + $0x8] sm:$0xf]
        %v394 = vld [vmem:[%s390 + $0xc] sm:$0xf]
        %v395 = vld [vmem:[#allocation5] sm:$0xf]
        %v396 = vld [vmem:[#allocation5 + $0x4] sm:$0xf]
        %s397 = scalar_lea.vmem [#allocation5], 8
        %v398 = vld [vmem:[%s397] sm:$0xf]
        %v399 = vld [vmem:[%s397 + $0x4] sm:$0xf]
        %v400 = vld [vmem:[#allocation7] sm:$0xff]
        %v401 = vld [vmem:[#allocation7 + $0x8] sm:$0xff]
        %v402 = vld [vmem:[#allocation8] sm:$0xff]
        %v403 = vld [vmem:[#allocation8 + $0x8] sm:$0xff]
        %v404 = vld [vmem:[%s334] sm:$0xff]
        %v405 = vld [vmem:[%s334 + $0x8] sm:$0xff]
        %v406 = vpack.c.bf16 %v405, %v404
        %v407 = vunpack.c.l.bf16 %v406
        %v408 = vunpack.c.h.bf16 %v406
        %v409 = vsub.f32 %v404, %v407
        %v410 = vsub.f32 %v405, %v408
        %v411 = vpack.c.bf16 %v410, %v409
        %v416 = vunpack.c.l.b16 %v391
        %v417 = vunpack.c.l.b16 %v392
        %v418 = vunpack.c.l.b16 %v393
        %v419 = vunpack.c.l.b16 %v394
        %v420 = vpack.c.b16 %v417, %v416
        %v421 = vpack.c.b16 %v419, %v418
        %vm422 = vcmask 130048
        %v424 = vsel %vm422, %v420, 0
        %v427 = vsel %vm422, %v421, 0
        %429 = vmatprep.subr.bf16.mxu0 0
        %430 = vmatpush1.bf16.msra.mxu0 0
        %431 = vmatprep.subr.bf16.mxu0 0
        %432 = vmatpush1.bf16.msra.mxu0 0
        %433 = vmatprep.subr.bf16.mxu0 0
        %434 = vmatpush1.bf16.msra.mxu0 0
        %435 = vmatprep.subr.bf16.mxu0 0
        %436 = vmatpush1.bf16.msra.mxu0 0
        %437 = vmatprep.subr.bf16.mxu0 0
        %438 = vmatpush1.bf16.msra.mxu0 0
        %439 = vmatprep.subr.bf16.mxu0 0
        %440 = vmatpush1.bf16.msra.mxu0 0
        %441 = vmatprep.subr.bf16.mxu0 0
        %442 = vmatpush1.bf16.msra.mxu0 0
        %443 = vmatprep.subr.bf16.mxu0 0
        %444 = vmatpush1.bf16.msra.mxu0 %v406
        %445 = vmatprep.subr.bf16.mxu0 0
        %446 = vmatpush2.bf16.msra.mxu0 0
        %447 = vmatprep.subr.bf16.mxu0 0
        %448 = vmatpush2.bf16.msra.mxu0 0
        %449 = vmatprep.subr.bf16.mxu0 0
        %450 = vmatpush2.bf16.msra.mxu0 0
        %451 = vmatprep.subr.bf16.mxu0 0
        %452 = vmatpush2.bf16.msra.mxu0 0
        %453 = vmatprep.subr.bf16.mxu0 0
        %454 = vmatpush2.bf16.msra.mxu0 0
        %455 = vmatprep.subr.bf16.mxu0 0
        %456 = vmatpush2.bf16.msra.mxu0 0
        %457 = vmatprep.subr.bf16.mxu0 0
        %458 = vmatpush2.bf16.msra.mxu0 0
        %459 = vmatprep.subr.bf16.mxu0 0
        %460 = vmatpush2.bf16.msra.mxu0 0
        %461 = vmatprep.mubr.bf16.mxu0 0
        %462 = vmatmul.mubr.bf16.gmra.mxu0 %v424
        %v463 = vpop.f32.mrf.mxu0
        %v464 = vadd.f32 0.0, %v463
        %v465 = vpop.f32.mrf.mxu0
        %v466 = vpop.f32.mrf.mxu0
        %v467 = vadd.f32 0.0, %v466
        %v468 = vpop.f32.mrf.mxu0
        %469 = vmatprep.mubr.bf16.mxu0 0
        %470 = vmatmul.mubr.bf16.gmra.mxu0 %v427
        %v471 = vpop.f32.mrf.mxu0
        %v472 = vadd.f32 0.0, %v471
        %v473 = vpop.f32.mrf.mxu0
        %v474 = vpop.f32.mrf.mxu0
        %v475 = vadd.f32 0.0, %v474
        %v476 = vpop.f32.mrf.mxu0
        %477 = vdwg.mxu0
        %v482 = vunpack.c.l.b16 %v386
        %v483 = vunpack.c.l.b16 %v387
        %v484 = vunpack.c.l.b16 %v388
        %v485 = vunpack.c.l.b16 %v389
        %v486 = vpack.c.b16 %v483, %v482
        %v487 = vpack.c.b16 %v485, %v484
        %v489 = vsel %vm422, %v486, 0
        %v492 = vsel %vm422, %v487, 0
        %494 = vmatprep.subr.bf16.mxu0 0
        %495 = vmatpush1.bf16.msra.mxu0 0
        %496 = vmatprep.subr.bf16.mxu0 0
        %497 = vmatpush1.bf16.msra.mxu0 0
        %498 = vmatprep.subr.bf16.mxu0 0
        %499 = vmatpush1.bf16.msra.mxu0 0
        %500 = vmatprep.subr.bf16.mxu0 0
        %501 = vmatpush1.bf16.msra.mxu0 0
        %502 = vmatprep.subr.bf16.mxu0 0
        %503 = vmatpush1.bf16.msra.mxu0 0
        %504 = vmatprep.subr.bf16.mxu0 0
        %505 = vmatpush1.bf16.msra.mxu0 0
        %506 = vmatprep.subr.bf16.mxu0 0
        %507 = vmatpush1.bf16.msra.mxu0 0
        %508 = vmatprep.subr.bf16.mxu0 0
        %509 = vmatpush1.bf16.msra.mxu0 %v406
        %510 = vmatprep.subr.bf16.mxu0 0
        %511 = vmatpush2.bf16.msra.mxu0 0
        %512 = vmatprep.subr.bf16.mxu0 0
        %513 = vmatpush2.bf16.msra.mxu0 0
        %514 = vmatprep.subr.bf16.mxu0 0
        %515 = vmatpush2.bf16.msra.mxu0 0
        %516 = vmatprep.subr.bf16.mxu0 0
        %517 = vmatpush2.bf16.msra.mxu0 0
        %518 = vmatprep.subr.bf16.mxu0 0
        %519 = vmatpush2.bf16.msra.mxu0 0
        %520 = vmatprep.subr.bf16.mxu0 0
        %521 = vmatpush2.bf16.msra.mxu0 0
        %522 = vmatprep.subr.bf16.mxu0 0
        %523 = vmatpush2.bf16.msra.mxu0 0
        %524 = vmatprep.subr.bf16.mxu0 0
        %525 = vmatpush2.bf16.msra.mxu0 0
        %526 = vmatprep.mubr.bf16.mxu0 0
        %527 = vmatmul.mubr.bf16.gmra.mxu0 %v489
        %v528 = vpop.f32.mrf.mxu0
        %v529 = vadd.f32 %v464, %v528
        %v530 = vpop.f32.mrf.mxu0
        %v531 = vpop.f32.mrf.mxu0
        %v532 = vadd.f32 %v467, %v531
        %v533 = vpop.f32.mrf.mxu0
        %534 = vmatprep.mubr.bf16.mxu0 0
        %535 = vmatmul.mubr.bf16.gmra.mxu0 %v492
        %v536 = vpop.f32.mrf.mxu0
        %v537 = vadd.f32 %v472, %v536
        %v538 = vpop.f32.mrf.mxu0
        %v539 = vpop.f32.mrf.mxu0
        %v540 = vadd.f32 %v475, %v539
        %v541 = vpop.f32.mrf.mxu0
        %542 = vdwg.mxu0
        %543 = vmatprep.subr.bf16.mxu0 0
        %544 = vmatpush1.bf16.msra.mxu0 0
        %545 = vmatprep.subr.bf16.mxu0 0
        %546 = vmatpush1.bf16.msra.mxu0 0
        %547 = vmatprep.subr.bf16.mxu0 0
        %548 = vmatpush1.bf16.msra.mxu0 0
        %549 = vmatprep.subr.bf16.mxu0 0
        %550 = vmatpush1.bf16.msra.mxu0 0
        %551 = vmatprep.subr.bf16.mxu0 0
        %552 = vmatpush1.bf16.msra.mxu0 0
        %553 = vmatprep.subr.bf16.mxu0 0
        %554 = vmatpush1.bf16.msra.mxu0 0
        %555 = vmatprep.subr.bf16.mxu0 0
        %556 = vmatpush1.bf16.msra.mxu0 0
        %557 = vmatprep.subr.bf16.mxu0 0
        %558 = vmatpush1.bf16.msra.mxu0 %v411
        %559 = vmatprep.subr.bf16.mxu0 0
        %560 = vmatpush2.bf16.msra.mxu0 0
        %561 = vmatprep.subr.bf16.mxu0 0
        %562 = vmatpush2.bf16.msra.mxu0 0
        %563 = vmatprep.subr.bf16.mxu0 0
        %564 = vmatpush2.bf16.msra.mxu0 0
        %565 = vmatprep.subr.bf16.mxu0 0
        %566 = vmatpush2.bf16.msra.mxu0 0
        %567 = vmatprep.subr.bf16.mxu0 0
        %568 = vmatpush2.bf16.msra.mxu0 0
        %569 = vmatprep.subr.bf16.mxu0 0
        %570 = vmatpush2.bf16.msra.mxu0 0
        %571 = vmatprep.subr.bf16.mxu0 0
        %572 = vmatpush2.bf16.msra.mxu0 0
        %573 = vmatprep.subr.bf16.mxu0 0
        %574 = vmatpush2.bf16.msra.mxu0 0
        %575 = vmatprep.mubr.bf16.mxu0 0
        %576 = vmatmul.mubr.bf16.gmra.mxu0 %v489
        %v577 = vpop.f32.mrf.mxu0
        %v578 = vadd.f32 0.0, %v577
        %v579 = vpop.f32.mrf.mxu0
        %v580 = vpop.f32.mrf.mxu0
        %v581 = vadd.f32 0.0, %v580
        %v582 = vpop.f32.mrf.mxu0
        %583 = vmatprep.mubr.bf16.mxu0 0
        %584 = vmatmul.mubr.bf16.gmra.mxu0 %v492
        %v585 = vpop.f32.mrf.mxu0
        %v586 = vadd.f32 0.0, %v585
        %v587 = vpop.f32.mrf.mxu0
        %v588 = vpop.f32.mrf.mxu0
        %v589 = vadd.f32 0.0, %v588
        %v590 = vpop.f32.mrf.mxu0
        %591 = vdwg.mxu0
        %v592 = vadd.f32 %v529, %v578
        %v593 = vadd.f32 %v532, %v581
        %v594 = vadd.f32 %v537, %v586
        %v595 = vadd.f32 %v540, %v589
        %v596 = vpack.c.bf16 %v593, %v592
        %v597 = vpack.c.bf16 %v595, %v594
        %v598 = vunpack.c.l.bf16 %v596
        %v599 = vunpack.c.h.bf16 %v596
        %v600 = vunpack.c.l.bf16 %v597
        %v601 = vunpack.c.h.bf16 %v597
        %v602 = vsub.f32 %v592, %v598
        %v603 = vsub.f32 %v593, %v599
        %v604 = vsub.f32 %v594, %v600
        %v605 = vsub.f32 %v595, %v601
        %v606 = vpack.c.bf16 %v603, %v602
        %v607 = vpack.c.bf16 %v605, %v604
        %s608 = scalar_lea.vmem %s334, 16 [#allocation2]
        %v609 = vld [vmem:[%s608] sm:$0xff]
        %v610 = vld [vmem:[%s608 + $0x8] sm:$0xff]
        %v611 = vpack.c.bf16 %v610, %v609
        %v612 = vunpack.c.l.bf16 %v611
        %v613 = vunpack.c.h.bf16 %v611
        %v614 = vsub.f32 %v609, %v612
        %v615 = vsub.f32 %v610, %v613
        %v616 = vpack.c.bf16 %v615, %v614
        %617 = vmatprep.subr.bf16.mxu0 0
        %618 = vmatpush1.bf16.msra.mxu0 0
        %619 = vmatprep.subr.bf16.mxu0 0
        %620 = vmatpush1.bf16.msra.mxu0 0
        %621 = vmatprep.subr.bf16.mxu0 0
        %622 = vmatpush1.bf16.msra.mxu0 0
        %623 = vmatprep.subr.bf16.mxu0 0
        %624 = vmatpush1.bf16.msra.mxu0 0
        %625 = vmatprep.subr.bf16.mxu0 0
        %626 = vmatpush1.bf16.msra.mxu0 0
        %627 = vmatprep.subr.bf16.mxu0 0
        %628 = vmatpush1.bf16.msra.mxu0 0
        %629 = vmatprep.subr.bf16.mxu0 0
        %630 = vmatpush1.bf16.msra.mxu0 0
        %631 = vmatprep.subr.bf16.mxu0 0
        %632 = vmatpush1.bf16.msra.mxu0 %v611
        %633 = vmatprep.subr.bf16.mxu0 0
        %634 = vmatpush2.bf16.msra.mxu0 0
        %635 = vmatprep.subr.bf16.mxu0 0
        %636 = vmatpush2.bf16.msra.mxu0 0
        %637 = vmatprep.subr.bf16.mxu0 0
        %638 = vmatpush2.bf16.msra.mxu0 0
        %639 = vmatprep.subr.bf16.mxu0 0
        %640 = vmatpush2.bf16.msra.mxu0 0
        %641 = vmatprep.subr.bf16.mxu0 0
        %642 = vmatpush2.bf16.msra.mxu0 0
        %643 = vmatprep.subr.bf16.mxu0 0
        %644 = vmatpush2.bf16.msra.mxu0 0
        %645 = vmatprep.subr.bf16.mxu0 0
        %646 = vmatpush2.bf16.msra.mxu0 0
        %647 = vmatprep.subr.bf16.mxu0 0
        %648 = vmatpush2.bf16.msra.mxu0 0
        %649 = vmatprep.mubr.bf16.mxu0 0
        %650 = vmatmul.mubr.bf16.gmra.mxu0 %v424
        %v651 = vpop.f32.mrf.mxu0
        %v652 = vadd.f32 0.0, %v651
        %v653 = vpop.f32.mrf.mxu0
        %v654 = vpop.f32.mrf.mxu0
        %v655 = vadd.f32 0.0, %v654
        %v656 = vpop.f32.mrf.mxu0
        %657 = vmatprep.mubr.bf16.mxu0 0
        %658 = vmatmul.mubr.bf16.gmra.mxu0 %v427
        %v659 = vpop.f32.mrf.mxu0
        %v660 = vadd.f32 0.0, %v659
        %v661 = vpop.f32.mrf.mxu0
        %v662 = vpop.f32.mrf.mxu0
        %v663 = vadd.f32 0.0, %v662
        %v664 = vpop.f32.mrf.mxu0
        %665 = vdwg.mxu0
        %666 = vmatprep.subr.bf16.mxu0 0
        %667 = vmatpush1.bf16.msra.mxu0 0
        %668 = vmatprep.subr.bf16.mxu0 0
        %669 = vmatpush1.bf16.msra.mxu0 0
        %670 = vmatprep.subr.bf16.mxu0 0
        %671 = vmatpush1.bf16.msra.mxu0 0
        %672 = vmatprep.subr.bf16.mxu0 0
        %673 = vmatpush1.bf16.msra.mxu0 0
        %674 = vmatprep.subr.bf16.mxu0 0
        %675 = vmatpush1.bf16.msra.mxu0 0
        %676 = vmatprep.subr.bf16.mxu0 0
        %677 = vmatpush1.bf16.msra.mxu0 0
        %678 = vmatprep.subr.bf16.mxu0 0
        %679 = vmatpush1.bf16.msra.mxu0 0
        %680 = vmatprep.subr.bf16.mxu0 0
        %681 = vmatpush1.bf16.msra.mxu0 %v611
        %682 = vmatprep.subr.bf16.mxu0 0
        %683 = vmatpush2.bf16.msra.mxu0 0
        %684 = vmatprep.subr.bf16.mxu0 0
        %685 = vmatpush2.bf16.msra.mxu0 0
        %686 = vmatprep.subr.bf16.mxu0 0
        %687 = vmatpush2.bf16.msra.mxu0 0
        %688 = vmatprep.subr.bf16.mxu0 0
        %689 = vmatpush2.bf16.msra.mxu0 0
        %690 = vmatprep.subr.bf16.mxu0 0
        %691 = vmatpush2.bf16.msra.mxu0 0
        %692 = vmatprep.subr.bf16.mxu0 0
        %693 = vmatpush2.bf16.msra.mxu0 0
        %694 = vmatprep.subr.bf16.mxu0 0
        %695 = vmatpush2.bf16.msra.mxu0 0
        %696 = vmatprep.subr.bf16.mxu0 0
        %697 = vmatpush2.bf16.msra.mxu0 0
        %698 = vmatprep.mubr.bf16.mxu0 0
        %699 = vmatmul.mubr.bf16.gmra.mxu0 %v489
        %v700 = vpop.f32.mrf.mxu0
        %v701 = vadd.f32 %v652, %v700
        %v702 = vpop.f32.mrf.mxu0
        %v703 = vpop.f32.mrf.mxu0
        %v704 = vadd.f32 %v655, %v703
        %v705 = vpop.f32.mrf.mxu0
        %706 = vmatprep.mubr.bf16.mxu0 0
        %707 = vmatmul.mubr.bf16.gmra.mxu0 %v492
        %v708 = vpop.f32.mrf.mxu0
        %v709 = vadd.f32 %v660, %v708
        %v710 = vpop.f32.mrf.mxu0
        %v711 = vpop.f32.mrf.mxu0
        %v712 = vadd.f32 %v663, %v711
        %v713 = vpop.f32.mrf.mxu0
        %714 = vdwg.mxu0
        %715 = vmatprep.subr.bf16.mxu0 0
        %716 = vmatpush1.bf16.msra.mxu0 0
        %717 = vmatprep.subr.bf16.mxu0 0
        %718 = vmatpush1.bf16.msra.mxu0 0
        %719 = vmatprep.subr.bf16.mxu0 0
        %720 = vmatpush1.bf16.msra.mxu0 0
        %721 = vmatprep.subr.bf16.mxu0 0
        %722 = vmatpush1.bf16.msra.mxu0 0
        %723 = vmatprep.subr.bf16.mxu0 0
        %724 = vmatpush1.bf16.msra.mxu0 0
        %725 = vmatprep.subr.bf16.mxu0 0
        %726 = vmatpush1.bf16.msra.mxu0 0
        %727 = vmatprep.subr.bf16.mxu0 0
        %728 = vmatpush1.bf16.msra.mxu0 0
        %729 = vmatprep.subr.bf16.mxu0 0
        %730 = vmatpush1.bf16.msra.mxu0 %v616
        %731 = vmatprep.subr.bf16.mxu0 0
        %732 = vmatpush2.bf16.msra.mxu0 0
        %733 = vmatprep.subr.bf16.mxu0 0
        %734 = vmatpush2.bf16.msra.mxu0 0
        %735 = vmatprep.subr.bf16.mxu0 0
        %736 = vmatpush2.bf16.msra.mxu0 0
        %737 = vmatprep.subr.bf16.mxu0 0
        %738 = vmatpush2.bf16.msra.mxu0 0
        %739 = vmatprep.subr.bf16.mxu0 0
        %740 = vmatpush2.bf16.msra.mxu0 0
        %741 = vmatprep.subr.bf16.mxu0 0
        %742 = vmatpush2.bf16.msra.mxu0 0
        %743 = vmatprep.subr.bf16.mxu0 0
        %744 = vmatpush2.bf16.msra.mxu0 0
        %745 = vmatprep.subr.bf16.mxu0 0
        %746 = vmatpush2.bf16.msra.mxu0 0
        %747 = vmatprep.mubr.bf16.mxu0 0
        %748 = vmatmul.mubr.bf16.gmra.mxu0 %v489
        %v749 = vpop.f32.mrf.mxu0
        %v750 = vadd.f32 0.0, %v749
        %v751 = vpop.f32.mrf.mxu0
        %v752 = vpop.f32.mrf.mxu0
        %v753 = vadd.f32 0.0, %v752
        %v754 = vpop.f32.mrf.mxu0
        %755 = vmatprep.mubr.bf16.mxu0 0
        %756 = vmatmul.mubr.bf16.gmra.mxu0 %v492
        %v757 = vpop.f32.mrf.mxu0
        %v758 = vadd.f32 0.0, %v757
        %v759 = vpop.f32.mrf.mxu0
        %v760 = vpop.f32.mrf.mxu0
        %v761 = vadd.f32 0.0, %v760
        %v762 = vpop.f32.mrf.mxu0
        %763 = vdwg.mxu0
        %v764 = vadd.f32 %v701, %v750
        %v765 = vadd.f32 %v704, %v753
        %v766 = vadd.f32 %v709, %v758
        %v767 = vadd.f32 %v712, %v761
        %v768 = vpack.c.bf16 %v765, %v764
        %v769 = vpack.c.bf16 %v767, %v766
        %v770 = vunpack.c.l.bf16 %v768
        %v771 = vunpack.c.h.bf16 %v768
        %v772 = vunpack.c.l.bf16 %v769
        %v773 = vunpack.c.h.bf16 %v769
        %v774 = vsub.f32 %v764, %v770
        %v775 = vsub.f32 %v765, %v771
        %v776 = vsub.f32 %v766, %v772
        %v777 = vsub.f32 %v767, %v773
        %v778 = vpack.c.bf16 %v775, %v774
        %v779 = vpack.c.bf16 %v777, %v776
        %s780 = scalar_lea.vmem %s334, 32 [#allocation2]
        %v781 = vld [vmem:[%s780] sm:$0xff]
        %v782 = vld [vmem:[%s780 + $0x8] sm:$0xff]
        %v783 = vpack.c.bf16 %v782, %v781
        %v784 = vunpack.c.l.bf16 %v783
        %v785 = vunpack.c.h.bf16 %v783
        %v786 = vsub.f32 %v781, %v784
        %v787 = vsub.f32 %v782, %v785
        %v788 = vpack.c.bf16 %v787, %v786
        %789 = vmatprep.subr.bf16.mxu0 0
        %790 = vmatpush1.bf16.msra.mxu0 0
        %791 = vmatprep.subr.bf16.mxu0 0
        %792 = vmatpush1.bf16.msra.mxu0 0
        %793 = vmatprep.subr.bf16.mxu0 0
        %794 = vmatpush1.bf16.msra.mxu0 0
        %795 = vmatprep.subr.bf16.mxu0 0
        %796 = vmatpush1.bf16.msra.mxu0 0
        %797 = vmatprep.subr.bf16.mxu0 0
        %798 = vmatpush1.bf16.msra.mxu0 0
        %799 = vmatprep.subr.bf16.mxu0 0
        %800 = vmatpush1.bf16.msra.mxu0 0
        %801 = vmatprep.subr.bf16.mxu0 0
        %802 = vmatpush1.bf16.msra.mxu0 0
        %803 = vmatprep.subr.bf16.mxu0 0
        %804 = vmatpush1.bf16.msra.mxu0 %v783
        %805 = vmatprep.subr.bf16.mxu0 0
        %806 = vmatpush2.bf16.msra.mxu0 0
        %807 = vmatprep.subr.bf16.mxu0 0
        %808 = vmatpush2.bf16.msra.mxu0 0
        %809 = vmatprep.subr.bf16.mxu0 0
        %810 = vmatpush2.bf16.msra.mxu0 0
        %811 = vmatprep.subr.bf16.mxu0 0
        %812 = vmatpush2.bf16.msra.mxu0 0
        %813 = vmatprep.subr.bf16.mxu0 0
        %814 = vmatpush2.bf16.msra.mxu0 0
        %815 = vmatprep.subr.bf16.mxu0 0
        %816 = vmatpush2.bf16.msra.mxu0 0
        %817 = vmatprep.subr.bf16.mxu0 0
        %818 = vmatpush2.bf16.msra.mxu0 0
        %819 = vmatprep.subr.bf16.mxu0 0
        %820 = vmatpush2.bf16.msra.mxu0 0
        %821 = vmatprep.mubr.bf16.mxu0 0
        %822 = vmatmul.mubr.bf16.gmra.mxu0 %v424
        %v823 = vpop.f32.mrf.mxu0
        %v824 = vadd.f32 0.0, %v823
        %v825 = vpop.f32.mrf.mxu0
        %v826 = vpop.f32.mrf.mxu0
        %v827 = vadd.f32 0.0, %v826
        %v828 = vpop.f32.mrf.mxu0
        %829 = vmatprep.mubr.bf16.mxu0 0
        %830 = vmatmul.mubr.bf16.gmra.mxu0 %v427
        %v831 = vpop.f32.mrf.mxu0
        %v832 = vadd.f32 0.0, %v831
        %v833 = vpop.f32.mrf.mxu0
        %v834 = vpop.f32.mrf.mxu0
        %v835 = vadd.f32 0.0, %v834
        %v836 = vpop.f32.mrf.mxu0
        %837 = vdwg.mxu0
        %838 = vmatprep.subr.bf16.mxu0 0
        %839 = vmatpush1.bf16.msra.mxu0 0
        %840 = vmatprep.subr.bf16.mxu0 0
        %841 = vmatpush1.bf16.msra.mxu0 0
        %842 = vmatprep.subr.bf16.mxu0 0
        %843 = vmatpush1.bf16.msra.mxu0 0
        %844 = vmatprep.subr.bf16.mxu0 0
        %845 = vmatpush1.bf16.msra.mxu0 0
        %846 = vmatprep.subr.bf16.mxu0 0
        %847 = vmatpush1.bf16.msra.mxu0 0
        %848 = vmatprep.subr.bf16.mxu0 0
        %849 = vmatpush1.bf16.msra.mxu0 0
        %850 = vmatprep.subr.bf16.mxu0 0
        %851 = vmatpush1.bf16.msra.mxu0 0
        %852 = vmatprep.subr.bf16.mxu0 0
        %853 = vmatpush1.bf16.msra.mxu0 %v783
        %854 = vmatprep.subr.bf16.mxu0 0
        %855 = vmatpush2.bf16.msra.mxu0 0
        %856 = vmatprep.subr.bf16.mxu0 0
        %857 = vmatpush2.bf16.msra.mxu0 0
        %858 = vmatprep.subr.bf16.mxu0 0
        %859 = vmatpush2.bf16.msra.mxu0 0
        %860 = vmatprep.subr.bf16.mxu0 0
        %861 = vmatpush2.bf16.msra.mxu0 0
        %862 = vmatprep.subr.bf16.mxu0 0
        %863 = vmatpush2.bf16.msra.mxu0 0
        %864 = vmatprep.subr.bf16.mxu0 0
        %865 = vmatpush2.bf16.msra.mxu0 0
        %866 = vmatprep.subr.bf16.mxu0 0
        %867 = vmatpush2.bf16.msra.mxu0 0
        %868 = vmatprep.subr.bf16.mxu0 0
        %869 = vmatpush2.bf16.msra.mxu0 0
        %870 = vmatprep.mubr.bf16.mxu0 0
        %871 = vmatmul.mubr.bf16.gmra.mxu0 %v489
        %v872 = vpop.f32.mrf.mxu0
        %v873 = vadd.f32 %v824, %v872
        %v874 = vpop.f32.mrf.mxu0
        %v875 = vpop.f32.mrf.mxu0
        %v876 = vadd.f32 %v827, %v875
        %v877 = vpop.f32.mrf.mxu0
        %878 = vmatprep.mubr.bf16.mxu0 0
        %879 = vmatmul.mubr.bf16.gmra.mxu0 %v492
        %v880 = vpop.f32.mrf.mxu0
        %v881 = vadd.f32 %v832, %v880
        %v882 = vpop.f32.mrf.mxu0
        %v883 = vpop.f32.mrf.mxu0
        %v884 = vadd.f32 %v835, %v883
        %v885 = vpop.f32.mrf.mxu0
        %886 = vdwg.mxu0
        %887 = vmatprep.subr.bf16.mxu0 0
        %888 = vmatpush1.bf16.msra.mxu0 0
        %889 = vmatprep.subr.bf16.mxu0 0
        %890 = vmatpush1.bf16.msra.mxu0 0
        %891 = vmatprep.subr.bf16.mxu0 0
        %892 = vmatpush1.bf16.msra.mxu0 0
        %893 = vmatprep.subr.bf16.mxu0 0
        %894 = vmatpush1.bf16.msra.mxu0 0
        %895 = vmatprep.subr.bf16.mxu0 0
        %896 = vmatpush1.bf16.msra.mxu0 0
        %897 = vmatprep.subr.bf16.mxu0 0
        %898 = vmatpush1.bf16.msra.mxu0 0
        %899 = vmatprep.subr.bf16.mxu0 0
        %900 = vmatpush1.bf16.msra.mxu0 0
        %901 = vmatprep.subr.bf16.mxu0 0
        %902 = vmatpush1.bf16.msra.mxu0 %v788
        %903 = vmatprep.subr.bf16.mxu0 0
        %904 = vmatpush2.bf16.msra.mxu0 0
        %905 = vmatprep.subr.bf16.mxu0 0
        %906 = vmatpush2.bf16.msra.mxu0 0
        %907 = vmatprep.subr.bf16.mxu0 0
        %908 = vmatpush2.bf16.msra.mxu0 0
        %909 = vmatprep.subr.bf16.mxu0 0
        %910 = vmatpush2.bf16.msra.mxu0 0
        %911 = vmatprep.subr.bf16.mxu0 0
        %912 = vmatpush2.bf16.msra.mxu0 0
        %913 = vmatprep.subr.bf16.mxu0 0
        %914 = vmatpush2.bf16.msra.mxu0 0
        %915 = vmatprep.subr.bf16.mxu0 0
        %916 = vmatpush2.bf16.msra.mxu0 0
        %917 = vmatprep.subr.bf16.mxu0 0
        %918 = vmatpush2.bf16.msra.mxu0 0
        %919 = vmatprep.mubr.bf16.mxu0 0
        %920 = vmatmul.mubr.bf16.gmra.mxu0 %v489
        %v921 = vpop.f32.mrf.mxu0
        %v922 = vadd.f32 0.0, %v921
        %v923 = vpop.f32.mrf.mxu0
        %v924 = vpop.f32.mrf.mxu0
        %v925 = vadd.f32 0.0, %v924
        %v926 = vpop.f32.mrf.mxu0
        %927 = vmatprep.mubr.bf16.mxu0 0
        %928 = vmatmul.mubr.bf16.gmra.mxu0 %v492
        %v929 = vpop.f32.mrf.mxu0
        %v930 = vadd.f32 0.0, %v929
        %v931 = vpop.f32.mrf.mxu0
        %v932 = vpop.f32.mrf.mxu0
        %v933 = vadd.f32 0.0, %v932
        %v934 = vpop.f32.mrf.mxu0
        %935 = vdwg.mxu0
        %v936 = vadd.f32 %v873, %v922
        %v937 = vadd.f32 %v876, %v925
        %v938 = vadd.f32 %v881, %v930
        %v939 = vadd.f32 %v884, %v933
        %v940 = vpack.c.bf16 %v937, %v936
        %v941 = vpack.c.bf16 %v939, %v938
        %v942 = vunpack.c.l.bf16 %v940
        %v943 = vunpack.c.h.bf16 %v940
        %v944 = vunpack.c.l.bf16 %v941
        %v945 = vunpack.c.h.bf16 %v941
        %v946 = vsub.f32 %v936, %v942
        %v947 = vsub.f32 %v937, %v943
        %v948 = vsub.f32 %v938, %v944
        %v949 = vsub.f32 %v939, %v945
        %v950 = vpack.c.bf16 %v947, %v946
        %v951 = vpack.c.bf16 %v949, %v948
        %s952 = scalar_lea.vmem %s334, 48 [#allocation2]
        %v953 = vld [vmem:[%s952] sm:$0xff]
        %v954 = vld [vmem:[%s952 + $0x8] sm:$0xff]
        %v955 = vpack.c.bf16 %v954, %v953
        %v956 = vunpack.c.l.bf16 %v955
        %v957 = vunpack.c.h.bf16 %v955
        %v958 = vsub.f32 %v953, %v956
        %v959 = vsub.f32 %v954, %v957
        %v960 = vpack.c.bf16 %v959, %v958
        %961 = vmatprep.subr.bf16.mxu0 0
        %962 = vmatpush1.bf16.msra.mxu0 0
        %963 = vmatprep.subr.bf16.mxu0 0
        %964 = vmatpush1.bf16.msra.mxu0 0
        %965 = vmatprep.subr.bf16.mxu0 0
        %966 = vmatpush1.bf16.msra.mxu0 0
        %967 = vmatprep.subr.bf16.mxu0 0
        %968 = vmatpush1.bf16.msra.mxu0 0
        %969 = vmatprep.subr.bf16.mxu0 0
        %970 = vmatpush1.bf16.msra.mxu0 0
        %971 = vmatprep.subr.bf16.mxu0 0
        %972 = vmatpush1.bf16.msra.mxu0 0
        %973 = vmatprep.subr.bf16.mxu0 0
        %974 = vmatpush1.bf16.msra.mxu0 0
        %975 = vmatprep.subr.bf16.mxu0 0
        %976 = vmatpush1.bf16.msra.mxu0 %v955
        %977 = vmatprep.subr.bf16.mxu0 0
        %978 = vmatpush2.bf16.msra.mxu0 0
        %979 = vmatprep.subr.bf16.mxu0 0
        %980 = vmatpush2.bf16.msra.mxu0 0
        %981 = vmatprep.subr.bf16.mxu0 0
        %982 = vmatpush2.bf16.msra.mxu0 0
        %983 = vmatprep.subr.bf16.mxu0 0
        %984 = vmatpush2.bf16.msra.mxu0 0
        %985 = vmatprep.subr.bf16.mxu0 0
        %986 = vmatpush2.bf16.msra.mxu0 0
        %987 = vmatprep.subr.bf16.mxu0 0
        %988 = vmatpush2.bf16.msra.mxu0 0
        %989 = vmatprep.subr.bf16.mxu0 0
        %990 = vmatpush2.bf16.msra.mxu0 0
        %991 = vmatprep.subr.bf16.mxu0 0
        %992 = vmatpush2.bf16.msra.mxu0 0
        %993 = vmatprep.mubr.bf16.mxu0 0
        %994 = vmatmul.mubr.bf16.gmra.mxu0 %v424
        %v995 = vpop.f32.mrf.mxu0
        %v996 = vadd.f32 0.0, %v995
        %v997 = vpop.f32.mrf.mxu0
        %v998 = vpop.f32.mrf.mxu0
        %v999 = vadd.f32 0.0, %v998
        %v1000 = vpop.f32.mrf.mxu0
        %1001 = vmatprep.mubr.bf16.mxu0 0
        %1002 = vmatmul.mubr.bf16.gmra.mxu0 %v427
        %v1003 = vpop.f32.mrf.mxu0
        %v1004 = vadd.f32 0.0, %v1003
        %v1005 = vpop.f32.mrf.mxu0
        %v1006 = vpop.f32.mrf.mxu0
        %v1007 = vadd.f32 0.0, %v1006
        %v1008 = vpop.f32.mrf.mxu0
        %1009 = vdwg.mxu0
        %1010 = vmatprep.subr.bf16.mxu0 0
        %1011 = vmatpush1.bf16.msra.mxu0 0
        %1012 = vmatprep.subr.bf16.mxu0 0
        %1013 = vmatpush1.bf16.msra.mxu0 0
        %1014 = vmatprep.subr.bf16.mxu0 0
        %1015 = vmatpush1.bf16.msra.mxu0 0
        %1016 = vmatprep.subr.bf16.mxu0 0
        %1017 = vmatpush1.bf16.msra.mxu0 0
        %1018 = vmatprep.subr.bf16.mxu0 0
        %1019 = vmatpush1.bf16.msra.mxu0 0
        %1020 = vmatprep.subr.bf16.mxu0 0
        %1021 = vmatpush1.bf16.msra.mxu0 0
        %1022 = vmatprep.subr.bf16.mxu0 0
        %1023 = vmatpush1.bf16.msra.mxu0 0
        %1024 = vmatprep.subr.bf16.mxu0 0
        %1025 = vmatpush1.bf16.msra.mxu0 %v955
        %1026 = vmatprep.subr.bf16.mxu0 0
        %1027 = vmatpush2.bf16.msra.mxu0 0
        %1028 = vmatprep.subr.bf16.mxu0 0
        %1029 = vmatpush2.bf16.msra.mxu0 0
        %1030 = vmatprep.subr.bf16.mxu0 0
        %1031 = vmatpush2.bf16.msra.mxu0 0
        %1032 = vmatprep.subr.bf16.mxu0 0
        %1033 = vmatpush2.bf16.msra.mxu0 0
        %1034 = vmatprep.subr.bf16.mxu0 0
        %1035 = vmatpush2.bf16.msra.mxu0 0
        %1036 = vmatprep.subr.bf16.mxu0 0
        %1037 = vmatpush2.bf16.msra.mxu0 0
        %1038 = vmatprep.subr.bf16.mxu0 0
        %1039 = vmatpush2.bf16.msra.mxu0 0
        %1040 = vmatprep.subr.bf16.mxu0 0
        %1041 = vmatpush2.bf16.msra.mxu0 0
        %1042 = vmatprep.mubr.bf16.mxu0 0
        %1043 = vmatmul.mubr.bf16.gmra.mxu0 %v489
        %v1044 = vpop.f32.mrf.mxu0
        %v1045 = vadd.f32 %v996, %v1044
        %v1046 = vpop.f32.mrf.mxu0
        %v1047 = vpop.f32.mrf.mxu0
        %v1048 = vadd.f32 %v999, %v1047
        %v1049 = vpop.f32.mrf.mxu0
        %1050 = vmatprep.mubr.bf16.mxu0 0
        %1051 = vmatmul.mubr.bf16.gmra.mxu0 %v492
        %v1052 = vpop.f32.mrf.mxu0
        %v1053 = vadd.f32 %v1004, %v1052
        %v1054 = vpop.f32.mrf.mxu0
        %v1055 = vpop.f32.mrf.mxu0
        %v1056 = vadd.f32 %v1007, %v1055
        %v1057 = vpop.f32.mrf.mxu0
        %1058 = vdwg.mxu0
        %1059 = vmatprep.subr.bf16.mxu0 0
        %1060 = vmatpush1.bf16.msra.mxu0 0
        %1061 = vmatprep.subr.bf16.mxu0 0
        %1062 = vmatpush1.bf16.msra.mxu0 0
        %1063 = vmatprep.subr.bf16.mxu0 0
        %1064 = vmatpush1.bf16.msra.mxu0 0
        %1065 = vmatprep.subr.bf16.mxu0 0
        %1066 = vmatpush1.bf16.msra.mxu0 0
        %1067 = vmatprep.subr.bf16.mxu0 0
        %1068 = vmatpush1.bf16.msra.mxu0 0
        %1069 = vmatprep.subr.bf16.mxu0 0
        %1070 = vmatpush1.bf16.msra.mxu0 0
        %1071 = vmatprep.subr.bf16.mxu0 0
        %1072 = vmatpush1.bf16.msra.mxu0 0
        %1073 = vmatprep.subr.bf16.mxu0 0
        %1074 = vmatpush1.bf16.msra.mxu0 %v960
        %1075 = vmatprep.subr.bf16.mxu0 0
        %1076 = vmatpush2.bf16.msra.mxu0 0
        %1077 = vmatprep.subr.bf16.mxu0 0
        %1078 = vmatpush2.bf16.msra.mxu0 0
        %1079 = vmatprep.subr.bf16.mxu0 0
        %1080 = vmatpush2.bf16.msra.mxu0 0
        %1081 = vmatprep.subr.bf16.mxu0 0
        %1082 = vmatpush2.bf16.msra.mxu0 0
        %1083 = vmatprep.subr.bf16.mxu0 0
        %1084 = vmatpush2.bf16.msra.mxu0 0
        %1085 = vmatprep.subr.bf16.mxu0 0
        %1086 = vmatpush2.bf16.msra.mxu0 0
        %1087 = vmatprep.subr.bf16.mxu0 0
        %1088 = vmatpush2.bf16.msra.mxu0 0
        %1089 = vmatprep.subr.bf16.mxu0 0
        %1090 = vmatpush2.bf16.msra.mxu0 0
        %1091 = vmatprep.mubr.bf16.mxu0 0
        %1092 = vmatmul.mubr.bf16.gmra.mxu0 %v489
        %v1093 = vpop.f32.mrf.mxu0
        %v1094 = vadd.f32 0.0, %v1093
        %v1095 = vpop.f32.mrf.mxu0
        %v1096 = vpop.f32.mrf.mxu0
        %v1097 = vadd.f32 0.0, %v1096
        %v1098 = vpop.f32.mrf.mxu0
        %1099 = vmatprep.mubr.bf16.mxu0 0
        %1100 = vmatmul.mubr.bf16.gmra.mxu0 %v492
        %v1101 = vpop.f32.mrf.mxu0
        %v1102 = vadd.f32 0.0, %v1101
        %v1103 = vpop.f32.mrf.mxu0
        %v1104 = vpop.f32.mrf.mxu0
        %v1105 = vadd.f32 0.0, %v1104
        %v1106 = vpop.f32.mrf.mxu0
        %1107 = vdwg.mxu0
        %v1108 = vadd.f32 %v1045, %v1094
        %v1109 = vadd.f32 %v1048, %v1097
        %v1110 = vadd.f32 %v1053, %v1102
        %v1111 = vadd.f32 %v1056, %v1105
        %v1112 = vpack.c.bf16 %v1109, %v1108
        %v1113 = vpack.c.bf16 %v1111, %v1110
        %v1114 = vunpack.c.l.bf16 %v1112
        %v1115 = vunpack.c.h.bf16 %v1112
        %v1116 = vunpack.c.l.bf16 %v1113
        %v1117 = vunpack.c.h.bf16 %v1113
        %v1118 = vsub.f32 %v1108, %v1114
        %v1119 = vsub.f32 %v1109, %v1115
        %v1120 = vsub.f32 %v1110, %v1116
        %v1121 = vsub.f32 %v1111, %v1117
        %v1122 = vpack.c.bf16 %v1119, %v1118
        %v1123 = vpack.c.bf16 %v1121, %v1120
        %v1124 = vld [vmem:[%s2] sm:$0xf]
        %v1125 = vld [vmem:[%s2 + $0x4] sm:$0xf]
        %1134 = vrot.lane.b32.xlu0 %v596, 16
        %v1135 = vpop.permute.xlu0 %1134
        %1136 = vrot.lane.b32.xlu0 %v597, 16
        %v1137 = vpop.permute.xlu0 %1136
        %1138 = vrot.lane.b32.xlu0 %v768, 16
        %v1139 = vpop.permute.xlu0 %1138
        %1140 = vrot.lane.b32.xlu0 %v769, 16
        %v1141 = vpop.permute.xlu0 %1140
        %1142 = vrot.lane.b32.xlu0 %v940, 16
        %v1143 = vpop.permute.xlu0 %1142
        %1144 = vrot.lane.b32.xlu0 %v941, 16
        %v1145 = vpop.permute.xlu0 %1144
        %1146 = vrot.lane.b32.xlu0 %v1112, 16
        %v1147 = vpop.permute.xlu0 %1146
        %1148 = vrot.lane.b32.xlu0 %v1113, 16
        %v1149 = vpop.permute.xlu0 %1148
        %v1152 = vsel %vm422, %v606, %v1135
        %v1155 = vsel %vm422, %v607, %v1137
        %v1158 = vsel %vm422, %v778, %v1139
        %v1161 = vsel %vm422, %v779, %v1141
        %v1164 = vsel %vm422, %v950, %v1143
        %v1167 = vsel %vm422, %v951, %v1145
        %v1170 = vsel %vm422, %v1122, %v1147
        %v1173 = vsel %vm422, %v1123, %v1149
        %v1174 = vld [vmem:[%s2 + $0x8] sm:$0xf]
        %v1175 = vld [vmem:[%s2 + $0xc] sm:$0xf]
        %v1180 = vunpack.c.l.b16 %v1124
        %v1181 = vunpack.c.l.b16 %v1125
        %v1182 = vunpack.c.l.b16 %v1174
        %v1183 = vunpack.c.l.b16 %v1175
        %v1184 = vpack.c.b16 %v1181, %v1180
        %v1185 = vpack.c.b16 %v1183, %v1182
        %vm1188 = vcmask 261120
        %v1189 = vsel %vm1188, %v1152, 0
        %v1191 = vsel %vm1188, %v1155, 0
        %v1193 = vsel %vm1188, %v1158, 0
        %v1195 = vsel %vm1188, %v1161, 0
        %v1197 = vsel %vm1188, %v1164, 0
        %v1199 = vsel %vm1188, %v1167, 0
        %v1201 = vsel %vm1188, %v1170, 0
        %v1203 = vsel %vm1188, %v1173, 0
        %1205 = vmatprep.subr.bf16.mxu0 0
        %1206 = vmatpush1.bf16.msra.mxu0 0
        %1207 = vmatprep.subr.bf16.mxu0 0
        %1208 = vmatpush1.bf16.msra.mxu0 0
        %1209 = vmatprep.subr.bf16.mxu0 0
        %1210 = vmatpush1.bf16.msra.mxu0 0
        %1211 = vmatprep.subr.bf16.mxu0 0
        %1212 = vmatpush1.bf16.msra.mxu0 0
        %1213 = vmatprep.subr.bf16.mxu0 0
        %1214 = vmatpush1.bf16.msra.mxu0 0
        %1215 = vmatprep.subr.bf16.mxu0 0
        %1216 = vmatpush1.bf16.msra.mxu0 0
        %1217 = vmatprep.subr.bf16.mxu0 0
        %1218 = vmatpush1.bf16.msra.mxu0 %v1185
        %1219 = vmatprep.subr.bf16.mxu0 0
        %1220 = vmatpush1.bf16.msra.mxu0 %v1184
        %1221 = vmatprep.subr.bf16.mxu0 0
        %1222 = vmatpush2.bf16.msra.mxu0 0
        %1223 = vmatprep.subr.bf16.mxu0 0
        %1224 = vmatpush2.bf16.msra.mxu0 0
        %1225 = vmatprep.subr.bf16.mxu0 0
        %1226 = vmatpush2.bf16.msra.mxu0 0
        %1227 = vmatprep.subr.bf16.mxu0 0
        %1228 = vmatpush2.bf16.msra.mxu0 0
        %1229 = vmatprep.subr.bf16.mxu0 0
        %1230 = vmatpush2.bf16.msra.mxu0 0
        %1231 = vmatprep.subr.bf16.mxu0 0
        %1232 = vmatpush2.bf16.msra.mxu0 0
        %1233 = vmatprep.subr.bf16.mxu0 0
        %1234 = vmatpush2.bf16.msra.mxu0 0
        %1235 = vmatprep.subr.bf16.mxu0 0
        %1236 = vmatpush2.bf16.msra.mxu0 0
        %1237 = vmatprep.mubr.bf16.mxu0 0
        %1238 = vmatmul.mubr.bf16.gmra.mxu0 %v1189
        %v1239 = vpop.f32.mrf.mxu0
        %v1240 = vadd.f32 0.0, %v1239
        %v1241 = vpop.f32.mrf.mxu0
        %v1242 = vpop.f32.mrf.mxu0
        %v1243 = vadd.f32 0.0, %v1242
        %v1244 = vpop.f32.mrf.mxu0
        %1245 = vmatprep.mubr.bf16.mxu0 0
        %1246 = vmatmul.mubr.bf16.gmra.mxu0 %v1191
        %v1247 = vpop.f32.mrf.mxu0
        %v1248 = vadd.f32 0.0, %v1247
        %v1249 = vpop.f32.mrf.mxu0
        %v1250 = vpop.f32.mrf.mxu0
        %v1251 = vadd.f32 0.0, %v1250
        %v1252 = vpop.f32.mrf.mxu0
        %1253 = vmatprep.mubr.bf16.mxu0 0
        %1254 = vmatmul.mubr.bf16.gmra.mxu0 %v1193
        %v1255 = vpop.f32.mrf.mxu0
        %v1256 = vadd.f32 0.0, %v1255
        %v1257 = vpop.f32.mrf.mxu0
        %v1258 = vpop.f32.mrf.mxu0
        %v1259 = vadd.f32 0.0, %v1258
        %v1260 = vpop.f32.mrf.mxu0
        %1261 = vmatprep.mubr.bf16.mxu0 0
        %1262 = vmatmul.mubr.bf16.gmra.mxu0 %v1195
        %v1263 = vpop.f32.mrf.mxu0
        %v1264 = vadd.f32 0.0, %v1263
        %v1265 = vpop.f32.mrf.mxu0
        %v1266 = vpop.f32.mrf.mxu0
        %v1267 = vadd.f32 0.0, %v1266
        %v1268 = vpop.f32.mrf.mxu0
        %1269 = vmatprep.mubr.bf16.mxu0 0
        %1270 = vmatmul.mubr.bf16.gmra.mxu0 %v1197
        %v1271 = vpop.f32.mrf.mxu0
        %v1272 = vadd.f32 0.0, %v1271
        %v1273 = vpop.f32.mrf.mxu0
        %v1274 = vpop.f32.mrf.mxu0
        %v1275 = vadd.f32 0.0, %v1274
        %v1276 = vpop.f32.mrf.mxu0
        %1277 = vmatprep.mubr.bf16.mxu0 0
        %1278 = vmatmul.mubr.bf16.gmra.mxu0 %v1199
        %v1279 = vpop.f32.mrf.mxu0
        %v1280 = vadd.f32 0.0, %v1279
        %v1281 = vpop.f32.mrf.mxu0
        %v1282 = vpop.f32.mrf.mxu0
        %v1283 = vadd.f32 0.0, %v1282
        %v1284 = vpop.f32.mrf.mxu0
        %1285 = vmatprep.mubr.bf16.mxu0 0
        %1286 = vmatmul.mubr.bf16.gmra.mxu0 %v1201
        %v1287 = vpop.f32.mrf.mxu0
        %v1288 = vadd.f32 0.0, %v1287
        %v1289 = vpop.f32.mrf.mxu0
        %v1290 = vpop.f32.mrf.mxu0
        %v1291 = vadd.f32 0.0, %v1290
        %v1292 = vpop.f32.mrf.mxu0
        %1293 = vmatprep.mubr.bf16.mxu0 0
        %1294 = vmatmul.mubr.bf16.gmra.mxu0 %v1203
        %v1295 = vpop.f32.mrf.mxu0
        %v1296 = vadd.f32 0.0, %v1295
        %v1297 = vpop.f32.mrf.mxu0
        %v1298 = vpop.f32.mrf.mxu0
        %v1299 = vadd.f32 0.0, %v1298
        %v1300 = vpop.f32.mrf.mxu0
        %1301 = vdwg.mxu0
        %v1303 = vsel %vm422, %v596, 0
        %v1306 = vsel %vm422, %v597, 0
        %v1309 = vsel %vm422, %v768, 0
        %v1312 = vsel %vm422, %v769, 0
        %v1315 = vsel %vm422, %v940, 0
        %v1318 = vsel %vm422, %v941, 0
        %v1321 = vsel %vm422, %v1112, 0
        %v1324 = vsel %vm422, %v1113, 0
        %1326 = vmatprep.subr.bf16.mxu0 0
        %1327 = vmatpush1.bf16.msra.mxu0 0
        %1328 = vmatprep.subr.bf16.mxu0 0
        %1329 = vmatpush1.bf16.msra.mxu0 0
        %1330 = vmatprep.subr.bf16.mxu0 0
        %1331 = vmatpush1.bf16.msra.mxu0 0
        %1332 = vmatprep.subr.bf16.mxu0 0
        %1333 = vmatpush1.bf16.msra.mxu0 0
        %1334 = vmatprep.subr.bf16.mxu0 0
        %1335 = vmatpush1.bf16.msra.mxu0 0
        %1336 = vmatprep.subr.bf16.mxu0 0
        %1337 = vmatpush1.bf16.msra.mxu0 0
        %1338 = vmatprep.subr.bf16.mxu0 0
        %1339 = vmatpush1.bf16.msra.mxu0 0
        %1340 = vmatprep.subr.bf16.mxu0 0
        %1341 = vmatpush1.bf16.msra.mxu0 %v1184
        %1342 = vmatprep.subr.bf16.mxu0 0
        %1343 = vmatpush2.bf16.msra.mxu0 0
        %1344 = vmatprep.subr.bf16.mxu0 0
        %1345 = vmatpush2.bf16.msra.mxu0 0
        %1346 = vmatprep.subr.bf16.mxu0 0
        %1347 = vmatpush2.bf16.msra.mxu0 0
        %1348 = vmatprep.subr.bf16.mxu0 0
        %1349 = vmatpush2.bf16.msra.mxu0 0
        %1350 = vmatprep.subr.bf16.mxu0 0
        %1351 = vmatpush2.bf16.msra.mxu0 0
        %1352 = vmatprep.subr.bf16.mxu0 0
        %1353 = vmatpush2.bf16.msra.mxu0 0
        %1354 = vmatprep.subr.bf16.mxu0 0
        %1355 = vmatpush2.bf16.msra.mxu0 0
        %1356 = vmatprep.subr.bf16.mxu0 0
        %1357 = vmatpush2.bf16.msra.mxu0 0
        %1358 = vmatprep.mubr.bf16.mxu0 0
        %1359 = vmatmul.mubr.bf16.gmra.mxu0 %v1303
        %v1360 = vpop.f32.mrf.mxu0
        %v1361 = vadd.f32 %v1240, %v1360
        %v1362 = vpop.f32.mrf.mxu0
        %v1363 = vpop.f32.mrf.mxu0
        %v1364 = vadd.f32 %v1243, %v1363
        %v1365 = vpop.f32.mrf.mxu0
        %1366 = vmatprep.mubr.bf16.mxu0 0
        %1367 = vmatmul.mubr.bf16.gmra.mxu0 %v1306
        %v1368 = vpop.f32.mrf.mxu0
        %v1369 = vadd.f32 %v1248, %v1368
        %v1370 = vpop.f32.mrf.mxu0
        %v1371 = vpop.f32.mrf.mxu0
        %v1372 = vadd.f32 %v1251, %v1371
        %v1373 = vpop.f32.mrf.mxu0
        %1374 = vmatprep.mubr.bf16.mxu0 0
        %1375 = vmatmul.mubr.bf16.gmra.mxu0 %v1309
        %v1376 = vpop.f32.mrf.mxu0
        %v1377 = vadd.f32 %v1256, %v1376
        %v1378 = vpop.f32.mrf.mxu0
        %v1379 = vpop.f32.mrf.mxu0
        %v1380 = vadd.f32 %v1259, %v1379
        %v1381 = vpop.f32.mrf.mxu0
        %1382 = vmatprep.mubr.bf16.mxu0 0
        %1383 = vmatmul.mubr.bf16.gmra.mxu0 %v1312
        %v1384 = vpop.f32.mrf.mxu0
        %v1385 = vadd.f32 %v1264, %v1384
        %v1386 = vpop.f32.mrf.mxu0
        %v1387 = vpop.f32.mrf.mxu0
        %v1388 = vadd.f32 %v1267, %v1387
        %v1389 = vpop.f32.mrf.mxu0
        %1390 = vmatprep.mubr.bf16.mxu0 0
        %1391 = vmatmul.mubr.bf16.gmra.mxu0 %v1315
        %v1392 = vpop.f32.mrf.mxu0
        %v1393 = vadd.f32 %v1272, %v1392
        %v1394 = vpop.f32.mrf.mxu0
        %v1395 = vpop.f32.mrf.mxu0
        %v1396 = vadd.f32 %v1275, %v1395
        %v1397 = vpop.f32.mrf.mxu0
        %1398 = vmatprep.mubr.bf16.mxu0 0
        %1399 = vmatmul.mubr.bf16.gmra.mxu0 %v1318
        %v1400 = vpop.f32.mrf.mxu0
        %v1401 = vadd.f32 %v1280, %v1400
        %v1402 = vpop.f32.mrf.mxu0
        %v1403 = vpop.f32.mrf.mxu0
        %v1404 = vadd.f32 %v1283, %v1403
        %v1405 = vpop.f32.mrf.mxu0
        %1406 = vmatprep.mubr.bf16.mxu0 0
        %1407 = vmatmul.mubr.bf16.gmra.mxu0 %v1321
        %v1408 = vpop.f32.mrf.mxu0
        %v1409 = vadd.f32 %v1288, %v1408
        %v1410 = vpop.f32.mrf.mxu0
        %v1411 = vpop.f32.mrf.mxu0
        %v1412 = vadd.f32 %v1291, %v1411
        %v1413 = vpop.f32.mrf.mxu0
        %1414 = vmatprep.mubr.bf16.mxu0 0
        %1415 = vmatmul.mubr.bf16.gmra.mxu0 %v1324
        %v1416 = vpop.f32.mrf.mxu0
        %v1417 = vadd.f32 %v1296, %v1416
        %v1418 = vpop.f32.mrf.mxu0
        %v1419 = vpop.f32.mrf.mxu0
        %v1420 = vadd.f32 %v1299, %v1419
        %v1421 = vpop.f32.mrf.mxu0
        %1422 = vdwg.mxu0
        %1425 = vrot.lane.b32.xlu0 %v1369, 112
        %v1426 = vpop.permute.xlu0 %1425
        %1427 = vrot.lane.b32.xlu0 %v1372, 112
        %v1428 = vpop.permute.xlu0 %1427
        %v1431 = vadd.f32 %v1361, %v1426
        %v1432 = vadd.f32 %v1364, %v1428
        %1435 = vrot.lane.b32.xlu0 %v1361, 112
        %v1436 = vpop.permute.xlu0 %1435
        %1437 = vrot.lane.b32.xlu0 %v1364, 112
        %v1438 = vpop.permute.xlu0 %1437
        %v1441 = vsub.f32 %v1369, %v1436
        %v1442 = vsub.f32 %v1372, %v1438
        %v1443 = vmul.f32 %v400, %v1431
        %v1444 = vmul.f32 %v401, %v1432
        %v1445 = vmul.f32 %v402, %v1441
        %v1446 = vmul.f32 %v403, %v1442
        %v1447 = vsub.f32 %v1443, %v1445
        %v1448 = vsub.f32 %v1444, %v1446
        %v1449 = vmul.f32 %v400, %v1441
        %v1450 = vmul.f32 %v401, %v1442
        %v1451 = vmul.f32 %v402, %v1431
        %v1452 = vmul.f32 %v403, %v1432
        %v1453 = vadd.f32 %v1449, %v1451
        %v1454 = vadd.f32 %v1450, %v1452
        %1457 = vrot.lane.b32.xlu0 %v1453, 16
        %v1458 = vpop.permute.xlu0 %1457
        %1459 = vrot.lane.b32.xlu0 %v1454, 16
        %v1460 = vpop.permute.xlu0 %1459
        %v1463 = vsel %vm422, %v1447, %v1458
        %v1464 = vsel %vm422, %v1448, %v1460
        %v1465 = vpack.c.bf16 %v1464, %v1463
        %v1466 = vunpack.c.l.bf16 %v1465
        %v1467 = vunpack.c.h.bf16 %v1465
        %v1468 = vsub.f32 %v1463, %v1466
        %v1469 = vsub.f32 %v1464, %v1467
        %v1470 = vpack.c.bf16 %v1469, %v1468
        %v1473 = vunpack.c.l.b16 %v398
        %v1474 = vunpack.c.l.b16 %v399
        %v1475 = vpack.c.b16 %v1474, %v1473
        %v1477 = vsel %vm422, %v1475, 0
        %1479 = vmatprep.subr.bf16.mxu0 0
        %1480 = vmatpush1.bf16.msra.mxu0 0
        %1481 = vmatprep.subr.bf16.mxu0 0
        %1482 = vmatpush1.bf16.msra.mxu0 0
        %1483 = vmatprep.subr.bf16.mxu0 0
        %1484 = vmatpush1.bf16.msra.mxu0 0
        %1485 = vmatprep.subr.bf16.mxu0 0
        %1486 = vmatpush1.bf16.msra.mxu0 0
        %1487 = vmatprep.subr.bf16.mxu0 0
        %1488 = vmatpush1.bf16.msra.mxu0 0
        %1489 = vmatprep.subr.bf16.mxu0 0
        %1490 = vmatpush1.bf16.msra.mxu0 0
        %1491 = vmatprep.subr.bf16.mxu0 0
        %1492 = vmatpush1.bf16.msra.mxu0 0
        %1493 = vmatprep.subr.bf16.mxu0 0
        %1494 = vmatpush1.bf16.msra.mxu0 %v1465
        %1495 = vmatprep.subr.bf16.mxu0 0
        %1496 = vmatpush2.bf16.msra.mxu0 0
        %1497 = vmatprep.subr.bf16.mxu0 0
        %1498 = vmatpush2.bf16.msra.mxu0 0
        %1499 = vmatprep.subr.bf16.mxu0 0
        %1500 = vmatpush2.bf16.msra.mxu0 0
        %1501 = vmatprep.subr.bf16.mxu0 0
        %1502 = vmatpush2.bf16.msra.mxu0 0
        %1503 = vmatprep.subr.bf16.mxu0 0
        %1504 = vmatpush2.bf16.msra.mxu0 0
        %1505 = vmatprep.subr.bf16.mxu0 0
        %1506 = vmatpush2.bf16.msra.mxu0 0
        %1507 = vmatprep.subr.bf16.mxu0 0
        %1508 = vmatpush2.bf16.msra.mxu0 0
        %1509 = vmatprep.subr.bf16.mxu0 0
        %1510 = vmatpush2.bf16.msra.mxu0 0
        %1511 = vmatprep.mubr.bf16.mxu0 0
        %1512 = vmatmul.mubr.bf16.gmra.mxu0 %v1477
        %v1513 = vpop.f32.mrf.mxu0
        %v1514 = vadd.f32 0.0, %v1513
        %v1515 = vpop.f32.mrf.mxu0
        %v1516 = vpop.f32.mrf.mxu0
        %v1517 = vadd.f32 0.0, %v1516
        %v1518 = vpop.f32.mrf.mxu0
        %1519 = vdwg.mxu0
        %v1522 = vunpack.c.l.b16 %v395
        %v1523 = vunpack.c.l.b16 %v396
        %v1524 = vpack.c.b16 %v1523, %v1522
        %v1526 = vsel %vm422, %v1524, 0
        %1528 = vmatprep.subr.bf16.mxu0 0
        %1529 = vmatpush1.bf16.msra.mxu0 0
        %1530 = vmatprep.subr.bf16.mxu0 0
        %1531 = vmatpush1.bf16.msra.mxu0 0
        %1532 = vmatprep.subr.bf16.mxu0 0
        %1533 = vmatpush1.bf16.msra.mxu0 0
        %1534 = vmatprep.subr.bf16.mxu0 0
        %1535 = vmatpush1.bf16.msra.mxu0 0
        %1536 = vmatprep.subr.bf16.mxu0 0
        %1537 = vmatpush1.bf16.msra.mxu0 0
        %1538 = vmatprep.subr.bf16.mxu0 0
        %1539 = vmatpush1.bf16.msra.mxu0 0
        %1540 = vmatprep.subr.bf16.mxu0 0
        %1541 = vmatpush1.bf16.msra.mxu0 0
        %1542 = vmatprep.subr.bf16.mxu0 0
        %1543 = vmatpush1.bf16.msra.mxu0 %v1465
        %1544 = vmatprep.subr.bf16.mxu0 0
        %1545 = vmatpush2.bf16.msra.mxu0 0
        %1546 = vmatprep.subr.bf16.mxu0 0
        %1547 = vmatpush2.bf16.msra.mxu0 0
        %1548 = vmatprep.subr.bf16.mxu0 0
        %1549 = vmatpush2.bf16.msra.mxu0 0
        %1550 = vmatprep.subr.bf16.mxu0 0
        %1551 = vmatpush2.bf16.msra.mxu0 0
        %1552 = vmatprep.subr.bf16.mxu0 0
        %1553 = vmatpush2.bf16.msra.mxu0 0
        %1554 = vmatprep.subr.bf16.mxu0 0
        %1555 = vmatpush2.bf16.msra.mxu0 0
        %1556 = vmatprep.subr.bf16.mxu0 0
        %1557 = vmatpush2.bf16.msra.mxu0 0
        %1558 = vmatprep.subr.bf16.mxu0 0
        %1559 = vmatpush2.bf16.msra.mxu0 0
        %1560 = vmatprep.mubr.bf16.mxu0 0
        %1561 = vmatmul.mubr.bf16.gmra.mxu0 %v1526
        %v1562 = vpop.f32.mrf.mxu0
        %v1563 = vadd.f32 %v1514, %v1562
        %v1564 = vpop.f32.mrf.mxu0
        %v1565 = vpop.f32.mrf.mxu0
        %v1566 = vadd.f32 %v1517, %v1565
        %v1567 = vpop.f32.mrf.mxu0
        %1568 = vdwg.mxu0
        %1569 = vmatprep.subr.bf16.mxu0 0
        %1570 = vmatpush1.bf16.msra.mxu0 0
        %1571 = vmatprep.subr.bf16.mxu0 0
        %1572 = vmatpush1.bf16.msra.mxu0 0
        %1573 = vmatprep.subr.bf16.mxu0 0
        %1574 = vmatpush1.bf16.msra.mxu0 0
        %1575 = vmatprep.subr.bf16.mxu0 0
        %1576 = vmatpush1.bf16.msra.mxu0 0
        %1577 = vmatprep.subr.bf16.mxu0 0
        %1578 = vmatpush1.bf16.msra.mxu0 0
        %1579 = vmatprep.subr.bf16.mxu0 0
        %1580 = vmatpush1.bf16.msra.mxu0 0
        %1581 = vmatprep.subr.bf16.mxu0 0
        %1582 = vmatpush1.bf16.msra.mxu0 0
        %1583 = vmatprep.subr.bf16.mxu0 0
        %1584 = vmatpush1.bf16.msra.mxu0 %v1470
        %1585 = vmatprep.subr.bf16.mxu0 0
        %1586 = vmatpush2.bf16.msra.mxu0 0
        %1587 = vmatprep.subr.bf16.mxu0 0
        %1588 = vmatpush2.bf16.msra.mxu0 0
        %1589 = vmatprep.subr.bf16.mxu0 0
        %1590 = vmatpush2.bf16.msra.mxu0 0
        %1591 = vmatprep.subr.bf16.mxu0 0
        %1592 = vmatpush2.bf16.msra.mxu0 0
        %1593 = vmatprep.subr.bf16.mxu0 0
        %1594 = vmatpush2.bf16.msra.mxu0 0
        %1595 = vmatprep.subr.bf16.mxu0 0
        %1596 = vmatpush2.bf16.msra.mxu0 0
        %1597 = vmatprep.subr.bf16.mxu0 0
        %1598 = vmatpush2.bf16.msra.mxu0 0
        %1599 = vmatprep.subr.bf16.mxu0 0
        %1600 = vmatpush2.bf16.msra.mxu0 0
        %1601 = vmatprep.mubr.bf16.mxu0 0
        %1602 = vmatmul.mubr.bf16.gmra.mxu0 %v1526
        %v1603 = vpop.f32.mrf.mxu0
        %v1604 = vadd.f32 0.0, %v1603
        %v1605 = vpop.f32.mrf.mxu0
        %v1606 = vpop.f32.mrf.mxu0
        %v1607 = vadd.f32 0.0, %v1606
        %v1608 = vpop.f32.mrf.mxu0
        %1609 = vdwg.mxu0
        %v1610 = vadd.f32 %v1563, %v1604
        %v1611 = vadd.f32 %v1566, %v1607
        %1613 = vrot.lane.b32.xlu0 %v1611, 112
        %v1614 = vpop.permute.xlu0 %1613
        %v1616 = vsub.f32 %v1610, %v1614
        %1617 = vrot.lane.b32.xlu0 %v1611, 16
        %v1618 = vpop.permute.xlu0 %1617
        %v1620 = vadd.f32 %v1610, %v1618
        %v1621 = vsel %vm422, %v1616, %v1620
        %v1622 = vpack.c.bf16 %v1621, %v1621
        %v1623 = vunpack.c.l.bf16 %v1622
        %v1624 = vsub.f32 %v1621, %v1623
        %v1625 = vpack.c.bf16 %v1624, %v1624
        %1628 = vrot.lane.b32.xlu0 %v1385, 112
        %v1629 = vpop.permute.xlu0 %1628
        %1630 = vrot.lane.b32.xlu0 %v1388, 112
        %v1631 = vpop.permute.xlu0 %1630
        %v1634 = vadd.f32 %v1377, %v1629
        %v1635 = vadd.f32 %v1380, %v1631
        %1638 = vrot.lane.b32.xlu0 %v1377, 112
        %v1639 = vpop.permute.xlu0 %1638
        %1640 = vrot.lane.b32.xlu0 %v1380, 112
        %v1641 = vpop.permute.xlu0 %1640
        %v1644 = vsub.f32 %v1385, %v1639
        %v1645 = vsub.f32 %v1388, %v1641
        %v1646 = vmul.f32 %v400, %v1634
        %v1647 = vmul.f32 %v401, %v1635
        %v1648 = vmul.f32 %v402, %v1644
        %v1649 = vmul.f32 %v403, %v1645
        %v1650 = vsub.f32 %v1646, %v1648
        %v1651 = vsub.f32 %v1647, %v1649
        %v1652 = vmul.f32 %v400, %v1644
        %v1653 = vmul.f32 %v401, %v1645
        %v1654 = vmul.f32 %v402, %v1634
        %v1655 = vmul.f32 %v403, %v1635
        %v1656 = vadd.f32 %v1652, %v1654
        %v1657 = vadd.f32 %v1653, %v1655
        %1660 = vrot.lane.b32.xlu0 %v1656, 16
        %v1661 = vpop.permute.xlu0 %1660
        %1662 = vrot.lane.b32.xlu0 %v1657, 16
        %v1663 = vpop.permute.xlu0 %1662
        %v1666 = vsel %vm422, %v1650, %v1661
        %v1667 = vsel %vm422, %v1651, %v1663
        %v1668 = vpack.c.bf16 %v1667, %v1666
        %v1669 = vunpack.c.l.bf16 %v1668
        %v1670 = vunpack.c.h.bf16 %v1668
        %v1671 = vsub.f32 %v1666, %v1669
        %v1672 = vsub.f32 %v1667, %v1670
        %v1673 = vpack.c.bf16 %v1672, %v1671
        %1674 = vmatprep.subr.bf16.mxu0 0
        %1675 = vmatpush1.bf16.msra.mxu0 0
        %1676 = vmatprep.subr.bf16.mxu0 0
        %1677 = vmatpush1.bf16.msra.mxu0 0
        %1678 = vmatprep.subr.bf16.mxu0 0
        %1679 = vmatpush1.bf16.msra.mxu0 0
        %1680 = vmatprep.subr.bf16.mxu0 0
        %1681 = vmatpush1.bf16.msra.mxu0 0
        %1682 = vmatprep.subr.bf16.mxu0 0
        %1683 = vmatpush1.bf16.msra.mxu0 0
        %1684 = vmatprep.subr.bf16.mxu0 0
        %1685 = vmatpush1.bf16.msra.mxu0 0
        %1686 = vmatprep.subr.bf16.mxu0 0
        %1687 = vmatpush1.bf16.msra.mxu0 0
        %1688 = vmatprep.subr.bf16.mxu0 0
        %1689 = vmatpush1.bf16.msra.mxu0 %v1668
        %1690 = vmatprep.subr.bf16.mxu0 0
        %1691 = vmatpush2.bf16.msra.mxu0 0
        %1692 = vmatprep.subr.bf16.mxu0 0
        %1693 = vmatpush2.bf16.msra.mxu0 0
        %1694 = vmatprep.subr.bf16.mxu0 0
        %1695 = vmatpush2.bf16.msra.mxu0 0
        %1696 = vmatprep.subr.bf16.mxu0 0
        %1697 = vmatpush2.bf16.msra.mxu0 0
        %1698 = vmatprep.subr.bf16.mxu0 0
        %1699 = vmatpush2.bf16.msra.mxu0 0
        %1700 = vmatprep.subr.bf16.mxu0 0
        %1701 = vmatpush2.bf16.msra.mxu0 0
        %1702 = vmatprep.subr.bf16.mxu0 0
        %1703 = vmatpush2.bf16.msra.mxu0 0
        %1704 = vmatprep.subr.bf16.mxu0 0
        %1705 = vmatpush2.bf16.msra.mxu0 0
        %1706 = vmatprep.mubr.bf16.mxu0 0
        %1707 = vmatmul.mubr.bf16.gmra.mxu0 %v1477
        %v1708 = vpop.f32.mrf.mxu0
        %v1709 = vadd.f32 0.0, %v1708
        %v1710 = vpop.f32.mrf.mxu0
        %v1711 = vpop.f32.mrf.mxu0
        %v1712 = vadd.f32 0.0, %v1711
        %v1713 = vpop.f32.mrf.mxu0
        %1714 = vdwg.mxu0
        %1715 = vmatprep.subr.bf16.mxu0 0
        %1716 = vmatpush1.bf16.msra.mxu0 0
        %1717 = vmatprep.subr.bf16.mxu0 0
        %1718 = vmatpush1.bf16.msra.mxu0 0
        %1719 = vmatprep.subr.bf16.mxu0 0
        %1720 = vmatpush1.bf16.msra.mxu0 0
        %1721 = vmatprep.subr.bf16.mxu0 0
        %1722 = vmatpush1.bf16.msra.mxu0 0
        %1723 = vmatprep.subr.bf16.mxu0 0
        %1724 = vmatpush1.bf16.msra.mxu0 0
        %1725 = vmatprep.subr.bf16.mxu0 0
        %1726 = vmatpush1.bf16.msra.mxu0 0
        %1727 = vmatprep.subr.bf16.mxu0 0
        %1728 = vmatpush1.bf16.msra.mxu0 0
        %1729 = vmatprep.subr.bf16.mxu0 0
        %1730 = vmatpush1.bf16.msra.mxu0 %v1668
        %1731 = vmatprep.subr.bf16.mxu0 0
        %1732 = vmatpush2.bf16.msra.mxu0 0
        %1733 = vmatprep.subr.bf16.mxu0 0
        %1734 = vmatpush2.bf16.msra.mxu0 0
        %1735 = vmatprep.subr.bf16.mxu0 0
        %1736 = vmatpush2.bf16.msra.mxu0 0
        %1737 = vmatprep.subr.bf16.mxu0 0
        %1738 = vmatpush2.bf16.msra.mxu0 0
        %1739 = vmatprep.subr.bf16.mxu0 0
        %1740 = vmatpush2.bf16.msra.mxu0 0
        %1741 = vmatprep.subr.bf16.mxu0 0
        %1742 = vmatpush2.bf16.msra.mxu0 0
        %1743 = vmatprep.subr.bf16.mxu0 0
        %1744 = vmatpush2.bf16.msra.mxu0 0
        %1745 = vmatprep.subr.bf16.mxu0 0
        %1746 = vmatpush2.bf16.msra.mxu0 0
        %1747 = vmatprep.mubr.bf16.mxu0 0
        %1748 = vmatmul.mubr.bf16.gmra.mxu0 %v1526
        %v1749 = vpop.f32.mrf.mxu0
        %v1750 = vadd.f32 %v1709, %v1749
        %v1751 = vpop.f32.mrf.mxu0
        %v1752 = vpop.f32.mrf.mxu0
        %v1753 = vadd.f32 %v1712, %v1752
        %v1754 = vpop.f32.mrf.mxu0
        %1755 = vdwg.mxu0
        %1756 = vmatprep.subr.bf16.mxu0 0
        %1757 = vmatpush1.bf16.msra.mxu0 0
        %1758 = vmatprep.subr.bf16.mxu0 0
        %1759 = vmatpush1.bf16.msra.mxu0 0
        %1760 = vmatprep.subr.bf16.mxu0 0
        %1761 = vmatpush1.bf16.msra.mxu0 0
        %1762 = vmatprep.subr.bf16.mxu0 0
        %1763 = vmatpush1.bf16.msra.mxu0 0
        %1764 = vmatprep.subr.bf16.mxu0 0
        %1765 = vmatpush1.bf16.msra.mxu0 0
        %1766 = vmatprep.subr.bf16.mxu0 0
        %1767 = vmatpush1.bf16.msra.mxu0 0
        %1768 = vmatprep.subr.bf16.mxu0 0
        %1769 = vmatpush1.bf16.msra.mxu0 0
        %1770 = vmatprep.subr.bf16.mxu0 0
        %1771 = vmatpush1.bf16.msra.mxu0 %v1673
        %1772 = vmatprep.subr.bf16.mxu0 0
        %1773 = vmatpush2.bf16.msra.mxu0 0
        %1774 = vmatprep.subr.bf16.mxu0 0
        %1775 = vmatpush2.bf16.msra.mxu0 0
        %1776 = vmatprep.subr.bf16.mxu0 0
        %1777 = vmatpush2.bf16.msra.mxu0 0
        %1778 = vmatprep.subr.bf16.mxu0 0
        %1779 = vmatpush2.bf16.msra.mxu0 0
        %1780 = vmatprep.subr.bf16.mxu0 0
        %1781 = vmatpush2.bf16.msra.mxu0 0
        %1782 = vmatprep.subr.bf16.mxu0 0
        %1783 = vmatpush2.bf16.msra.mxu0 0
        %1784 = vmatprep.subr.bf16.mxu0 0
        %1785 = vmatpush2.bf16.msra.mxu0 0
        %1786 = vmatprep.subr.bf16.mxu0 0
        %1787 = vmatpush2.bf16.msra.mxu0 0
        %1788 = vmatprep.mubr.bf16.mxu0 0
        %1789 = vmatmul.mubr.bf16.gmra.mxu0 %v1526
        %v1790 = vpop.f32.mrf.mxu0
        %v1791 = vadd.f32 0.0, %v1790
        %v1792 = vpop.f32.mrf.mxu0
        %v1793 = vpop.f32.mrf.mxu0
        %v1794 = vadd.f32 0.0, %v1793
        %v1795 = vpop.f32.mrf.mxu0
        %1796 = vdwg.mxu0
        %v1797 = vadd.f32 %v1750, %v1791
        %v1798 = vadd.f32 %v1753, %v1794
        %1800 = vrot.lane.b32.xlu0 %v1798, 112
        %v1801 = vpop.permute.xlu0 %1800
        %v1803 = vsub.f32 %v1797, %v1801
        %1804 = vrot.lane.b32.xlu0 %v1798, 16
        %v1805 = vpop.permute.xlu0 %1804
        %v1807 = vadd.f32 %v1797, %v1805
        %v1808 = vsel %vm422, %v1803, %v1807
        %v1809 = vpack.c.bf16 %v1808, %v1808
        %v1810 = vunpack.c.l.bf16 %v1809
        %v1811 = vsub.f32 %v1808, %v1810
        %v1812 = vpack.c.bf16 %v1811, %v1811
        %1815 = vrot.lane.b32.xlu0 %v1401, 112
        %v1816 = vpop.permute.xlu0 %1815
        %1817 = vrot.lane.b32.xlu0 %v1404, 112
        %v1818 = vpop.permute.xlu0 %1817
        %v1821 = vadd.f32 %v1393, %v1816
        %v1822 = vadd.f32 %v1396, %v1818
        %1825 = vrot.lane.b32.xlu0 %v1393, 112
        %v1826 = vpop.permute.xlu0 %1825
        %1827 = vrot.lane.b32.xlu0 %v1396, 112
        %v1828 = vpop.permute.xlu0 %1827
        %v1831 = vsub.f32 %v1401, %v1826
        %v1832 = vsub.f32 %v1404, %v1828
        %v1833 = vmul.f32 %v400, %v1821
        %v1834 = vmul.f32 %v401, %v1822
        %v1835 = vmul.f32 %v402, %v1831
        %v1836 = vmul.f32 %v403, %v1832
        %v1837 = vsub.f32 %v1833, %v1835
        %v1838 = vsub.f32 %v1834, %v1836
        %v1839 = vmul.f32 %v400, %v1831
        %v1840 = vmul.f32 %v401, %v1832
        %v1841 = vmul.f32 %v402, %v1821
        %v1842 = vmul.f32 %v403, %v1822
        %v1843 = vadd.f32 %v1839, %v1841
        %v1844 = vadd.f32 %v1840, %v1842
        %1847 = vrot.lane.b32.xlu0 %v1843, 16
        %v1848 = vpop.permute.xlu0 %1847
        %1849 = vrot.lane.b32.xlu0 %v1844, 16
        %v1850 = vpop.permute.xlu0 %1849
        %v1853 = vsel %vm422, %v1837, %v1848
        %v1854 = vsel %vm422, %v1838, %v1850
        %v1855 = vpack.c.bf16 %v1854, %v1853
        %v1856 = vunpack.c.l.bf16 %v1855
        %v1857 = vunpack.c.h.bf16 %v1855
        %v1858 = vsub.f32 %v1853, %v1856
        %v1859 = vsub.f32 %v1854, %v1857
        %v1860 = vpack.c.bf16 %v1859, %v1858
        %1861 = vmatprep.subr.bf16.mxu0 0
        %1862 = vmatpush1.bf16.msra.mxu0 0
        %1863 = vmatprep.subr.bf16.mxu0 0
        %1864 = vmatpush1.bf16.msra.mxu0 0
        %1865 = vmatprep.subr.bf16.mxu0 0
        %1866 = vmatpush1.bf16.msra.mxu0 0
        %1867 = vmatprep.subr.bf16.mxu0 0
        %1868 = vmatpush1.bf16.msra.mxu0 0
        %1869 = vmatprep.subr.bf16.mxu0 0
        %1870 = vmatpush1.bf16.msra.mxu0 0
        %1871 = vmatprep.subr.bf16.mxu0 0
        %1872 = vmatpush1.bf16.msra.mxu0 0
        %1873 = vmatprep.subr.bf16.mxu0 0
        %1874 = vmatpush1.bf16.msra.mxu0 0
        %1875 = vmatprep.subr.bf16.mxu0 0
        %1876 = vmatpush1.bf16.msra.mxu0 %v1855
        %1877 = vmatprep.subr.bf16.mxu0 0
        %1878 = vmatpush2.bf16.msra.mxu0 0
        %1879 = vmatprep.subr.bf16.mxu0 0
        %1880 = vmatpush2.bf16.msra.mxu0 0
        %1881 = vmatprep.subr.bf16.mxu0 0
        %1882 = vmatpush2.bf16.msra.mxu0 0
        %1883 = vmatprep.subr.bf16.mxu0 0
        %1884 = vmatpush2.bf16.msra.mxu0 0
        %1885 = vmatprep.subr.bf16.mxu0 0
        %1886 = vmatpush2.bf16.msra.mxu0 0
        %1887 = vmatprep.subr.bf16.mxu0 0
        %1888 = vmatpush2.bf16.msra.mxu0 0
        %1889 = vmatprep.subr.bf16.mxu0 0
        %1890 = vmatpush2.bf16.msra.mxu0 0
        %1891 = vmatprep.subr.bf16.mxu0 0
        %1892 = vmatpush2.bf16.msra.mxu0 0
        %1893 = vmatprep.mubr.bf16.mxu0 0
        %1894 = vmatmul.mubr.bf16.gmra.mxu0 %v1477
        %v1895 = vpop.f32.mrf.mxu0
        %v1896 = vadd.f32 0.0, %v1895
        %v1897 = vpop.f32.mrf.mxu0
        %v1898 = vpop.f32.mrf.mxu0
        %v1899 = vadd.f32 0.0, %v1898
        %v1900 = vpop.f32.mrf.mxu0
        %1901 = vdwg.mxu0
        %1902 = vmatprep.subr.bf16.mxu0 0
        %1903 = vmatpush1.bf16.msra.mxu0 0
        %1904 = vmatprep.subr.bf16.mxu0 0
        %1905 = vmatpush1.bf16.msra.mxu0 0
        %1906 = vmatprep.subr.bf16.mxu0 0
        %1907 = vmatpush1.bf16.msra.mxu0 0
        %1908 = vmatprep.subr.bf16.mxu0 0
        %1909 = vmatpush1.bf16.msra.mxu0 0
        %1910 = vmatprep.subr.bf16.mxu0 0
        %1911 = vmatpush1.bf16.msra.mxu0 0
        %1912 = vmatprep.subr.bf16.mxu0 0
        %1913 = vmatpush1.bf16.msra.mxu0 0
        %1914 = vmatprep.subr.bf16.mxu0 0
        %1915 = vmatpush1.bf16.msra.mxu0 0
        %1916 = vmatprep.subr.bf16.mxu0 0
        %1917 = vmatpush1.bf16.msra.mxu0 %v1855
        %1918 = vmatprep.subr.bf16.mxu0 0
        %1919 = vmatpush2.bf16.msra.mxu0 0
        %1920 = vmatprep.subr.bf16.mxu0 0
        %1921 = vmatpush2.bf16.msra.mxu0 0
        %1922 = vmatprep.subr.bf16.mxu0 0
        %1923 = vmatpush2.bf16.msra.mxu0 0
        %1924 = vmatprep.subr.bf16.mxu0 0
        %1925 = vmatpush2.bf16.msra.mxu0 0
        %1926 = vmatprep.subr.bf16.mxu0 0
        %1927 = vmatpush2.bf16.msra.mxu0 0
        %1928 = vmatprep.subr.bf16.mxu0 0
        %1929 = vmatpush2.bf16.msra.mxu0 0
        %1930 = vmatprep.subr.bf16.mxu0 0
        %1931 = vmatpush2.bf16.msra.mxu0 0
        %1932 = vmatprep.subr.bf16.mxu0 0
        %1933 = vmatpush2.bf16.msra.mxu0 0
        %1934 = vmatprep.mubr.bf16.mxu0 0
        %1935 = vmatmul.mubr.bf16.gmra.mxu0 %v1526
        %v1936 = vpop.f32.mrf.mxu0
        %v1937 = vadd.f32 %v1896, %v1936
        %v1938 = vpop.f32.mrf.mxu0
        %v1939 = vpop.f32.mrf.mxu0
        %v1940 = vadd.f32 %v1899, %v1939
        %v1941 = vpop.f32.mrf.mxu0
        %1942 = vdwg.mxu0
        %1943 = vmatprep.subr.bf16.mxu0 0
        %1944 = vmatpush1.bf16.msra.mxu0 0
        %1945 = vmatprep.subr.bf16.mxu0 0
        %1946 = vmatpush1.bf16.msra.mxu0 0
        %1947 = vmatprep.subr.bf16.mxu0 0
        %1948 = vmatpush1.bf16.msra.mxu0 0
        %1949 = vmatprep.subr.bf16.mxu0 0
        %1950 = vmatpush1.bf16.msra.mxu0 0
        %1951 = vmatprep.subr.bf16.mxu0 0
        %1952 = vmatpush1.bf16.msra.mxu0 0
        %1953 = vmatprep.subr.bf16.mxu0 0
        %1954 = vmatpush1.bf16.msra.mxu0 0
        %1955 = vmatprep.subr.bf16.mxu0 0
        %1956 = vmatpush1.bf16.msra.mxu0 0
        %1957 = vmatprep.subr.bf16.mxu0 0
        %1958 = vmatpush1.bf16.msra.mxu0 %v1860
        %1959 = vmatprep.subr.bf16.mxu0 0
        %1960 = vmatpush2.bf16.msra.mxu0 0
        %1961 = vmatprep.subr.bf16.mxu0 0
        %1962 = vmatpush2.bf16.msra.mxu0 0
        %1963 = vmatprep.subr.bf16.mxu0 0
        %1964 = vmatpush2.bf16.msra.mxu0 0
        %1965 = vmatprep.subr.bf16.mxu0 0
        %1966 = vmatpush2.bf16.msra.mxu0 0
        %1967 = vmatprep.subr.bf16.mxu0 0
        %1968 = vmatpush2.bf16.msra.mxu0 0
        %1969 = vmatprep.subr.bf16.mxu0 0
        %1970 = vmatpush2.bf16.msra.mxu0 0
        %1971 = vmatprep.subr.bf16.mxu0 0
        %1972 = vmatpush2.bf16.msra.mxu0 0
        %1973 = vmatprep.subr.bf16.mxu0 0
        %1974 = vmatpush2.bf16.msra.mxu0 0
        %1975 = vmatprep.mubr.bf16.mxu0 0
        %1976 = vmatmul.mubr.bf16.gmra.mxu0 %v1526
        %v1977 = vpop.f32.mrf.mxu0
        %v1978 = vadd.f32 0.0, %v1977
        %v1979 = vpop.f32.mrf.mxu0
        %v1980 = vpop.f32.mrf.mxu0
        %v1981 = vadd.f32 0.0, %v1980
        %v1982 = vpop.f32.mrf.mxu0
        %1983 = vdwg.mxu0
        %v1984 = vadd.f32 %v1937, %v1978
        %v1985 = vadd.f32 %v1940, %v1981
        %1987 = vrot.lane.b32.xlu0 %v1985, 112
        %v1988 = vpop.permute.xlu0 %1987
        %v1990 = vsub.f32 %v1984, %v1988
        %1991 = vrot.lane.b32.xlu0 %v1985, 16
        %v1992 = vpop.permute.xlu0 %1991
        %v1994 = vadd.f32 %v1984, %v1992
        %v1995 = vsel %vm422, %v1990, %v1994
        %v1996 = vpack.c.bf16 %v1995, %v1995
        %v1997 = vunpack.c.l.bf16 %v1996
        %v1998 = vsub.f32 %v1995, %v1997
        %v1999 = vpack.c.bf16 %v1998, %v1998
        %2002 = vrot.lane.b32.xlu0 %v1417, 112
        %v2003 = vpop.permute.xlu0 %2002
        %2004 = vrot.lane.b32.xlu0 %v1420, 112
        %v2005 = vpop.permute.xlu0 %2004
        %v2008 = vadd.f32 %v1409, %v2003
        %v2009 = vadd.f32 %v1412, %v2005
        %2012 = vrot.lane.b32.xlu0 %v1409, 112
        %v2013 = vpop.permute.xlu0 %2012
        %2014 = vrot.lane.b32.xlu0 %v1412, 112
        %v2015 = vpop.permute.xlu0 %2014
        %v2018 = vsub.f32 %v1417, %v2013
        %v2019 = vsub.f32 %v1420, %v2015
        %v2020 = vmul.f32 %v400, %v2008
        %v2021 = vmul.f32 %v401, %v2009
        %v2022 = vmul.f32 %v402, %v2018
        %v2023 = vmul.f32 %v403, %v2019
        %v2024 = vsub.f32 %v2020, %v2022
        %v2025 = vsub.f32 %v2021, %v2023
        %v2026 = vmul.f32 %v400, %v2018
        %v2027 = vmul.f32 %v401, %v2019
        %v2028 = vmul.f32 %v402, %v2008
        %v2029 = vmul.f32 %v403, %v2009
        %v2030 = vadd.f32 %v2026, %v2028
        %v2031 = vadd.f32 %v2027, %v2029
        %2034 = vrot.lane.b32.xlu0 %v2030, 16
        %v2035 = vpop.permute.xlu0 %2034
        %2036 = vrot.lane.b32.xlu0 %v2031, 16
        %v2037 = vpop.permute.xlu0 %2036
        %v2040 = vsel %vm422, %v2024, %v2035
        %v2041 = vsel %vm422, %v2025, %v2037
        %v2042 = vpack.c.bf16 %v2041, %v2040
        %v2043 = vunpack.c.l.bf16 %v2042
        %v2044 = vunpack.c.h.bf16 %v2042
        %v2045 = vsub.f32 %v2040, %v2043
        %v2046 = vsub.f32 %v2041, %v2044
        %v2047 = vpack.c.bf16 %v2046, %v2045
        %2048 = vmatprep.subr.bf16.mxu0 0
        %2049 = vmatpush1.bf16.msra.mxu0 0
        %2050 = vmatprep.subr.bf16.mxu0 0
        %2051 = vmatpush1.bf16.msra.mxu0 0
        %2052 = vmatprep.subr.bf16.mxu0 0
        %2053 = vmatpush1.bf16.msra.mxu0 0
        %2054 = vmatprep.subr.bf16.mxu0 0
        %2055 = vmatpush1.bf16.msra.mxu0 0
        %2056 = vmatprep.subr.bf16.mxu0 0
        %2057 = vmatpush1.bf16.msra.mxu0 0
        %2058 = vmatprep.subr.bf16.mxu0 0
        %2059 = vmatpush1.bf16.msra.mxu0 0
        %2060 = vmatprep.subr.bf16.mxu0 0
        %2061 = vmatpush1.bf16.msra.mxu0 0
        %2062 = vmatprep.subr.bf16.mxu0 0
        %2063 = vmatpush1.bf16.msra.mxu0 %v2042
        %2064 = vmatprep.subr.bf16.mxu0 0
        %2065 = vmatpush2.bf16.msra.mxu0 0
        %2066 = vmatprep.subr.bf16.mxu0 0
        %2067 = vmatpush2.bf16.msra.mxu0 0
        %2068 = vmatprep.subr.bf16.mxu0 0
        %2069 = vmatpush2.bf16.msra.mxu0 0
        %2070 = vmatprep.subr.bf16.mxu0 0
        %2071 = vmatpush2.bf16.msra.mxu0 0
        %2072 = vmatprep.subr.bf16.mxu0 0
        %2073 = vmatpush2.bf16.msra.mxu0 0
        %2074 = vmatprep.subr.bf16.mxu0 0
        %2075 = vmatpush2.bf16.msra.mxu0 0
        %2076 = vmatprep.subr.bf16.mxu0 0
        %2077 = vmatpush2.bf16.msra.mxu0 0
        %2078 = vmatprep.subr.bf16.mxu0 0
        %2079 = vmatpush2.bf16.msra.mxu0 0
        %2080 = vmatprep.mubr.bf16.mxu0 0
        %2081 = vmatmul.mubr.bf16.gmra.mxu0 %v1477
        %v2082 = vpop.f32.mrf.mxu0
        %v2083 = vadd.f32 0.0, %v2082
        %v2084 = vpop.f32.mrf.mxu0
        %v2085 = vpop.f32.mrf.mxu0
        %v2086 = vadd.f32 0.0, %v2085
        %v2087 = vpop.f32.mrf.mxu0
        %2088 = vdwg.mxu0
        %2089 = vmatprep.subr.bf16.mxu0 0
        %2090 = vmatpush1.bf16.msra.mxu0 0
        %2091 = vmatprep.subr.bf16.mxu0 0
        %2092 = vmatpush1.bf16.msra.mxu0 0
        %2093 = vmatprep.subr.bf16.mxu0 0
        %2094 = vmatpush1.bf16.msra.mxu0 0
        %2095 = vmatprep.subr.bf16.mxu0 0
        %2096 = vmatpush1.bf16.msra.mxu0 0
        %2097 = vmatprep.subr.bf16.mxu0 0
        %2098 = vmatpush1.bf16.msra.mxu0 0
        %2099 = vmatprep.subr.bf16.mxu0 0
        %2100 = vmatpush1.bf16.msra.mxu0 0
        %2101 = vmatprep.subr.bf16.mxu0 0
        %2102 = vmatpush1.bf16.msra.mxu0 0
        %2103 = vmatprep.subr.bf16.mxu0 0
        %2104 = vmatpush1.bf16.msra.mxu0 %v2042
        %2105 = vmatprep.subr.bf16.mxu0 0
        %2106 = vmatpush2.bf16.msra.mxu0 0
        %2107 = vmatprep.subr.bf16.mxu0 0
        %2108 = vmatpush2.bf16.msra.mxu0 0
        %2109 = vmatprep.subr.bf16.mxu0 0
        %2110 = vmatpush2.bf16.msra.mxu0 0
        %2111 = vmatprep.subr.bf16.mxu0 0
        %2112 = vmatpush2.bf16.msra.mxu0 0
        %2113 = vmatprep.subr.bf16.mxu0 0
        %2114 = vmatpush2.bf16.msra.mxu0 0
        %2115 = vmatprep.subr.bf16.mxu0 0
        %2116 = vmatpush2.bf16.msra.mxu0 0
        %2117 = vmatprep.subr.bf16.mxu0 0
        %2118 = vmatpush2.bf16.msra.mxu0 0
        %2119 = vmatprep.subr.bf16.mxu0 0
        %2120 = vmatpush2.bf16.msra.mxu0 0
        %2121 = vmatprep.mubr.bf16.mxu0 0
        %2122 = vmatmul.mubr.bf16.gmra.mxu0 %v1526
        %v2123 = vpop.f32.mrf.mxu0
        %v2124 = vadd.f32 %v2083, %v2123
        %v2125 = vpop.f32.mrf.mxu0
        %v2126 = vpop.f32.mrf.mxu0
        %v2127 = vadd.f32 %v2086, %v2126
        %v2128 = vpop.f32.mrf.mxu0
        %2129 = vdwg.mxu0
        %2130 = vmatprep.subr.bf16.mxu0 0
        %2131 = vmatpush1.bf16.msra.mxu0 0
        %2132 = vmatprep.subr.bf16.mxu0 0
        %2133 = vmatpush1.bf16.msra.mxu0 0
        %2134 = vmatprep.subr.bf16.mxu0 0
        %2135 = vmatpush1.bf16.msra.mxu0 0
        %2136 = vmatprep.subr.bf16.mxu0 0
        %2137 = vmatpush1.bf16.msra.mxu0 0
        %2138 = vmatprep.subr.bf16.mxu0 0
        %2139 = vmatpush1.bf16.msra.mxu0 0
        %2140 = vmatprep.subr.bf16.mxu0 0
        %2141 = vmatpush1.bf16.msra.mxu0 0
        %2142 = vmatprep.subr.bf16.mxu0 0
        %2143 = vmatpush1.bf16.msra.mxu0 0
        %2144 = vmatprep.subr.bf16.mxu0 0
        %2145 = vmatpush1.bf16.msra.mxu0 %v2047
        %2146 = vmatprep.subr.bf16.mxu0 0
        %2147 = vmatpush2.bf16.msra.mxu0 0
        %2148 = vmatprep.subr.bf16.mxu0 0
        %2149 = vmatpush2.bf16.msra.mxu0 0
        %2150 = vmatprep.subr.bf16.mxu0 0
        %2151 = vmatpush2.bf16.msra.mxu0 0
        %2152 = vmatprep.subr.bf16.mxu0 0
        %2153 = vmatpush2.bf16.msra.mxu0 0
        %2154 = vmatprep.subr.bf16.mxu0 0
        %2155 = vmatpush2.bf16.msra.mxu0 0
        %2156 = vmatprep.subr.bf16.mxu0 0
        %2157 = vmatpush2.bf16.msra.mxu0 0
        %2158 = vmatprep.subr.bf16.mxu0 0
        %2159 = vmatpush2.bf16.msra.mxu0 0
        %2160 = vmatprep.subr.bf16.mxu0 0
        %2161 = vmatpush2.bf16.msra.mxu0 0
        %2162 = vmatprep.mubr.bf16.mxu0 0
        %2163 = vmatmul.mubr.bf16.gmra.mxu0 %v1526
        %v2164 = vpop.f32.mrf.mxu0
        %v2165 = vadd.f32 0.0, %v2164
        %v2166 = vpop.f32.mrf.mxu0
        %v2167 = vpop.f32.mrf.mxu0
        %v2168 = vadd.f32 0.0, %v2167
        %v2169 = vpop.f32.mrf.mxu0
        %2170 = vdwg.mxu0
        %v2171 = vadd.f32 %v2124, %v2165
        %v2172 = vadd.f32 %v2127, %v2168
        %2174 = vrot.lane.b32.xlu0 %v2172, 112
        %v2175 = vpop.permute.xlu0 %2174
        %v2177 = vsub.f32 %v2171, %v2175
        %2178 = vrot.lane.b32.xlu0 %v2172, 16
        %v2179 = vpop.permute.xlu0 %2178
        %v2181 = vadd.f32 %v2171, %v2179
        %v2182 = vsel %vm422, %v2177, %v2181
        %v2183 = vpack.c.bf16 %v2182, %v2182
        %v2184 = vunpack.c.l.bf16 %v2183
        %v2185 = vsub.f32 %v2182, %v2184
        %v2186 = vpack.c.bf16 %v2185, %v2185
        %v2188 = vrot.slane %v1809, 4
        %v2190 = vrot.slane %v2183, 4
        %vm2191 = vcmask 1043456
        %v2194 = vsel %vm2191, %v1622, %v2188
        %v2197 = vsel %vm2191, %v1996, %v2190
        %v2199 = vrot.slane %v1812, 4
        %v2201 = vrot.slane %v2186, 4
        %v2204 = vsel %vm2191, %v1625, %v2199
        %v2207 = vsel %vm2191, %v1999, %v2201
        %v2208 = vld [vmem:[%s4] sm:$0xf]
        %v2209 = vld [vmem:[%s4 + $0x4] sm:$0xf]
        %v2210 = vld [vmem:[%s4 + $0x8] sm:$0xf]
        %v2211 = vld [vmem:[%s4 + $0xc] sm:$0xf]
        %2214 = vrot.lane.b32.xlu0 %v2194, 32
        %v2215 = vpop.permute.xlu0 %2214
        %2216 = vrot.lane.b32.xlu0 %v2197, 32
        %v2217 = vpop.permute.xlu0 %2216
        %v2219 = vsel %vm1188, %v2204, %v2215
        %v2221 = vsel %vm1188, %v2207, %v2217
        %v2222 = vld [vmem:[%s4] sm:$0xf]
        %v2223 = vld [vmem:[%s4 + $0x4] sm:$0xf]
        %v2224 = vld [vmem:[%s4 + $0x8] sm:$0xf]
        %v2225 = vld [vmem:[%s4 + $0xc] sm:$0xf]
        %v2226 = vld [vmem:[%s4 + $0x10] sm:$0xf]
        %v2227 = vld [vmem:[%s4 + $0x14] sm:$0xf]
        %v2228 = vld [vmem:[%s4 + $0x18] sm:$0xf]
        %v2229 = vld [vmem:[%s4 + $0x1c] sm:$0xf]
        %v2238 = vunpack.c.l.b16 %v2222
        %v2239 = vunpack.c.l.b16 %v2223
        %v2240 = vunpack.c.l.b16 %v2224
        %v2241 = vunpack.c.l.b16 %v2225
        %v2242 = vunpack.c.l.b16 %v2226
        %v2243 = vunpack.c.l.b16 %v2227
        %v2244 = vunpack.c.l.b16 %v2228
        %v2245 = vunpack.c.l.b16 %v2229
        %v2246 = vpack.c.b16 %v2239, %v2238
        %v2247 = vpack.c.b16 %v2241, %v2240
        %v2248 = vpack.c.b16 %v2243, %v2242
        %v2249 = vpack.c.b16 %v2245, %v2244
        %vm2254 = vcmask 523264
        %v2255 = vsel %vm2254, %v2219, 0
        %v2257 = vsel %vm2254, %v2221, 0
        %2259 = vmatprep.subr.bf16.mxu0 0
        %2260 = vmatpush1.bf16.msra.mxu0 0
        %2261 = vmatprep.subr.bf16.mxu0 0
        %2262 = vmatpush1.bf16.msra.mxu0 0
        %2263 = vmatprep.subr.bf16.mxu0 0
        %2264 = vmatpush1.bf16.msra.mxu0 0
        %2265 = vmatprep.subr.bf16.mxu0 0
        %2266 = vmatpush1.bf16.msra.mxu0 0
        %2267 = vmatprep.subr.bf16.mxu0 0
        %2268 = vmatpush1.bf16.msra.mxu0 %v2249
        %2269 = vmatprep.subr.bf16.mxu0 0
        %2270 = vmatpush1.bf16.msra.mxu0 %v2248
        %2271 = vmatprep.subr.bf16.mxu0 0
        %2272 = vmatpush1.bf16.msra.mxu0 %v2247
        %2273 = vmatprep.subr.bf16.mxu0 0
        %2274 = vmatpush1.bf16.msra.mxu0 %v2246
        %2275 = vmatprep.subr.bf16.mxu0 0
        %2276 = vmatpush2.bf16.msra.mxu0 0
        %2277 = vmatprep.subr.bf16.mxu0 0
        %2278 = vmatpush2.bf16.msra.mxu0 0
        %2279 = vmatprep.subr.bf16.mxu0 0
        %2280 = vmatpush2.bf16.msra.mxu0 0
        %2281 = vmatprep.subr.bf16.mxu0 0
        %2282 = vmatpush2.bf16.msra.mxu0 0
        %2283 = vmatprep.subr.bf16.mxu0 0
        %2284 = vmatpush2.bf16.msra.mxu0 0
        %2285 = vmatprep.subr.bf16.mxu0 0
        %2286 = vmatpush2.bf16.msra.mxu0 0
        %2287 = vmatprep.subr.bf16.mxu0 0
        %2288 = vmatpush2.bf16.msra.mxu0 0
        %2289 = vmatprep.subr.bf16.mxu0 0
        %2290 = vmatpush2.bf16.msra.mxu0 0
        %2291 = vmatprep.mubr.bf16.mxu0 0
        %2292 = vmatmul.mubr.bf16.gmra.mxu0 %v2255
        %v2293 = vpop.f32.mrf.mxu0
        %v2294 = vadd.f32 0.0, %v2293
        %v2295 = vpop.f32.mrf.mxu0
        %v2296 = vpop.f32.mrf.mxu0
        %v2297 = vadd.f32 0.0, %v2296
        %v2298 = vpop.f32.mrf.mxu0
        %2299 = vmatprep.mubr.bf16.mxu0 0
        %2300 = vmatmul.mubr.bf16.gmra.mxu0 %v2257
        %v2301 = vpop.f32.mrf.mxu0
        %v2302 = vadd.f32 0.0, %v2301
        %v2303 = vpop.f32.mrf.mxu0
        %v2304 = vpop.f32.mrf.mxu0
        %v2305 = vadd.f32 0.0, %v2304
        %v2306 = vpop.f32.mrf.mxu0
        %2307 = vdwg.mxu0
        %v2312 = vunpack.c.l.b16 %v2208
        %v2313 = vunpack.c.l.b16 %v2209
        %v2314 = vunpack.c.l.b16 %v2210
        %v2315 = vunpack.c.l.b16 %v2211
        %v2316 = vpack.c.b16 %v2313, %v2312
        %v2317 = vpack.c.b16 %v2315, %v2314
        %v2320 = vsel %vm1188, %v2194, 0
        %v2322 = vsel %vm1188, %v2197, 0
        %2324 = vmatprep.subr.bf16.mxu0 0
        %2325 = vmatpush1.bf16.msra.mxu0 0
        %2326 = vmatprep.subr.bf16.mxu0 0
        %2327 = vmatpush1.bf16.msra.mxu0 0
        %2328 = vmatprep.subr.bf16.mxu0 0
        %2329 = vmatpush1.bf16.msra.mxu0 0
        %2330 = vmatprep.subr.bf16.mxu0 0
        %2331 = vmatpush1.bf16.msra.mxu0 0
        %2332 = vmatprep.subr.bf16.mxu0 0
        %2333 = vmatpush1.bf16.msra.mxu0 0
        %2334 = vmatprep.subr.bf16.mxu0 0
        %2335 = vmatpush1.bf16.msra.mxu0 0
        %2336 = vmatprep.subr.bf16.mxu0 0
        %2337 = vmatpush1.bf16.msra.mxu0 %v2317
        %2338 = vmatprep.subr.bf16.mxu0 0
        %2339 = vmatpush1.bf16.msra.mxu0 %v2316
        %2340 = vmatprep.subr.bf16.mxu0 0
        %2341 = vmatpush2.bf16.msra.mxu0 0
        %2342 = vmatprep.subr.bf16.mxu0 0
        %2343 = vmatpush2.bf16.msra.mxu0 0
        %2344 = vmatprep.subr.bf16.mxu0 0
        %2345 = vmatpush2.bf16.msra.mxu0 0
        %2346 = vmatprep.subr.bf16.mxu0 0
        %2347 = vmatpush2.bf16.msra.mxu0 0
        %2348 = vmatprep.subr.bf16.mxu0 0
        %2349 = vmatpush2.bf16.msra.mxu0 0
        %2350 = vmatprep.subr.bf16.mxu0 0
        %2351 = vmatpush2.bf16.msra.mxu0 0
        %2352 = vmatprep.subr.bf16.mxu0 0
        %2353 = vmatpush2.bf16.msra.mxu0 0
        %2354 = vmatprep.subr.bf16.mxu0 0
        %2355 = vmatpush2.bf16.msra.mxu0 0
        %2356 = vmatprep.mubr.bf16.mxu0 0
        %2357 = vmatmul.mubr.bf16.gmra.mxu0 %v2320
        %v2358 = vpop.f32.mrf.mxu0
        %v2359 = vadd.f32 %v2294, %v2358
        %v2360 = vpop.f32.mrf.mxu0
        %v2361 = vpop.f32.mrf.mxu0
        %v2362 = vadd.f32 %v2297, %v2361
        %v2363 = vpop.f32.mrf.mxu0
        %2364 = vmatprep.mubr.bf16.mxu0 0
        %2365 = vmatmul.mubr.bf16.gmra.mxu0 %v2322
        %v2366 = vpop.f32.mrf.mxu0
        %v2367 = vadd.f32 %v2302, %v2366
        %v2368 = vpop.f32.mrf.mxu0
        %v2369 = vpop.f32.mrf.mxu0
        %v2370 = vadd.f32 %v2305, %v2369
        %v2371 = vpop.f32.mrf.mxu0
        %2372 = vdwg.mxu0
        %s2373 = smul.u32 %s27, 4
        %p2374 = scmp.lt.s32.totalorder %s2373, 0
        %s2375 = ssub.s32 0, %s2373
        %s2376 = scalar_select %p2374, %s2375, %s2373
        %s2377 = sand.u32 %s2376, 3
        %s2378 = ssub.s32 0, %s2377
        %s2379 = scalar_select %p2374, %s2378, %s2377
        %p2380 = scmp.ne.s32.totalorder %s2379, 0
        %p2381 = scmp.lt.s32.totalorder %s2379, 0
        %p2382 = pnand %p2381, %p2380
        %p2383 = pneg %p2382
        %s2384 = sadd.s32 %s2379, 4
        %s2385 = scalar_select %p2383, %s2384, %s2379
        %s2386 = smul.u32 %s2385, 8
        %s2387 = scalar_lea.vmem [#allocation10], %s2386
        %v2388 = vld [vmem:[%s2387] sm:$0xff]
        %v2389 = vmul.f32 %v2359, %v2388
        %2390 = vst [vmem:[%s382] sm:$0xff] %v2389
        %s2391 = sadd.s32 %s2373, 1
        %p2392 = scmp.lt.s32.totalorder %s2391, 0
        %s2393 = ssub.s32 0, %s2391
        %s2394 = scalar_select %p2392, %s2393, %s2391
        %s2395 = sand.u32 %s2394, 3
        %s2396 = ssub.s32 0, %s2395
        %s2397 = scalar_select %p2392, %s2396, %s2395
        %p2398 = scmp.ne.s32.totalorder %s2397, 0
        %p2399 = scmp.lt.s32.totalorder %s2397, 0
        %p2400 = pnand %p2399, %p2398
        %p2401 = pneg %p2400
        %s2402 = sadd.s32 %s2397, 4
        %s2403 = scalar_select %p2401, %s2402, %s2397
        %s2404 = smul.u32 %s2403, 8
        %s2405 = scalar_lea.vmem [#allocation10], %s2404
        %v2406 = vld [vmem:[%s2405] sm:$0xff]
        %v2407 = vmul.f32 %v2362, %v2406
        %s2408 = scalar_lea.vmem %s382, 8 [#allocation11]
        %2409 = vst [vmem:[%s2408] sm:$0xff] %v2407
        %s2410 = sadd.s32 %s2373, 2
        %p2411 = scmp.lt.s32.totalorder %s2410, 0
        %s2412 = ssub.s32 0, %s2410
        %s2413 = scalar_select %p2411, %s2412, %s2410
        %s2414 = sand.u32 %s2413, 3
        %s2415 = ssub.s32 0, %s2414
        %s2416 = scalar_select %p2411, %s2415, %s2414
        %p2417 = scmp.ne.s32.totalorder %s2416, 0
        %p2418 = scmp.lt.s32.totalorder %s2416, 0
        %p2419 = pnand %p2418, %p2417
        %p2420 = pneg %p2419
        %s2421 = sadd.s32 %s2416, 4
        %s2422 = scalar_select %p2420, %s2421, %s2416
        %s2423 = smul.u32 %s2422, 8
        %s2424 = scalar_lea.vmem [#allocation10], %s2423
        %v2425 = vld [vmem:[%s2424] sm:$0xff]
        %v2426 = vmul.f32 %v2367, %v2425
        %s2427 = scalar_lea.vmem %s382, 16 [#allocation11]
        %2428 = vst [vmem:[%s2427] sm:$0xff] %v2426
        %s2429 = sadd.s32 %s2373, 3
        %p2430 = scmp.lt.s32.totalorder %s2429, 0
        %s2431 = ssub.s32 0, %s2429
        %s2432 = scalar_select %p2430, %s2431, %s2429
        %s2433 = sand.u32 %s2432, 3
        %s2434 = ssub.s32 0, %s2433
        %s2435 = scalar_select %p2430, %s2434, %s2433
        %p2436 = scmp.ne.s32.totalorder %s2435, 0
        %p2437 = scmp.lt.s32.totalorder %s2435, 0
        %p2438 = pnand %p2437, %p2436
        %p2439 = pneg %p2438
        %s2440 = sadd.s32 %s2435, 4
        %s2441 = scalar_select %p2439, %s2440, %s2435
        %s2442 = smul.u32 %s2441, 8
        %s2443 = scalar_lea.vmem [#allocation10], %s2442
        %v2444 = vld [vmem:[%s2443] sm:$0xff]
        %v2445 = vmul.f32 %v2370, %v2444
        %s2446 = scalar_lea.vmem %s382, 24 [#allocation11]
        %2447 = vst [vmem:[%s2446] sm:$0xff] %v2445
        %s2448 = sand.u32 %s208, 1
        %s2449 = scalar_lea.sflag [#allocation4], %s2448
        %s2450 = sand.u32 %s208, 1
        %s2451 = smul.addr %s2450, 32
        %s2452 = scalar_lea.vmem [#allocation11], %s2451
        // Predicated region
        $region73: #{tpu_custom_call.1} parent=51 // pred_check
          %p2453 = pneg %p218
        $region74: #{tpu_custom_call.1} parent=51 // pred_check_branch
          %2455 = sbr.rel (%p2453) target = $region76
        $region75: #{tpu_custom_call.1} parent=51 // pred_region
          %s2456 = smul.u32 4, %s27
          %s2458 = ssub.s32 512, 512
          %2459 = vsyncadd %s2449, %s2458
          %s2460 = smul.addr %s2456, 128
          %s2461 = scalar_lea.hbm %s8, %s2460
          %s2462 = sshll.u32 %s2452, 4
          %s2463 = int_to_ptr.vmem [resolvable:$true] %s2462
          %2468 = dma.vmem_to_hbm [thread:$0]  %s2463, 512, %s2461, %s2449, 128, 128, 8
        $region76: #{tpu_custom_call.1} parent=51 // pred_fallthru
          _
      $region52: #{tpu_custom_call.1} parent=5 // pred_fallthru
        _
      %p2469 = scmp.le.s32.totalorder 2, %s22
      // Predicated region
      $region77: #{tpu_custom_call.1} parent=5 // pred_check
        %p2470 = pneg %p2469
      $region78: #{tpu_custom_call.1} parent=5 // pred_check_branch
        %2472 = sbr.rel (%p2470) target = $region80
      $region79: #{tpu_custom_call.1} parent=5 // pred_region
        %s2473 = ssub.s32 %s22, 2
        // Predicated region
        $region81: #{tpu_custom_call.1} parent=79 // pred_check
          %p2474 = pneg %p224
        $region82: #{tpu_custom_call.1} parent=79 // pred_check_branch
          %2476 = sbr.rel (%p2474) target = $region84
        $region83: #{tpu_custom_call.1} parent=79 // pred_region
          %s2477 = sand.u32 %s209, 1
          %s2478 = scalar_lea.sflag [#allocation4], %s2477
          %s2479 = sand.u32 %s209, 1
          %s2480 = smul.addr %s2479, 32
          %s2481 = scalar_lea.vmem [#allocation11], %s2480
          %2482 = dma.done %s2478, 512
        $region84: #{tpu_custom_call.1} parent=79 // pred_fallthru
          _
      $region80: #{tpu_custom_call.1} parent=5 // pred_fallthru
        _
    $region6: #{tpu_custom_call.1} parent=1 // loop_footer
      %s26 = sadd.s32 1, %s22
    $region7: #{tpu_custom_call.1} parent=1 // loop_footer_branch
      %21 = sbr.rel target = $region3
    $region8: #{tpu_custom_call.1} parent=1 // loop_exit
      _
    %2483 = vsyncpa [#allocation3], 1
    %s2484 = scalar_lea.sflag [#allocation3], 1
    %2485 = vsyncpa %s2484, 1
    %2486 = vsyncpa [#allocation6], 1
    %2487 = vsyncpa [#allocation9], 1
    %2488 = vsyncpa [#allocation4], 1
    %s2489 = scalar_lea.sflag [#allocation4], 1
    %2490 = vsyncpa %s2489, 1

</llo_original>
